<compile_context>
chip_gen: v7x
topology: tpu7x:2x2x1
jax: 0.10.0
libtpu: 0.0.40
codegen_flags: <defaults>
</compile_context>

<pallas_src>
import functools

import jax
import jax.numpy as jnp
from jax import lax
from jax.experimental import pallas as pl
from jax.experimental.pallas import tpu as pltpu

BN_EPS = 1e-5


# ---------------------------------------------------------------------------
# Trilinear resize (PyTorch align_corners=False semantics), separable, in XLA.
# TODO(synk): the resize is a data-dependent gather; it stays in XLA (it is a tiny
#             fraction of this op's HBM traffic) rather than in Pallas.
def _resize_linear_axis(x, axis, out_size):
    in_size = x.shape[axis]
    if in_size == out_size:
        return x
    scale = in_size / out_size
    i = jnp.arange(out_size, dtype=jnp.float32)
    src = (i + 0.5) * scale - 0.5
    src = jnp.clip(src, 0.0, float(in_size - 1))
    lo = jnp.floor(src).astype(jnp.int32)
    hi = jnp.minimum(lo + 1, in_size - 1)
    wgt = src - lo.astype(jnp.float32)
    xlo = jnp.take(x, lo, axis=axis)
    xhi = jnp.take(x, hi, axis=axis)
    bshape = [1] * x.ndim
    bshape[axis] = out_size
    wgt = wgt.reshape(bshape)
    return xlo * (1.0 - wgt) + xhi * wgt


def trilinear_resize(x, size):
    d, h, w = size
    x = _resize_linear_axis(x, 2, d)
    x = _resize_linear_axis(x, 3, h)
    x = _resize_linear_axis(x, 4, w)
    return x


# ---------------------------------------------------------------------------
# Pass 1: 3x3x3 conv (1 input channel) on a depth tile + per-tile BN partials.
def _conv_stats_kernel(x_ref, halo_ref, mask_ref, w_ref, y_ref, stats_ref, xe_ref,
                       *, td, hw, wdim, cc, cgroup):
    """x_ref    : (1, td, hw)      center depth planes, spatial flattened to lanes
       halo_ref : (1, 1, 2, hw)    [prev, next] depth-halo planes (zero at volume edges)
       mask_ref : (2, hw)          W-boundary validity masks [w>0, w<W-1] (f32)
       w_ref    : (cc, 27) SMEM    conv taps, order (kd, kh, kw)
       y_ref    : (1, cc, td, hw)  pre-BN conv output (lane-dense)
       stats_ref: (1, 1, 8, 128)   row 0 = per-channel sum, row 1 = centered M2
       xe_ref   : (td+2, hw+2*(wdim+1)) VMEM scratch: guard-banded source slab
    """
    guard = wdim + 1
    lr = hw + 2 * guard

    # Zero the guard bands (unconditional: cheap and megacore-safe; scratch is not
    # zero-initialised).  Guards provide the H zero-padding for free.
    xe_ref[:, 0:guard] = jnp.zeros((td + 2, guard), jnp.float32)
    xe_ref[:, guard + hw:lr] = jnp.zeros((td + 2, guard), jnp.float32)
    # Assemble [prev | center(td rows) | next] depth rows.
    xe_ref[0:1, guard:guard + hw] = halo_ref[0, 0, 0:1, :]
    xe_ref[1:td + 1, guard:guard + hw] = x_ref[0]
    xe_ref[td + 1:td + 2, guard:guard + hw] = halo_ref[0, 0, 1:2, :]

    mask_l = mask_ref[0:1, :]     # valid where w > 0   (taps reading w-1)
    mask_r = mask_ref[1:2, :]     # valid where w < W-1 (taps reading w+1)

    inv_count = 1.0 / float(td * hw)
    sums = []
    m2s = []
    # Channels in small groups -> bounded live accumulator vregs even for big tiles.
    for c0 in range(0, cc, cgroup):
        cg = min(cgroup, cc - c0)
        accs = [jnp.zeros((td, hw), jnp.float32) for _ in range(cg)]
        k = 0
        for kd in range(3):
            for kh in range(3):
                base = guard + (kh - 1) * wdim
                for kw in range(3):
                    start = base + (kw - 1)
                    tap = xe_ref[kd:kd + td, start:start + hw]
                    if kw == 0:
                        tap = tap * mask_l
                    elif kw == 2:
                        tap = tap * mask_r
                    for g in range(cg):
                        accs[g] = accs[g] + w_ref[c0 + g, k] * tap
                    k += 1
        for g in range(cg):
            acc = accs[g]
            y_ref[0, c0 + g] = acc                     # lane-dense (td, hw) store
            s = jnp.sum(acc)
            diff = acc - s * inv_count                 # centered 2nd moment (Chan combine)
            sums.append(s)
            m2s.append(jnp.sum(diff * diff))

    # Pack the 2*cc per-tile scalars into one (8, 128) block (cheap for small cc).
    # TODO(synk): for large cc, emit stats via an SMEM-space output or a ones@acc
    #             matmul so channels land on lanes without per-channel selects.
    row = lax.broadcasted_iota(jnp.int32, (8, 128), 0)
    col = lax.broadcasted_iota(jnp.int32, (8, 128), 1)
    blk = jnp.zeros((8, 128), jnp.float32)
    for c in range(cc):
        blk = jnp.where((row == 0) & (col == c), sums[c], blk)
        blk = jnp.where((row == 1) & (col == c), m2s[c], blk)
    stats_ref[0, 0] = blk


# Pass 2: elementwise folded-BN + sigmoid over the lane-dense conv output.
def _bn_sigmoid_kernel(y_ref, scale_ref, shift_ref, o_ref, *, cc):
    for c in range(cc):
        z = y_ref[0, c] * scale_ref[c] + shift_ref[c]
        # Single-EUP exact sigmoid: sigmoid(z) = 0.5 * tanh(0.5*z) + 0.5
        o_ref[0, c] = 0.5 * jnp.tanh(0.5 * z) + 0.5


# ---------------------------------------------------------------------------
def _pick_depth_tile(d, hw, c, budget_bytes=8 << 20):
    """Largest depth tile whose per-step working set stays within `budget_bytes`.

    td is a multiple of 8 (or the whole depth) so blocks satisfy the (8, 128)
    constraint.  Working set ~ (center-in + C conv-out blocks, double buffered)
    plus the guard-banded scratch slab.
    """
    def fits(td):
        return 4 * td * hw * (c + 2) * 3 <= budget_bytes

    if fits(d):
        return d
    best = 0
    td = 8
    while td < d:
        if d % td == 0 and fits(td):
            best = td
        td += 8
    if best:
        return best
    td = 8
    while td < d:
        if d % td == 0:
            return td
        td += 8
    return d


@functools.partial(jax.jit, static_argnames=("size",))
def attention_module(mask, size, conv_w, conv_b, gamma, beta):
    """mask: (N, 1, Din, Hin, Win) -> (N, C, D, H, W) float32 (NCDHW)."""
    del conv_b  # cancels exactly against the training-mode BatchNorm mean subtraction
    n = mask.shape[0]
    d, h, w = size
    c = conv_w.shape[0]
    assert c <= 128, "per-tile stats packing assumes in_channels <= 128"
    hw = h * w
    m_total = float(n * d * hw)

    x = trilinear_resize(mask.astype(jnp.float32), size)[:, 0]       # (N, D, H, W)
    x3 = x.reshape(n, d, hw)                                         # lane-dense source

    td = _pick_depth_tile(d, hw, c)
    db = d // td
    cgroup = max(1, min(c, 8))

    # Depth-halo planes for every tile (zero at the volume boundary): (N, db, 2, HW).
    zero_plane = jnp.zeros((n, 1, hw), jnp.float32)
    if db > 1:
        prev = jnp.concatenate([zero_plane, x3[:, td - 1:d - 1:td, :]], axis=1)
        nxt = jnp.concatenate([x3[:, td::td, :], zero_plane], axis=1)
    else:
        prev, nxt = zero_plane, zero_plane
    halo = jnp.stack([prev, nxt], axis=2)                            # (N, db, 2, HW)

    # W-boundary validity masks on the flattened spatial axis.
    col = jnp.arange(hw, dtype=jnp.int32) % w
    masks = jnp.stack([(col > 0).astype(jnp.float32),
                       (col < w - 1).astype(jnp.float32)])           # (2, HW)

    w_taps = conv_w.reshape(c, 27).astype(jnp.float32)               # (C, 27)

    smem_spec = pl.BlockSpec(memory_space=pltpu.MemorySpace.SMEM)
    cparams = pltpu.CompilerParams(
        dimension_semantics=("parallel", "parallel"),
        vmem_limit_bytes=48 * 1024 * 1024)

    # -------- pass 1: conv (computed once) + per-tile BN partial statistics ----
    # TODO(synk): for large C, build the 27-tap patch as a (V, 32) matrix and use the
    #             MXU instead of per-channel scalar-broadcast VPU FMAs; the conv-out
    #             intermediate could also be bf16 to halve its HBM traffic.
    flops1 = (2 * 27 + 6) * c * n * d * hw
    bytes1 = 4 * (n * d * hw + 2 * n * db * hw + c * n * d * hw
                  + n * db * 8 * 128 + c * 27)
    y, stats = pl.pallas_call(
        functools.partial(_conv_stats_kernel, td=td, hw=hw, wdim=w, cc=c,
                          cgroup=cgroup),
        grid=(n, db),
        in_specs=[
            pl.BlockSpec((1, td, hw), lambda i, j: (i, j, 0)),
            pl.BlockSpec((1, 1, 2, hw), lambda i, j: (i, j, 0, 0)),
            pl.BlockSpec((2, hw), lambda i, j: (0, 0)),
            smem_spec,
        ],
        out_specs=(
            pl.BlockSpec((1, c, td, hw), lambda i, j: (i, 0, j, 0)),
            pl.BlockSpec((1, 1, 8, 128), lambda i, j: (i, j, 0, 0)),
        ),
        out_shape=(
            jax.ShapeDtypeStruct((n, c, d, hw), jnp.float32),
            jax.ShapeDtypeStruct((n, db, 8, 128), jnp.float32),
        ),
        scratch_shapes=[pltpu.VMEM((td + 2, hw + 2 * (w + 1)), jnp.float32)],
        compiler_params=cparams,
        cost_estimate=pl.CostEstimate(flops=flops1, transcendentals=0,
                                      bytes_accessed=bytes1),
    )(x3, halo, masks, w_taps)

    # -------- fold statistics (Chan combine) + gamma/beta into scale/shift -----
    count_t = float(td * hw)
    sums_t = stats[:, :, 0, :c]                                      # (N, db, C)
    m2_t = stats[:, :, 1, :c]
    mean = jnp.sum(sums_t, axis=(0, 1)) / m_total                    # (C,)
    mean_t = sums_t / count_t
    var = (jnp.sum(m2_t, axis=(0, 1))
           + jnp.sum(count_t * jnp.square(mean_t - mean), axis=(0, 1))) / m_total
    var = jnp.maximum(var, 0.0)                                      # biased (PyTorch)
    scale = gamma.astype(jnp.float32) * lax.rsqrt(var + BN_EPS)      # (C,)
    shift = beta.astype(jnp.float32) - mean * scale                  # (C,)

    # -------- pass 2: elementwise folded-BN + sigmoid (lane-dense stream) ------
    flops2 = 2 * c * n * d * hw
    bytes2 = 4 * (2 * c * n * d * hw + 2 * c)
    out = pl.pallas_call(
        functools.partial(_bn_sigmoid_kernel, cc=c),
        grid=(n, db),
        in_specs=[pl.BlockSpec((1, c, td, hw), lambda i, j: (i, 0, j, 0)),
                  smem_spec, smem_spec],
        out_specs=pl.BlockSpec((1, c, td, hw), lambda i, j: (i, 0, j, 0)),
        out_shape=jax.ShapeDtypeStruct((n, c, d, hw), jnp.float32),
        compiler_params=cparams,
        cost_estimate=pl.CostEstimate(flops=flops2, transcendentals=c * n * d * hw,
                                      bytes_accessed=bytes2),
    )(y, scale, shift)
    return out.reshape(n, c, d, h, w)                                # free reshape


# ---------------------------------------------------------------------------
def _reference(mask, size, conv_w, conv_b, gamma, beta):
    """Pure-XLA reference (includes the conv bias; it must cancel under BN)."""
    x = trilinear_resize(mask.astype(jnp.float32), size)
    y = lax.conv_general_dilated(
        x, conv_w.astype(jnp.float32), window_strides=(1, 1, 1),
        padding=[(1, 1)] * 3, dimension_numbers=("NCDHW", "OIDHW", "NCDHW"))
    y = y + conv_b.reshape(1, -1, 1, 1, 1)
    mean = jnp.mean(y, axis=(0, 2, 3, 4), keepdims=True)
    var = jnp.mean(jnp.square(y - mean), axis=(0, 2, 3, 4), keepdims=True)
    y = (y - mean) * lax.rsqrt(var + BN_EPS)
    y = gamma.reshape(1, -1, 1, 1, 1) * y + beta.reshape(1, -1, 1, 1, 1)
    return jax.nn.sigmoid(y)


if __name__ == "__main__":
    key = jax.random.PRNGKey(0)
    k_mask, k_w, k_b = jax.random.split(key, 3)

    in_channels = 4
    mask = jax.random.normal(k_mask, (2, 1, 4, 4, 4), dtype=jnp.float32)
    size = (8, 8, 8)

    # PyTorch-default-like init: U(-1/sqrt(fan_in), 1/sqrt(fan_in))
    fan_in = 1 * 3 * 3 * 3
    bound = 1.0 / (fan_in ** 0.5)
    conv_w = jax.random.uniform(k_w, (in_channels, 1, 3, 3, 3),
                                minval=-bound, maxval=bound, dtype=jnp.float32)
    conv_b = jax.random.uniform(k_b, (in_channels,),
                                minval=-bound, maxval=bound, dtype=jnp.float32)
    gamma = jnp.ones((in_channels,), jnp.float32)    # BatchNorm weight
    beta = jnp.zeros((in_channels,), jnp.float32)    # BatchNorm bias

    out = attention_module(mask, size, conv_w, conv_b, gamma, beta)
    jax.block_until_ready(out)
    assert out.shape == (2, in_channels, 8, 8, 8), out.shape
    assert bool(jnp.all(jnp.isfinite(out)))

    ref = _reference(mask, size, conv_w, conv_b, gamma, beta)
    max_err = float(jnp.max(jnp.abs(out - ref)))
    assert max_err < 5e-3, f"max abs error vs reference: {max_err}"
    print("KERNEL_OK")
</pallas_src>

<mosaic_0001>
module attributes {stable_mosaic.version = 11 : i64} {
  func.func @_bn_sigmoid_kernel(%arg0: i32, %arg1: i32, %arg2: memref<1x4x8x64xf32, #tpu.memory_space<vmem>>, %arg3: memref<4xf32, #tpu.memory_space<smem>>, %arg4: memref<4xf32, #tpu.memory_space<smem>>, %arg5: memref<1x4x8x64xf32, #tpu.memory_space<vmem>>) attributes {dimension_semantics = [#tpu.dimension_semantics<parallel>, #tpu.dimension_semantics<parallel>], iteration_bounds = array<i64: 2, 1>, scalar_prefetch = 0 : i64, scratch_operands = 0 : i64, tpu.core_type = #tpu.core_type<tc>, window_params = [{transform_indices = @transform_0, window_bounds = array<i64: 1, 4, 8, 64>}, {transform_indices = @transform_1, window_bounds = array<i64: 4>}, {transform_indices = @transform_2, window_bounds = array<i64: 4>}, {transform_indices = @transform_3, window_bounds = array<i64: 1, 4, 8, 64>}]} {
    %c0 = arith.constant 0 : index
    %c0_0 = arith.constant 0 : index
    %c0_1 = arith.constant 0 : index
    %c0_2 = arith.constant 0 : index
    %0 = vector.load %arg2[%c0, %c0_0, %c0_1, %c0_2] : memref<1x4x8x64xf32, #tpu.memory_space<vmem>>, vector<1x1x8x64xf32>
    %1 = vector.shape_cast %0 : vector<1x1x8x64xf32> to vector<8x64xf32>
    %c0_3 = arith.constant 0 : index
    %2 = memref.load %arg3[%c0_3] : memref<4xf32, #tpu.memory_space<smem>>
    %3 = vector.broadcast %2 : f32 to vector<8x64xf32>
    %4 = arith.mulf %1, %3 : vector<8x64xf32>
    %c0_4 = arith.constant 0 : index
    %5 = memref.load %arg4[%c0_4] : memref<4xf32, #tpu.memory_space<smem>>
    %6 = vector.broadcast %5 : f32 to vector<8x64xf32>
    %7 = arith.addf %4, %6 : vector<8x64xf32>
    %cst = arith.constant 5.000000e-01 : f32
    %8 = vector.broadcast %cst : f32 to vector<8x64xf32>
    %9 = arith.mulf %8, %7 : vector<8x64xf32>
    %10 = math.tanh %9 : vector<8x64xf32>
    %cst_5 = arith.constant 5.000000e-01 : f32
    %11 = vector.broadcast %cst_5 : f32 to vector<8x64xf32>
    %12 = arith.mulf %11, %10 : vector<8x64xf32>
    %cst_6 = arith.constant 5.000000e-01 : f32
    %13 = vector.broadcast %cst_6 : f32 to vector<8x64xf32>
    %14 = arith.addf %12, %13 : vector<8x64xf32>
    %c0_7 = arith.constant 0 : index
    %c0_8 = arith.constant 0 : index
    %c0_9 = arith.constant 0 : index
    %c0_10 = arith.constant 0 : index
    %15 = vector.load %arg5[%c0_7, %c0_8, %c0_9, %c0_10] : memref<1x4x8x64xf32, #tpu.memory_space<vmem>>, vector<1x1x8x64xf32>
    %16 = vector.shape_cast %15 : vector<1x1x8x64xf32> to vector<8x64xf32>
    %17 = vector.shape_cast %14 : vector<8x64xf32> to vector<1x1x8x64xf32>
    tpu.vector_store %arg5[%c0_7, %c0_8, %c0_9, %c0_10], %17 {strides = array<i32>} : memref<1x4x8x64xf32, #tpu.memory_space<vmem>>, vector<1x1x8x64xf32>,
    %c0_11 = arith.constant 0 : index
    %c1 = arith.constant 1 : index
    %c0_12 = arith.constant 0 : index
    %c0_13 = arith.constant 0 : index
    %18 = vector.load %arg2[%c0_11, %c1, %c0_12, %c0_13] : memref<1x4x8x64xf32, #tpu.memory_space<vmem>>, vector<1x1x8x64xf32>
    %19 = vector.shape_cast %18 : vector<1x1x8x64xf32> to vector<8x64xf32>
    %c1_14 = arith.constant 1 : index
    %20 = memref.load %arg3[%c1_14] : memref<4xf32, #tpu.memory_space<smem>>
    %21 = vector.broadcast %20 : f32 to vector<8x64xf32>
    %22 = arith.mulf %19, %21 : vector<8x64xf32>
    %c1_15 = arith.constant 1 : index
    %23 = memref.load %arg4[%c1_15] : memref<4xf32, #tpu.memory_space<smem>>
    %24 = vector.broadcast %23 : f32 to vector<8x64xf32>
    %25 = arith.addf %22, %24 : vector<8x64xf32>
    %cst_16 = arith.constant 5.000000e-01 : f32
    %26 = vector.broadcast %cst_16 : f32 to vector<8x64xf32>
    %27 = arith.mulf %26, %25 : vector<8x64xf32>
    %28 = math.tanh %27 : vector<8x64xf32>
    %cst_17 = arith.constant 5.000000e-01 : f32
    %29 = vector.broadcast %cst_17 : f32 to vector<8x64xf32>
    %30 = arith.mulf %29, %28 : vector<8x64xf32>
    %cst_18 = arith.constant 5.000000e-01 : f32
    %31 = vector.broadcast %cst_18 : f32 to vector<8x64xf32>
    %32 = arith.addf %30, %31 : vector<8x64xf32>
    %c0_19 = arith.constant 0 : index
    %c1_20 = arith.constant 1 : index
    %c0_21 = arith.constant 0 : index
    %c0_22 = arith.constant 0 : index
    %33 = vector.load %arg5[%c0_19, %c1_20, %c0_21, %c0_22] : memref<1x4x8x64xf32, #tpu.memory_space<vmem>>, vector<1x1x8x64xf32>
    %34 = vector.shape_cast %33 : vector<1x1x8x64xf32> to vector<8x64xf32>
    %35 = vector.shape_cast %32 : vector<8x64xf32> to vector<1x1x8x64xf32>
    tpu.vector_store %arg5[%c0_19, %c1_20, %c0_21, %c0_22], %35 {strides = array<i32>} : memref<1x4x8x64xf32, #tpu.memory_space<vmem>>, vector<1x1x8x64xf32>,
    %c0_23 = arith.constant 0 : index
    %c2 = arith.constant 2 : index
    %c0_24 = arith.constant 0 : index
    %c0_25 = arith.constant 0 : index
    %36 = vector.load %arg2[%c0_23, %c2, %c0_24, %c0_25] : memref<1x4x8x64xf32, #tpu.memory_space<vmem>>, vector<1x1x8x64xf32>
    %37 = vector.shape_cast %36 : vector<1x1x8x64xf32> to vector<8x64xf32>
    %c2_26 = arith.constant 2 : index
    %38 = memref.load %arg3[%c2_26] : memref<4xf32, #tpu.memory_space<smem>>
    %39 = vector.broadcast %38 : f32 to vector<8x64xf32>
    %40 = arith.mulf %37, %39 : vector<8x64xf32>
    %c2_27 = arith.constant 2 : index
    %41 = memref.load %arg4[%c2_27] : memref<4xf32, #tpu.memory_space<smem>>
    %42 = vector.broadcast %41 : f32 to vector<8x64xf32>
    %43 = arith.addf %40, %42 : vector<8x64xf32>
    %cst_28 = arith.constant 5.000000e-01 : f32
    %44 = vector.broadcast %cst_28 : f32 to vector<8x64xf32>
    %45 = arith.mulf %44, %43 : vector<8x64xf32>
    %46 = math.tanh %45 : vector<8x64xf32>
    %cst_29 = arith.constant 5.000000e-01 : f32
    %47 = vector.broadcast %cst_29 : f32 to vector<8x64xf32>
    %48 = arith.mulf %47, %46 : vector<8x64xf32>
    %cst_30 = arith.constant 5.000000e-01 : f32
    %49 = vector.broadcast %cst_30 : f32 to vector<8x64xf32>
    %50 = arith.addf %48, %49 : vector<8x64xf32>
    %c0_31 = arith.constant 0 : index
    %c2_32 = arith.constant 2 : index
    %c0_33 = arith.constant 0 : index
    %c0_34 = arith.constant 0 : index
    %51 = vector.load %arg5[%c0_31, %c2_32, %c0_33, %c0_34] : memref<1x4x8x64xf32, #tpu.memory_space<vmem>>, vector<1x1x8x64xf32>
    %52 = vector.shape_cast %51 : vector<1x1x8x64xf32> to vector<8x64xf32>
    %53 = vector.shape_cast %50 : vector<8x64xf32> to vector<1x1x8x64xf32>
    tpu.vector_store %arg5[%c0_31, %c2_32, %c0_33, %c0_34], %53 {strides = array<i32>} : memref<1x4x8x64xf32, #tpu.memory_space<vmem>>, vector<1x1x8x64xf32>,
    %c0_35 = arith.constant 0 : index
    %c3 = arith.constant 3 : index
    %c0_36 = arith.constant 0 : index
    %c0_37 = arith.constant 0 : index
    %54 = vector.load %arg2[%c0_35, %c3, %c0_36, %c0_37] : memref<1x4x8x64xf32, #tpu.memory_space<vmem>>, vector<1x1x8x64xf32>
    %55 = vector.shape_cast %54 : vector<1x1x8x64xf32> to vector<8x64xf32>
    %c3_38 = arith.constant 3 : index
    %56 = memref.load %arg3[%c3_38] : memref<4xf32, #tpu.memory_space<smem>>
    %57 = vector.broadcast %56 : f32 to vector<8x64xf32>
    %58 = arith.mulf %55, %57 : vector<8x64xf32>
    %c3_39 = arith.constant 3 : index
    %59 = memref.load %arg4[%c3_39] : memref<4xf32, #tpu.memory_space<smem>>
    %60 = vector.broadcast %59 : f32 to vector<8x64xf32>
    %61 = arith.addf %58, %60 : vector<8x64xf32>
    %cst_40 = arith.constant 5.000000e-01 : f32
    %62 = vector.broadcast %cst_40 : f32 to vector<8x64xf32>
    %63 = arith.mulf %62, %61 : vector<8x64xf32>
    %64 = math.tanh %63 : vector<8x64xf32>
    %cst_41 = arith.constant 5.000000e-01 : f32
    %65 = vector.broadcast %cst_41 : f32 to vector<8x64xf32>
    %66 = arith.mulf %65, %64 : vector<8x64xf32>
    %cst_42 = arith.constant 5.000000e-01 : f32
    %67 = vector.broadcast %cst_42 : f32 to vector<8x64xf32>
    %68 = arith.addf %66, %67 : vector<8x64xf32>
    %c0_43 = arith.constant 0 : index
    %c3_44 = arith.constant 3 : index
    %c0_45 = arith.constant 0 : index
    %c0_46 = arith.constant 0 : index
    %69 = vector.load %arg5[%c0_43, %c3_44, %c0_45, %c0_46] : memref<1x4x8x64xf32, #tpu.memory_space<vmem>>, vector<1x1x8x64xf32>
    %70 = vector.shape_cast %69 : vector<1x1x8x64xf32> to vector<8x64xf32>
    %71 = vector.shape_cast %68 : vector<8x64xf32> to vector<1x1x8x64xf32>
    tpu.vector_store %arg5[%c0_43, %c3_44, %c0_45, %c0_46], %71 {strides = array<i32>} : memref<1x4x8x64xf32, #tpu.memory_space<vmem>>, vector<1x1x8x64xf32>,
    return
  }
  func.func @transform_0(%arg0: i32, %arg1: i32) -> (i32, i32, i32, i32) {
    %c0_i32 = arith.constant 0 : i32
    %c0_i32_0 = arith.constant 0 : i32
    %c0_i32_1 = arith.constant 0 : i32
    return %arg0, %c0_i32, %arg1, %c0_i32_0 : i32, i32, i32, i32
  }
  func.func @transform_1(%arg0: i32, %arg1: i32) -> i32 {
    %c0_i32 = arith.constant 0 : i32
    %c0_i32_0 = arith.constant 0 : i32
    return %c0_i32 : i32
  }
  func.func @transform_2(%arg0: i32, %arg1: i32) -> i32 {
    %c0_i32 = arith.constant 0 : i32
    %c0_i32_0 = arith.constant 0 : i32
    return %c0_i32 : i32
  }
  func.func @transform_3(%arg0: i32, %arg1: i32) -> (i32, i32, i32, i32) {
    %c0_i32 = arith.constant 0 : i32
    %c0_i32_0 = arith.constant 0 : i32
    %c0_i32_1 = arith.constant 0 : i32
    return %arg0, %c0_i32, %arg1, %c0_i32_0 : i32, i32, i32, i32
  }
}

module attributes {stable_mosaic.version = 11 : i64} {
  func.func @_conv_stats_kernel(%arg0: i32, %arg1: i32, %arg2: memref<1x8x64xf32, #tpu.memory_space<vmem>>, %arg3: memref<1x1x2x64xf32, #tpu.memory_space<vmem>>, %arg4: memref<2x64xf32, #tpu.memory_space<vmem>>, %arg5: memref<4x27xf32, #tpu.memory_space<smem>>, %arg6: memref<1x4x8x64xf32, #tpu.memory_space<vmem>>, %arg7: memref<1x1x8x128xf32, #tpu.memory_space<vmem>>, %arg8: memref<10x82xf32, #tpu.memory_space<vmem>>) attributes {dimension_semantics = [#tpu.dimension_semantics<parallel>, #tpu.dimension_semantics<parallel>], iteration_bounds = array<i64: 2, 1>, scalar_prefetch = 0 : i64, scratch_operands = 1 : i64, tpu.core_type = #tpu.core_type<tc>, window_params = [{transform_indices = @transform_0, window_bounds = array<i64: 1, 8, 64>}, {transform_indices = @transform_1, window_bounds = array<i64: 1, 1, 2, 64>}, {pipeline_mode = #tpu.pipeline_mode<synchronous>, transform_indices = @transform_2, window_bounds = array<i64: 2, 64>}, {transform_indices = @transform_3, window_bounds = array<i64: 4, 27>}, {transform_indices = @transform_4, window_bounds = array<i64: 1, 4, 8, 64>}, {transform_indices = @transform_5, window_bounds = array<i64: 1, 1, 8, 128>}]} {
    %cst = arith.constant 0.000000e+00 : f32
    %0 = vector.broadcast %cst : f32 to vector<10x9xf32>
    %c0 = arith.constant 0 : index
    %c0_0 = arith.constant 0 : index
    %1 = vector.load %arg8[%c0, %c0_0] : memref<10x82xf32, #tpu.memory_space<vmem>>, vector<10x9xf32>
    tpu.vector_store %arg8[%c0, %c0_0], %0 {strides = array<i32>} : memref<10x82xf32, #tpu.memory_space<vmem>>, vector<10x9xf32>,
    %cst_1 = arith.constant 0.000000e+00 : f32
    %2 = vector.broadcast %cst_1 : f32 to vector<10x9xf32>
    %c0_2 = arith.constant 0 : index
    %c73 = arith.constant 73 : index
    %3 = vector.load %arg8[%c0_2, %c73] : memref<10x82xf32, #tpu.memory_space<vmem>>, vector<10x9xf32>
    tpu.vector_store %arg8[%c0_2, %c73], %2 {strides = array<i32>} : memref<10x82xf32, #tpu.memory_space<vmem>>, vector<10x9xf32>,
    %c0_3 = arith.constant 0 : index
    %c0_4 = arith.constant 0 : index
    %c0_5 = arith.constant 0 : index
    %c0_6 = arith.constant 0 : index
    %4 = vector.load %arg3[%c0_3, %c0_4, %c0_5, %c0_6] : memref<1x1x2x64xf32, #tpu.memory_space<vmem>>, vector<1x1x1x64xf32>
    %5 = vector.shape_cast %4 : vector<1x1x1x64xf32> to vector<1x64xf32>
    %c0_7 = arith.constant 0 : index
    %c9 = arith.constant 9 : index
    %6 = vector.load %arg8[%c0_7, %c9] : memref<10x82xf32, #tpu.memory_space<vmem>>, vector<1x64xf32>
    tpu.vector_store %arg8[%c0_7, %c9], %5 {strides = array<i32>} : memref<10x82xf32, #tpu.memory_space<vmem>>, vector<1x64xf32>,
    %c0_8 = arith.constant 0 : index
    %c0_9 = arith.constant 0 : index
    %c0_10 = arith.constant 0 : index
    %7 = vector.load %arg2[%c0_8, %c0_9, %c0_10] : memref<1x8x64xf32, #tpu.memory_space<vmem>>, vector<1x8x64xf32>
    %8 = vector.shape_cast %7 : vector<1x8x64xf32> to vector<8x64xf32>
    %c1 = arith.constant 1 : index
    %c9_11 = arith.constant 9 : index
    %9 = vector.load %arg8[%c1, %c9_11] : memref<10x82xf32, #tpu.memory_space<vmem>>, vector<8x64xf32>
    tpu.vector_store %arg8[%c1, %c9_11], %8 {strides = array<i32>} : memref<10x82xf32, #tpu.memory_space<vmem>>, vector<8x64xf32>,
    %c0_12 = arith.constant 0 : index
    %c0_13 = arith.constant 0 : index
    %c1_14 = arith.constant 1 : index
    %c0_15 = arith.constant 0 : index
    %10 = vector.load %arg3[%c0_12, %c0_13, %c1_14, %c0_15] : memref<1x1x2x64xf32, #tpu.memory_space<vmem>>, vector<1x1x1x64xf32>
    %11 = vector.shape_cast %10 : vector<1x1x1x64xf32> to vector<1x64xf32>
    %c9_16 = arith.constant 9 : index
    %c9_17 = arith.constant 9 : index
    %12 = vector.load %arg8[%c9_16, %c9_17] : memref<10x82xf32, #tpu.memory_space<vmem>>, vector<1x64xf32>
    tpu.vector_store %arg8[%c9_16, %c9_17], %11 {strides = array<i32>} : memref<10x82xf32, #tpu.memory_space<vmem>>, vector<1x64xf32>,
    %c0_18 = arith.constant 0 : index
    %c0_19 = arith.constant 0 : index
    %13 = vector.load %arg4[%c0_18, %c0_19] : memref<2x64xf32, #tpu.memory_space<vmem>>, vector<1x64xf32>
    %c1_20 = arith.constant 1 : index
    %c0_21 = arith.constant 0 : index
    %14 = vector.load %arg4[%c1_20, %c0_21] : memref<2x64xf32, #tpu.memory_space<vmem>>, vector<1x64xf32>
    %cst_22 = arith.constant 0.000000e+00 : f32
    %15 = vector.broadcast %cst_22 : f32 to vector<8x64xf32>
    %cst_23 = arith.constant 0.000000e+00 : f32
    %16 = vector.broadcast %cst_23 : f32 to vector<8x64xf32>
    %cst_24 = arith.constant 0.000000e+00 : f32
    %17 = vector.broadcast %cst_24 : f32 to vector<8x64xf32>
    %cst_25 = arith.constant 0.000000e+00 : f32
    %18 = vector.broadcast %cst_25 : f32 to vector<8x64xf32>
    %c0_26 = arith.constant 0 : index
    %c0_27 = arith.constant 0 : index
    %19 = vector.load %arg8[%c0_26, %c0_27] : memref<10x82xf32, #tpu.memory_space<vmem>>, vector<8x64xf32>
    %20 = vector.broadcast %13 : vector<1x64xf32> to vector<8x64xf32>
    %21 = arith.mulf %19, %20 : vector<8x64xf32>
    %c0_28 = arith.constant 0 : index
    %c0_29 = arith.constant 0 : index
    %22 = memref.load %arg5[%c0_28, %c0_29] : memref<4x27xf32, #tpu.memory_space<smem>>
    %23 = vector.broadcast %22 : f32 to vector<8x64xf32>
    %24 = arith.mulf %23, %21 : vector<8x64xf32>
    %25 = arith.addf %15, %24 : vector<8x64xf32>
    %c1_30 = arith.constant 1 : index
    %c0_31 = arith.constant 0 : index
    %26 = memref.load %arg5[%c1_30, %c0_31] : memref<4x27xf32, #tpu.memory_space<smem>>
    %27 = vector.broadcast %26 : f32 to vector<8x64xf32>
    %28 = arith.mulf %27, %21 : vector<8x64xf32>
    %29 = arith.addf %16, %28 : vector<8x64xf32>
    %c2 = arith.constant 2 : index
    %c0_32 = arith.constant 0 : index
    %30 = memref.load %arg5[%c2, %c0_32] : memref<4x27xf32, #tpu.memory_space<smem>>
    %31 = vector.broadcast %30 : f32 to vector<8x64xf32>
    %32 = arith.mulf %31, %21 : vector<8x64xf32>
    %33 = arith.addf %17, %32 : vector<8x64xf32>
    %c3 = arith.constant 3 : index
    %c0_33 = arith.constant 0 : index
    %34 = memref.load %arg5[%c3, %c0_33] : memref<4x27xf32, #tpu.memory_space<smem>>
    %35 = vector.broadcast %34 : f32 to vector<8x64xf32>
    %36 = arith.mulf %35, %21 : vector<8x64xf32>
    %37 = arith.addf %18, %36 : vector<8x64xf32>
    %c0_34 = arith.constant 0 : index
    %c1_35 = arith.constant 1 : index
    %38 = vector.load %arg8[%c0_34, %c1_35] : memref<10x82xf32, #tpu.memory_space<vmem>>, vector<8x64xf32>
    %c0_36 = arith.constant 0 : index
    %c1_37 = arith.constant 1 : index
    %39 = memref.load %arg5[%c0_36, %c1_37] : memref<4x27xf32, #tpu.memory_space<smem>>
    %40 = vector.broadcast %39 : f32 to vector<8x64xf32>
    %41 = arith.mulf %40, %38 : vector<8x64xf32>
    %42 = arith.addf %25, %41 : vector<8x64xf32>
    %c1_38 = arith.constant 1 : index
    %c1_39 = arith.constant 1 : index
    %43 = memref.load %arg5[%c1_38, %c1_39] : memref<4x27xf32, #tpu.memory_space<smem>>
    %44 = vector.broadcast %43 : f32 to vector<8x64xf32>
    %45 = arith.mulf %44, %38 : vector<8x64xf32>
    %46 = arith.addf %29, %45 : vector<8x64xf32>
    %c2_40 = arith.constant 2 : index
    %c1_41 = arith.constant 1 : index
    %47 = memref.load %arg5[%c2_40, %c1_41] : memref<4x27xf32, #tpu.memory_space<smem>>
    %48 = vector.broadcast %47 : f32 to vector<8x64xf32>
    %49 = arith.mulf %48, %38 : vector<8x64xf32>
    %50 = arith.addf %33, %49 : vector<8x64xf32>
    %c3_42 = arith.constant 3 : index
    %c1_43 = arith.constant 1 : index
    %51 = memref.load %arg5[%c3_42, %c1_43] : memref<4x27xf32, #tpu.memory_space<smem>>
    %52 = vector.broadcast %51 : f32 to vector<8x64xf32>
    %53 = arith.mulf %52, %38 : vector<8x64xf32>
    %54 = arith.addf %37, %53 : vector<8x64xf32>
    %c0_44 = arith.constant 0 : index
    %c2_45 = arith.constant 2 : index
    %55 = vector.load %arg8[%c0_44, %c2_45] : memref<10x82xf32, #tpu.memory_space<vmem>>, vector<8x64xf32>
    %56 = vector.broadcast %14 : vector<1x64xf32> to vector<8x64xf32>
    %57 = arith.mulf %55, %56 : vector<8x64xf32>
    %c0_46 = arith.constant 0 : index
    %c2_47 = arith.constant 2 : index
    %58 = memref.load %arg5[%c0_46, %c2_47] : memref<4x27xf32, #tpu.memory_space<smem>>
    %59 = vector.broadcast %58 : f32 to vector<8x64xf32>
    %60 = arith.mulf %59, %57 : vector<8x64xf32>
    %61 = arith.addf %42, %60 : vector<8x64xf32>
    %c1_48 = arith.constant 1 : index
    %c2_49 = arith.constant 2 : index
    %62 = memref.load %arg5[%c1_48, %c2_49] : memref<4x27xf32, #tpu.memory_space<smem>>
    %63 = vector.broadcast %62 : f32 to vector<8x64xf32>
    %64 = arith.mulf %63, %57 : vector<8x64xf32>
    %65 = arith.addf %46, %64 : vector<8x64xf32>
    %c2_50 = arith.constant 2 : index
    %c2_51 = arith.constant 2 : index
    %66 = memref.load %arg5[%c2_50, %c2_51] : memref<4x27xf32, #tpu.memory_space<smem>>
    %67 = vector.broadcast %66 : f32 to vector<8x64xf32>
    %68 = arith.mulf %67, %57 : vector<8x64xf32>
    %69 = arith.addf %50, %68 : vector<8x64xf32>
    %c3_52 = arith.constant 3 : index
    %c2_53 = arith.constant 2 : index
    %70 = memref.load %arg5[%c3_52, %c2_53] : memref<4x27xf32, #tpu.memory_space<smem>>
    %71 = vector.broadcast %70 : f32 to vector<8x64xf32>
    %72 = arith.mulf %71, %57 : vector<8x64xf32>
    %73 = arith.addf %54, %72 : vector<8x64xf32>
    %c0_54 = arith.constant 0 : index
    %c8 = arith.constant 8 : index
    %74 = vector.load %arg8[%c0_54, %c8] : memref<10x82xf32, #tpu.memory_space<vmem>>, vector<8x64xf32>
    %75 = vector.broadcast %13 : vector<1x64xf32> to vector<8x64xf32>
    %76 = arith.mulf %74, %75 : vector<8x64xf32>
    %c0_55 = arith.constant 0 : index
    %c3_56 = arith.constant 3 : index
    %77 = memref.load %arg5[%c0_55, %c3_56] : memref<4x27xf32, #tpu.memory_space<smem>>
    %78 = vector.broadcast %77 : f32 to vector<8x64xf32>
    %79 = arith.mulf %78, %76 : vector<8x64xf32>
    %80 = arith.addf %61, %79 : vector<8x64xf32>
    %c1_57 = arith.constant 1 : index
    %c3_58 = arith.constant 3 : index
    %81 = memref.load %arg5[%c1_57, %c3_58] : memref<4x27xf32, #tpu.memory_space<smem>>
    %82 = vector.broadcast %81 : f32 to vector<8x64xf32>
    %83 = arith.mulf %82, %76 : vector<8x64xf32>
    %84 = arith.addf %65, %83 : vector<8x64xf32>
    %c2_59 = arith.constant 2 : index
    %c3_60 = arith.constant 3 : index
    %85 = memref.load %arg5[%c2_59, %c3_60] : memref<4x27xf32, #tpu.memory_space<smem>>
    %86 = vector.broadcast %85 : f32 to vector<8x64xf32>
    %87 = arith.mulf %86, %76 : vector<8x64xf32>
    %88 = arith.addf %69, %87 : vector<8x64xf32>
    %c3_61 = arith.constant 3 : index
    %c3_62 = arith.constant 3 : index
    %89 = memref.load %arg5[%c3_61, %c3_62] : memref<4x27xf32, #tpu.memory_space<smem>>
    %90 = vector.broadcast %89 : f32 to vector<8x64xf32>
    %91 = arith.mulf %90, %76 : vector<8x64xf32>
    %92 = arith.addf %73, %91 : vector<8x64xf32>
    %c0_63 = arith.constant 0 : index
    %c9_64 = arith.constant 9 : index
    %93 = vector.load %arg8[%c0_63, %c9_64] : memref<10x82xf32, #tpu.memory_space<vmem>>, vector<8x64xf32>
    %c0_65 = arith.constant 0 : index
    %c4 = arith.constant 4 : index
    %94 = memref.load %arg5[%c0_65, %c4] : memref<4x27xf32, #tpu.memory_space<smem>>
    %95 = vector.broadcast %94 : f32 to vector<8x64xf32>
    %96 = arith.mulf %95, %93 : vector<8x64xf32>
    %97 = arith.addf %80, %96 : vector<8x64xf32>
    %c1_66 = arith.constant 1 : index
    %c4_67 = arith.constant 4 : index
    %98 = memref.load %arg5[%c1_66, %c4_67] : memref<4x27xf32, #tpu.memory_space<smem>>
    %99 = vector.broadcast %98 : f32 to vector<8x64xf32>
    %100 = arith.mulf %99, %93 : vector<8x64xf32>
    %101 = arith.addf %84, %100 : vector<8x64xf32>
    %c2_68 = arith.constant 2 : index
    %c4_69 = arith.constant 4 : index
    %102 = memref.load %arg5[%c2_68, %c4_69] : memref<4x27xf32, #tpu.memory_space<smem>>
    %103 = vector.broadcast %102 : f32 to vector<8x64xf32>
    %104 = arith.mulf %103, %93 : vector<8x64xf32>
    %105 = arith.addf %88, %104 : vector<8x64xf32>
    %c3_70 = arith.constant 3 : index
    %c4_71 = arith.constant 4 : index
    %106 = memref.load %arg5[%c3_70, %c4_71] : memref<4x27xf32, #tpu.memory_space<smem>>
    %107 = vector.broadcast %106 : f32 to vector<8x64xf32>
    %108 = arith.mulf %107, %93 : vector<8x64xf32>
    %109 = arith.addf %92, %108 : vector<8x64xf32>
    %c0_72 = arith.constant 0 : index
    %c10 = arith.constant 10 : index
    %110 = vector.load %arg8[%c0_72, %c10] : memref<10x82xf32, #tpu.memory_space<vmem>>, vector<8x64xf32>
    %111 = vector.broadcast %14 : vector<1x64xf32> to vector<8x64xf32>
    %112 = arith.mulf %110, %111 : vector<8x64xf32>
    %c0_73 = arith.constant 0 : index
    %c5 = arith.constant 5 : index
    %113 = memref.load %arg5[%c0_73, %c5] : memref<4x27xf32, #tpu.memory_space<smem>>
    %114 = vector.broadcast %113 : f32 to vector<8x64xf32>
    %115 = arith.mulf %114, %112 : vector<8x64xf32>
    %116 = arith.addf %97, %115 : vector<8x64xf32>
    %c1_74 = arith.constant 1 : index
    %c5_75 = arith.constant 5 : index
    %117 = memref.load %arg5[%c1_74, %c5_75] : memref<4x27xf32, #tpu.memory_space<smem>>
    %118 = vector.broadcast %117 : f32 to vector<8x64xf32>
    %119 = arith.mulf %118, %112 : vector<8x64xf32>
    %120 = arith.addf %101, %119 : vector<8x64xf32>
    %c2_76 = arith.constant 2 : index
    %c5_77 = arith.constant 5 : index
    %121 = memref.load %arg5[%c2_76, %c5_77] : memref<4x27xf32, #tpu.memory_space<smem>>
    %122 = vector.broadcast %121 : f32 to vector<8x64xf32>
    %123 = arith.mulf %122, %112 : vector<8x64xf32>
    %124 = arith.addf %105, %123 : vector<8x64xf32>
    %c3_78 = arith.constant 3 : index
    %c5_79 = arith.constant 5 : index
    %125 = memref.load %arg5[%c3_78, %c5_79] : memref<4x27xf32, #tpu.memory_space<smem>>
    %126 = vector.broadcast %125 : f32 to vector<8x64xf32>
    %127 = arith.mulf %126, %112 : vector<8x64xf32>
    %128 = arith.addf %109, %127 : vector<8x64xf32>
    %c0_80 = arith.constant 0 : index
    %c16 = arith.constant 16 : index
    %129 = vector.load %arg8[%c0_80, %c16] : memref<10x82xf32, #tpu.memory_space<vmem>>, vector<8x64xf32>
    %130 = vector.broadcast %13 : vector<1x64xf32> to vector<8x64xf32>
    %131 = arith.mulf %129, %130 : vector<8x64xf32>
    %c0_81 = arith.constant 0 : index
    %c6 = arith.constant 6 : index
    %132 = memref.load %arg5[%c0_81, %c6] : memref<4x27xf32, #tpu.memory_space<smem>>
    %133 = vector.broadcast %132 : f32 to vector<8x64xf32>
    %134 = arith.mulf %133, %131 : vector<8x64xf32>
    %135 = arith.addf %116, %134 : vector<8x64xf32>
    %c1_82 = arith.constant 1 : index
    %c6_83 = arith.constant 6 : index
    %136 = memref.load %arg5[%c1_82, %c6_83] : memref<4x27xf32, #tpu.memory_space<smem>>
    %137 = vector.broadcast %136 : f32 to vector<8x64xf32>
    %138 = arith.mulf %137, %131 : vector<8x64xf32>
    %139 = arith.addf %120, %138 : vector<8x64xf32>
    %c2_84 = arith.constant 2 : index
    %c6_85 = arith.constant 6 : index
    %140 = memref.load %arg5[%c2_84, %c6_85] : memref<4x27xf32, #tpu.memory_space<smem>>
    %141 = vector.broadcast %140 : f32 to vector<8x64xf32>
    %142 = arith.mulf %141, %131 : vector<8x64xf32>
    %143 = arith.addf %124, %142 : vector<8x64xf32>
    %c3_86 = arith.constant 3 : index
    %c6_87 = arith.constant 6 : index
    %144 = memref.load %arg5[%c3_86, %c6_87] : memref<4x27xf32, #tpu.memory_space<smem>>
    %145 = vector.broadcast %144 : f32 to vector<8x64xf32>
    %146 = arith.mulf %145, %131 : vector<8x64xf32>
    %147 = arith.addf %128, %146 : vector<8x64xf32>
    %c0_88 = arith.constant 0 : index
    %c17 = arith.constant 17 : index
    %148 = vector.load %arg8[%c0_88, %c17] : memref<10x82xf32, #tpu.memory_space<vmem>>, vector<8x64xf32>
    %c0_89 = arith.constant 0 : index
    %c7 = arith.constant 7 : index
    %149 = memref.load %arg5[%c0_89, %c7] : memref<4x27xf32, #tpu.memory_space<smem>>
    %150 = vector.broadcast %149 : f32 to vector<8x64xf32>
    %151 = arith.mulf %150, %148 : vector<8x64xf32>
    %152 = arith.addf %135, %151 : vector<8x64xf32>
    %c1_90 = arith.constant 1 : index
    %c7_91 = arith.constant 7 : index
    %153 = memref.load %arg5[%c1_90, %c7_91] : memref<4x27xf32, #tpu.memory_space<smem>>
    %154 = vector.broadcast %153 : f32 to vector<8x64xf32>
    %155 = arith.mulf %154, %148 : vector<8x64xf32>
    %156 = arith.addf %139, %155 : vector<8x64xf32>
    %c2_92 = arith.constant 2 : index
    %c7_93 = arith.constant 7 : index
    %157 = memref.load %arg5[%c2_92, %c7_93] : memref<4x27xf32, #tpu.memory_space<smem>>
    %158 = vector.broadcast %157 : f32 to vector<8x64xf32>
    %159 = arith.mulf %158, %148 : vector<8x64xf32>
    %160 = arith.addf %143, %159 : vector<8x64xf32>
    %c3_94 = arith.constant 3 : index
    %c7_95 = arith.constant 7 : index
    %161 = memref.load %arg5[%c3_94, %c7_95] : memref<4x27xf32, #tpu.memory_space<smem>>
    %162 = vector.broadcast %161 : f32 to vector<8x64xf32>
    %163 = arith.mulf %162, %148 : vector<8x64xf32>
    %164 = arith.addf %147, %163 : vector<8x64xf32>
    %c0_96 = arith.constant 0 : index
    %c18 = arith.constant 18 : index
    %165 = vector.load %arg8[%c0_96, %c18] : memref<10x82xf32, #tpu.memory_space<vmem>>, vector<8x64xf32>
    %166 = vector.broadcast %14 : vector<1x64xf32> to vector<8x64xf32>
    %167 = arith.mulf %165, %166 : vector<8x64xf32>
    %c0_97 = arith.constant 0 : index
    %c8_98 = arith.constant 8 : index
    %168 = memref.load %arg5[%c0_97, %c8_98] : memref<4x27xf32, #tpu.memory_space<smem>>
    %169 = vector.broadcast %168 : f32 to vector<8x64xf32>
    %170 = arith.mulf %169, %167 : vector<8x64xf32>
    %171 = arith.addf %152, %170 : vector<8x64xf32>
    %c1_99 = arith.constant 1 : index
    %c8_100 = arith.constant 8 : index
    %172 = memref.load %arg5[%c1_99, %c8_100] : memref<4x27xf32, #tpu.memory_space<smem>>
    %173 = vector.broadcast %172 : f32 to vector<8x64xf32>
    %174 = arith.mulf %173, %167 : vector<8x64xf32>
    %175 = arith.addf %156, %174 : vector<8x64xf32>
    %c2_101 = arith.constant 2 : index
    %c8_102 = arith.constant 8 : index
    %176 = memref.load %arg5[%c2_101, %c8_102] : memref<4x27xf32, #tpu.memory_space<smem>>
    %177 = vector.broadcast %176 : f32 to vector<8x64xf32>
    %178 = arith.mulf %177, %167 : vector<8x64xf32>
    %179 = arith.addf %160, %178 : vector<8x64xf32>
    %c3_103 = arith.constant 3 : index
    %c8_104 = arith.constant 8 : index
    %180 = memref.load %arg5[%c3_103, %c8_104] : memref<4x27xf32, #tpu.memory_space<smem>>
    %181 = vector.broadcast %180 : f32 to vector<8x64xf32>
    %182 = arith.mulf %181, %167 : vector<8x64xf32>
    %183 = arith.addf %164, %182 : vector<8x64xf32>
    %c1_105 = arith.constant 1 : index
    %c0_106 = arith.constant 0 : index
    %184 = vector.load %arg8[%c1_105, %c0_106] : memref<10x82xf32, #tpu.memory_space<vmem>>, vector<8x64xf32>
    %185 = vector.broadcast %13 : vector<1x64xf32> to vector<8x64xf32>
    %186 = arith.mulf %184, %185 : vector<8x64xf32>
    %c0_107 = arith.constant 0 : index
    %c9_108 = arith.constant 9 : index
    %187 = memref.load %arg5[%c0_107, %c9_108] : memref<4x27xf32, #tpu.memory_space<smem>>
    %188 = vector.broadcast %187 : f32 to vector<8x64xf32>
    %189 = arith.mulf %188, %186 : vector<8x64xf32>
    %190 = arith.addf %171, %189 : vector<8x64xf32>
    %c1_109 = arith.constant 1 : index
    %c9_110 = arith.constant 9 : index
    %191 = memref.load %arg5[%c1_109, %c9_110] : memref<4x27xf32, #tpu.memory_space<smem>>
    %192 = vector.broadcast %191 : f32 to vector<8x64xf32>
    %193 = arith.mulf %192, %186 : vector<8x64xf32>
    %194 = arith.addf %175, %193 : vector<8x64xf32>
    %c2_111 = arith.constant 2 : index
    %c9_112 = arith.constant 9 : index
    %195 = memref.load %arg5[%c2_111, %c9_112] : memref<4x27xf32, #tpu.memory_space<smem>>
    %196 = vector.broadcast %195 : f32 to vector<8x64xf32>
    %197 = arith.mulf %196, %186 : vector<8x64xf32>
    %198 = arith.addf %179, %197 : vector<8x64xf32>
    %c3_113 = arith.constant 3 : index
    %c9_114 = arith.constant 9 : index
    %199 = memref.load %arg5[%c3_113, %c9_114] : memref<4x27xf32, #tpu.memory_space<smem>>
    %200 = vector.broadcast %199 : f32 to vector<8x64xf32>
    %201 = arith.mulf %200, %186 : vector<8x64xf32>
    %202 = arith.addf %183, %201 : vector<8x64xf32>
    %c1_115 = arith.constant 1 : index
    %c1_116 = arith.constant 1 : index
    %203 = vector.load %arg8[%c1_115, %c1_116] : memref<10x82xf32, #tpu.memory_space<vmem>>, vector<8x64xf32>
    %c0_117 = arith.constant 0 : index
    %c10_118 = arith.constant 10 : index
    %204 = memref.load %arg5[%c0_117, %c10_118] : memref<4x27xf32, #tpu.memory_space<smem>>
    %205 = vector.broadcast %204 : f32 to vector<8x64xf32>
    %206 = arith.mulf %205, %203 : vector<8x64xf32>
    %207 = arith.addf %190, %206 : vector<8x64xf32>
    %c1_119 = arith.constant 1 : index
    %c10_120 = arith.constant 10 : index
    %208 = memref.load %arg5[%c1_119, %c10_120] : memref<4x27xf32, #tpu.memory_space<smem>>
    %209 = vector.broadcast %208 : f32 to vector<8x64xf32>
    %210 = arith.mulf %209, %203 : vector<8x64xf32>
    %211 = arith.addf %194, %210 : vector<8x64xf32>
    %c2_121 = arith.constant 2 : index
    %c10_122 = arith.constant 10 : index
    %212 = memref.load %arg5[%c2_121, %c10_122] : memref<4x27xf32, #tpu.memory_space<smem>>
    %213 = vector.broadcast %212 : f32 to vector<8x64xf32>
    %214 = arith.mulf %213, %203 : vector<8x64xf32>
    %215 = arith.addf %198, %214 : vector<8x64xf32>
    %c3_123 = arith.constant 3 : index
    %c10_124 = arith.constant 10 : index
    %216 = memref.load %arg5[%c3_123, %c10_124] : memref<4x27xf32, #tpu.memory_space<smem>>
    %217 = vector.broadcast %216 : f32 to vector<8x64xf32>
    %218 = arith.mulf %217, %203 : vector<8x64xf32>
    %219 = arith.addf %202, %218 : vector<8x64xf32>
    %c1_125 = arith.constant 1 : index
    %c2_126 = arith.constant 2 : index
    %220 = vector.load %arg8[%c1_125, %c2_126] : memref<10x82xf32, #tpu.memory_space<vmem>>, vector<8x64xf32>
    %221 = vector.broadcast %14 : vector<1x64xf32> to vector<8x64xf32>
    %222 = arith.mulf %220, %221 : vector<8x64xf32>
    %c0_127 = arith.constant 0 : index
    %c11 = arith.constant 11 : index
    %223 = memref.load %arg5[%c0_127, %c11] : memref<4x27xf32, #tpu.memory_space<smem>>
    %224 = vector.broadcast %223 : f32 to vector<8x64xf32>
    %225 = arith.mulf %224, %222 : vector<8x64xf32>
    %226 = arith.addf %207, %225 : vector<8x64xf32>
    %c1_128 = arith.constant 1 : index
    %c11_129 = arith.constant 11 : index
    %227 = memref.load %arg5[%c1_128, %c11_129] : memref<4x27xf32, #tpu.memory_space<smem>>
    %228 = vector.broadcast %227 : f32 to vector<8x64xf32>
    %229 = arith.mulf %228, %222 : vector<8x64xf32>
    %230 = arith.addf %211, %229 : vector<8x64xf32>
    %c2_130 = arith.constant 2 : index
    %c11_131 = arith.constant 11 : index
    %231 = memref.load %arg5[%c2_130, %c11_131] : memref<4x27xf32, #tpu.memory_space<smem>>
    %232 = vector.broadcast %231 : f32 to vector<8x64xf32>
    %233 = arith.mulf %232, %222 : vector<8x64xf32>
    %234 = arith.addf %215, %233 : vector<8x64xf32>
    %c3_132 = arith.constant 3 : index
    %c11_133 = arith.constant 11 : index
    %235 = memref.load %arg5[%c3_132, %c11_133] : memref<4x27xf32, #tpu.memory_space<smem>>
    %236 = vector.broadcast %235 : f32 to vector<8x64xf32>
    %237 = arith.mulf %236, %222 : vector<8x64xf32>
    %238 = arith.addf %219, %237 : vector<8x64xf32>
    %c1_134 = arith.constant 1 : index
    %c8_135 = arith.constant 8 : index
    %239 = vector.load %arg8[%c1_134, %c8_135] : memref<10x82xf32, #tpu.memory_space<vmem>>, vector<8x64xf32>
    %240 = vector.broadcast %13 : vector<1x64xf32> to vector<8x64xf32>
    %241 = arith.mulf %239, %240 : vector<8x64xf32>
    %c0_136 = arith.constant 0 : index
    %c12 = arith.constant 12 : index
    %242 = memref.load %arg5[%c0_136, %c12] : memref<4x27xf32, #tpu.memory_space<smem>>
    %243 = vector.broadcast %242 : f32 to vector<8x64xf32>
    %244 = arith.mulf %243, %241 : vector<8x64xf32>
    %245 = arith.addf %226, %244 : vector<8x64xf32>
    %c1_137 = arith.constant 1 : index
    %c12_138 = arith.constant 12 : index
    %246 = memref.load %arg5[%c1_137, %c12_138] : memref<4x27xf32, #tpu.memory_space<smem>>
    %247 = vector.broadcast %246 : f32 to vector<8x64xf32>
    %248 = arith.mulf %247, %241 : vector<8x64xf32>
    %249 = arith.addf %230, %248 : vector<8x64xf32>
    %c2_139 = arith.constant 2 : index
    %c12_140 = arith.constant 12 : index
    %250 = memref.load %arg5[%c2_139, %c12_140] : memref<4x27xf32, #tpu.memory_space<smem>>
    %251 = vector.broadcast %250 : f32 to vector<8x64xf32>
    %252 = arith.mulf %251, %241 : vector<8x64xf32>
    %253 = arith.addf %234, %252 : vector<8x64xf32>
    %c3_141 = arith.constant 3 : index
    %c12_142 = arith.constant 12 : index
    %254 = memref.load %arg5[%c3_141, %c12_142] : memref<4x27xf32, #tpu.memory_space<smem>>
    %255 = vector.broadcast %254 : f32 to vector<8x64xf32>
    %256 = arith.mulf %255, %241 : vector<8x64xf32>
    %257 = arith.addf %238, %256 : vector<8x64xf32>
    %c1_143 = arith.constant 1 : index
    %c9_144 = arith.constant 9 : index
    %258 = vector.load %arg8[%c1_143, %c9_144] : memref<10x82xf32, #tpu.memory_space<vmem>>, vector<8x64xf32>
    %c0_145 = arith.constant 0 : index
    %c13 = arith.constant 13 : index
    %259 = memref.load %arg5[%c0_145, %c13] : memref<4x27xf32, #tpu.memory_space<smem>>
    %260 = vector.broadcast %259 : f32 to vector<8x64xf32>
    %261 = arith.mulf %260, %258 : vector<8x64xf32>
    %262 = arith.addf %245, %261 : vector<8x64xf32>
    %c1_146 = arith.constant 1 : index
    %c13_147 = arith.constant 13 : index
    %263 = memref.load %arg5[%c1_146, %c13_147] : memref<4x27xf32, #tpu.memory_space<smem>>
    %264 = vector.broadcast %263 : f32 to vector<8x64xf32>
    %265 = arith.mulf %264, %258 : vector<8x64xf32>
    %266 = arith.addf %249, %265 : vector<8x64xf32>
    %c2_148 = arith.constant 2 : index
    %c13_149 = arith.constant 13 : index
    %267 = memref.load %arg5[%c2_148, %c13_149] : memref<4x27xf32, #tpu.memory_space<smem>>
    %268 = vector.broadcast %267 : f32 to vector<8x64xf32>
    %269 = arith.mulf %268, %258 : vector<8x64xf32>
    %270 = arith.addf %253, %269 : vector<8x64xf32>
    %c3_150 = arith.constant 3 : index
    %c13_151 = arith.constant 13 : index
    %271 = memref.load %arg5[%c3_150, %c13_151] : memref<4x27xf32, #tpu.memory_space<smem>>
    %272 = vector.broadcast %271 : f32 to vector<8x64xf32>
    %273 = arith.mulf %272, %258 : vector<8x64xf32>
    %274 = arith.addf %257, %273 : vector<8x64xf32>
    %c1_152 = arith.constant 1 : index
    %c10_153 = arith.constant 10 : index
    %275 = vector.load %arg8[%c1_152, %c10_153] : memref<10x82xf32, #tpu.memory_space<vmem>>, vector<8x64xf32>
    %276 = vector.broadcast %14 : vector<1x64xf32> to vector<8x64xf32>
    %277 = arith.mulf %275, %276 : vector<8x64xf32>
    %c0_154 = arith.constant 0 : index
    %c14 = arith.constant 14 : index
    %278 = memref.load %arg5[%c0_154, %c14] : memref<4x27xf32, #tpu.memory_space<smem>>
    %279 = vector.broadcast %278 : f32 to vector<8x64xf32>
    %280 = arith.mulf %279, %277 : vector<8x64xf32>
    %281 = arith.addf %262, %280 : vector<8x64xf32>
    %c1_155 = arith.constant 1 : index
    %c14_156 = arith.constant 14 : index
    %282 = memref.load %arg5[%c1_155, %c14_156] : memref<4x27xf32, #tpu.memory_space<smem>>
    %283 = vector.broadcast %282 : f32 to vector<8x64xf32>
    %284 = arith.mulf %283, %277 : vector<8x64xf32>
    %285 = arith.addf %266, %284 : vector<8x64xf32>
    %c2_157 = arith.constant 2 : index
    %c14_158 = arith.constant 14 : index
    %286 = memref.load %arg5[%c2_157, %c14_158] : memref<4x27xf32, #tpu.memory_space<smem>>
    %287 = vector.broadcast %286 : f32 to vector<8x64xf32>
    %288 = arith.mulf %287, %277 : vector<8x64xf32>
    %289 = arith.addf %270, %288 : vector<8x64xf32>
    %c3_159 = arith.constant 3 : index
    %c14_160 = arith.constant 14 : index
    %290 = memref.load %arg5[%c3_159, %c14_160] : memref<4x27xf32, #tpu.memory_space<smem>>
    %291 = vector.broadcast %290 : f32 to vector<8x64xf32>
    %292 = arith.mulf %291, %277 : vector<8x64xf32>
    %293 = arith.addf %274, %292 : vector<8x64xf32>
    %c1_161 = arith.constant 1 : index
    %c16_162 = arith.constant 16 : index
    %294 = vector.load %arg8[%c1_161, %c16_162] : memref<10x82xf32, #tpu.memory_space<vmem>>, vector<8x64xf32>
    %295 = vector.broadcast %13 : vector<1x64xf32> to vector<8x64xf32>
    %296 = arith.mulf %294, %295 : vector<8x64xf32>
    %c0_163 = arith.constant 0 : index
    %c15 = arith.constant 15 : index
    %297 = memref.load %arg5[%c0_163, %c15] : memref<4x27xf32, #tpu.memory_space<smem>>
    %298 = vector.broadcast %297 : f32 to vector<8x64xf32>
    %299 = arith.mulf %298, %296 : vector<8x64xf32>
    %300 = arith.addf %281, %299 : vector<8x64xf32>
    %c1_164 = arith.constant 1 : index
    %c15_165 = arith.constant 15 : index
    %301 = memref.load %arg5[%c1_164, %c15_165] : memref<4x27xf32, #tpu.memory_space<smem>>
    %302 = vector.broadcast %301 : f32 to vector<8x64xf32>
    %303 = arith.mulf %302, %296 : vector<8x64xf32>
    %304 = arith.addf %285, %303 : vector<8x64xf32>
    %c2_166 = arith.constant 2 : index
    %c15_167 = arith.constant 15 : index
    %305 = memref.load %arg5[%c2_166, %c15_167] : memref<4x27xf32, #tpu.memory_space<smem>>
    %306 = vector.broadcast %305 : f32 to vector<8x64xf32>
    %307 = arith.mulf %306, %296 : vector<8x64xf32>
    %308 = arith.addf %289, %307 : vector<8x64xf32>
    %c3_168 = arith.constant 3 : index
    %c15_169 = arith.constant 15 : index
    %309 = memref.load %arg5[%c3_168, %c15_169] : memref<4x27xf32, #tpu.memory_space<smem>>
    %310 = vector.broadcast %309 : f32 to vector<8x64xf32>
    %311 = arith.mulf %310, %296 : vector<8x64xf32>
    %312 = arith.addf %293, %311 : vector<8x64xf32>
    %c1_170 = arith.constant 1 : index
    %c17_171 = arith.constant 17 : index
    %313 = vector.load %arg8[%c1_170, %c17_171] : memref<10x82xf32, #tpu.memory_space<vmem>>, vector<8x64xf32>
    %c0_172 = arith.constant 0 : index
    %c16_173 = arith.constant 16 : index
    %314 = memref.load %arg5[%c0_172, %c16_173] : memref<4x27xf32, #tpu.memory_space<smem>>
    %315 = vector.broadcast %314 : f32 to vector<8x64xf32>
    %316 = arith.mulf %315, %313 : vector<8x64xf32>
    %317 = arith.addf %300, %316 : vector<8x64xf32>
    %c1_174 = arith.constant 1 : index
    %c16_175 = arith.constant 16 : index
    %318 = memref.load %arg5[%c1_174, %c16_175] : memref<4x27xf32, #tpu.memory_space<smem>>
    %319 = vector.broadcast %318 : f32 to vector<8x64xf32>
    %320 = arith.mulf %319, %313 : vector<8x64xf32>
    %321 = arith.addf %304, %320 : vector<8x64xf32>
    %c2_176 = arith.constant 2 : index
    %c16_177 = arith.constant 16 : index
    %322 = memref.load %arg5[%c2_176, %c16_177] : memref<4x27xf32, #tpu.memory_space<smem>>
    %323 = vector.broadcast %322 : f32 to vector<8x64xf32>
    %324 = arith.mulf %323, %313 : vector<8x64xf32>
    %325 = arith.addf %308, %324 : vector<8x64xf32>
    %c3_178 = arith.constant 3 : index
    %c16_179 = arith.constant 16 : index
    %326 = memref.load %arg5[%c3_178, %c16_179] : memref<4x27xf32, #tpu.memory_space<smem>>
    %327 = vector.broadcast %326 : f32 to vector<8x64xf32>
    %328 = arith.mulf %327, %313 : vector<8x64xf32>
    %329 = arith.addf %312, %328 : vector<8x64xf32>
    %c1_180 = arith.constant 1 : index
    %c18_181 = arith.constant 18 : index
    %330 = vector.load %arg8[%c1_180, %c18_181] : memref<10x82xf32, #tpu.memory_space<vmem>>, vector<8x64xf32>
    %331 = vector.broadcast %14 : vector<1x64xf32> to vector<8x64xf32>
    %332 = arith.mulf %330, %331 : vector<8x64xf32>
    %c0_182 = arith.constant 0 : index
    %c17_183 = arith.constant 17 : index
    %333 = memref.load %arg5[%c0_182, %c17_183] : memref<4x27xf32, #tpu.memory_space<smem>>
    %334 = vector.broadcast %333 : f32 to vector<8x64xf32>
    %335 = arith.mulf %334, %332 : vector<8x64xf32>
    %336 = arith.addf %317, %335 : vector<8x64xf32>
    %c1_184 = arith.constant 1 : index
    %c17_185 = arith.constant 17 : index
    %337 = memref.load %arg5[%c1_184, %c17_185] : memref<4x27xf32, #tpu.memory_space<smem>>
    %338 = vector.broadcast %337 : f32 to vector<8x64xf32>
    %339 = arith.mulf %338, %332 : vector<8x64xf32>
    %340 = arith.addf %321, %339 : vector<8x64xf32>
    %c2_186 = arith.constant 2 : index
    %c17_187 = arith.constant 17 : index
    %341 = memref.load %arg5[%c2_186, %c17_187] : memref<4x27xf32, #tpu.memory_space<smem>>
    %342 = vector.broadcast %341 : f32 to vector<8x64xf32>
    %343 = arith.mulf %342, %332 : vector<8x64xf32>
    %344 = arith.addf %325, %343 : vector<8x64xf32>
    %c3_188 = arith.constant 3 : index
    %c17_189 = arith.constant 17 : index
    %345 = memref.load %arg5[%c3_188, %c17_189] : memref<4x27xf32, #tpu.memory_space<smem>>
    %346 = vector.broadcast %345 : f32 to vector<8x64xf32>
    %347 = arith.mulf %346, %332 : vector<8x64xf32>
    %348 = arith.addf %329, %347 : vector<8x64xf32>
    %c2_190 = arith.constant 2 : index
    %c0_191 = arith.constant 0 : index
    %349 = vector.load %arg8[%c2_190, %c0_191] : memref<10x82xf32, #tpu.memory_space<vmem>>, vector<8x64xf32>
    %350 = vector.broadcast %13 : vector<1x64xf32> to vector<8x64xf32>
    %351 = arith.mulf %349, %350 : vector<8x64xf32>
    %c0_192 = arith.constant 0 : index
    %c18_193 = arith.constant 18 : index
    %352 = memref.load %arg5[%c0_192, %c18_193] : memref<4x27xf32, #tpu.memory_space<smem>>
    %353 = vector.broadcast %352 : f32 to vector<8x64xf32>
    %354 = arith.mulf %353, %351 : vector<8x64xf32>
    %355 = arith.addf %336, %354 : vector<8x64xf32>
    %c1_194 = arith.constant 1 : index
    %c18_195 = arith.constant 18 : index
    %356 = memref.load %arg5[%c1_194, %c18_195] : memref<4x27xf32, #tpu.memory_space<smem>>
    %357 = vector.broadcast %356 : f32 to vector<8x64xf32>
    %358 = arith.mulf %357, %351 : vector<8x64xf32>
    %359 = arith.addf %340, %358 : vector<8x64xf32>
    %c2_196 = arith.constant 2 : index
    %c18_197 = arith.constant 18 : index
    %360 = memref.load %arg5[%c2_196, %c18_197] : memref<4x27xf32, #tpu.memory_space<smem>>
    %361 = vector.broadcast %360 : f32 to vector<8x64xf32>
    %362 = arith.mulf %361, %351 : vector<8x64xf32>
    %363 = arith.addf %344, %362 : vector<8x64xf32>
    %c3_198 = arith.constant 3 : index
    %c18_199 = arith.constant 18 : index
    %364 = memref.load %arg5[%c3_198, %c18_199] : memref<4x27xf32, #tpu.memory_space<smem>>
    %365 = vector.broadcast %364 : f32 to vector<8x64xf32>
    %366 = arith.mulf %365, %351 : vector<8x64xf32>
    %367 = arith.addf %348, %366 : vector<8x64xf32>
    %c2_200 = arith.constant 2 : index
    %c1_201 = arith.constant 1 : index
    %368 = vector.load %arg8[%c2_200, %c1_201] : memref<10x82xf32, #tpu.memory_space<vmem>>, vector<8x64xf32>
    %c0_202 = arith.constant 0 : index
    %c19 = arith.constant 19 : index
    %369 = memref.load %arg5[%c0_202, %c19] : memref<4x27xf32, #tpu.memory_space<smem>>
    %370 = vector.broadcast %369 : f32 to vector<8x64xf32>
    %371 = arith.mulf %370, %368 : vector<8x64xf32>
    %372 = arith.addf %355, %371 : vector<8x64xf32>
    %c1_203 = arith.constant 1 : index
    %c19_204 = arith.constant 19 : index
    %373 = memref.load %arg5[%c1_203, %c19_204] : memref<4x27xf32, #tpu.memory_space<smem>>
    %374 = vector.broadcast %373 : f32 to vector<8x64xf32>
    %375 = arith.mulf %374, %368 : vector<8x64xf32>
    %376 = arith.addf %359, %375 : vector<8x64xf32>
    %c2_205 = arith.constant 2 : index
    %c19_206 = arith.constant 19 : index
    %377 = memref.load %arg5[%c2_205, %c19_206] : memref<4x27xf32, #tpu.memory_space<smem>>
    %378 = vector.broadcast %377 : f32 to vector<8x64xf32>
    %379 = arith.mulf %378, %368 : vector<8x64xf32>
    %380 = arith.addf %363, %379 : vector<8x64xf32>
    %c3_207 = arith.constant 3 : index
    %c19_208 = arith.constant 19 : index
    %381 = memref.load %arg5[%c3_207, %c19_208] : memref<4x27xf32, #tpu.memory_space<smem>>
    %382 = vector.broadcast %381 : f32 to vector<8x64xf32>
    %383 = arith.mulf %382, %368 : vector<8x64xf32>
    %384 = arith.addf %367, %383 : vector<8x64xf32>
    %c2_209 = arith.constant 2 : index
    %c2_210 = arith.constant 2 : index
    %385 = vector.load %arg8[%c2_209, %c2_210] : memref<10x82xf32, #tpu.memory_space<vmem>>, vector<8x64xf32>
    %386 = vector.broadcast %14 : vector<1x64xf32> to vector<8x64xf32>
    %387 = arith.mulf %385, %386 : vector<8x64xf32>
    %c0_211 = arith.constant 0 : index
    %c20 = arith.constant 20 : index
    %388 = memref.load %arg5[%c0_211, %c20] : memref<4x27xf32, #tpu.memory_space<smem>>
    %389 = vector.broadcast %388 : f32 to vector<8x64xf32>
    %390 = arith.mulf %389, %387 : vector<8x64xf32>
    %391 = arith.addf %372, %390 : vector<8x64xf32>
    %c1_212 = arith.constant 1 : index
    %c20_213 = arith.constant 20 : index
    %392 = memref.load %arg5[%c1_212, %c20_213] : memref<4x27xf32, #tpu.memory_space<smem>>
    %393 = vector.broadcast %392 : f32 to vector<8x64xf32>
    %394 = arith.mulf %393, %387 : vector<8x64xf32>
    %395 = arith.addf %376, %394 : vector<8x64xf32>
    %c2_214 = arith.constant 2 : index
    %c20_215 = arith.constant 20 : index
    %396 = memref.load %arg5[%c2_214, %c20_215] : memref<4x27xf32, #tpu.memory_space<smem>>
    %397 = vector.broadcast %396 : f32 to vector<8x64xf32>
    %398 = arith.mulf %397, %387 : vector<8x64xf32>
    %399 = arith.addf %380, %398 : vector<8x64xf32>
    %c3_216 = arith.constant 3 : index
    %c20_217 = arith.constant 20 : index
    %400 = memref.load %arg5[%c3_216, %c20_217] : memref<4x27xf32, #tpu.memory_space<smem>>
    %401 = vector.broadcast %400 : f32 to vector<8x64xf32>
    %402 = arith.mulf %401, %387 : vector<8x64xf32>
    %403 = arith.addf %384, %402 : vector<8x64xf32>
    %c2_218 = arith.constant 2 : index
    %c8_219 = arith.constant 8 : index
    %404 = vector.load %arg8[%c2_218, %c8_219] : memref<10x82xf32, #tpu.memory_space<vmem>>, vector<8x64xf32>
    %405 = vector.broadcast %13 : vector<1x64xf32> to vector<8x64xf32>
    %406 = arith.mulf %404, %405 : vector<8x64xf32>
    %c0_220 = arith.constant 0 : index
    %c21 = arith.constant 21 : index
    %407 = memref.load %arg5[%c0_220, %c21] : memref<4x27xf32, #tpu.memory_space<smem>>
    %408 = vector.broadcast %407 : f32 to vector<8x64xf32>
    %409 = arith.mulf %408, %406 : vector<8x64xf32>
    %410 = arith.addf %391, %409 : vector<8x64xf32>
    %c1_221 = arith.constant 1 : index
    %c21_222 = arith.constant 21 : index
    %411 = memref.load %arg5[%c1_221, %c21_222] : memref<4x27xf32, #tpu.memory_space<smem>>
    %412 = vector.broadcast %411 : f32 to vector<8x64xf32>
    %413 = arith.mulf %412, %406 : vector<8x64xf32>
    %414 = arith.addf %395, %413 : vector<8x64xf32>
    %c2_223 = arith.constant 2 : index
    %c21_224 = arith.constant 21 : index
    %415 = memref.load %arg5[%c2_223, %c21_224] : memref<4x27xf32, #tpu.memory_space<smem>>
    %416 = vector.broadcast %415 : f32 to vector<8x64xf32>
    %417 = arith.mulf %416, %406 : vector<8x64xf32>
    %418 = arith.addf %399, %417 : vector<8x64xf32>
    %c3_225 = arith.constant 3 : index
    %c21_226 = arith.constant 21 : index
    %419 = memref.load %arg5[%c3_225, %c21_226] : memref<4x27xf32, #tpu.memory_space<smem>>
    %420 = vector.broadcast %419 : f32 to vector<8x64xf32>
    %421 = arith.mulf %420, %406 : vector<8x64xf32>
    %422 = arith.addf %403, %421 : vector<8x64xf32>
    %c2_227 = arith.constant 2 : index
    %c9_228 = arith.constant 9 : index
    %423 = vector.load %arg8[%c2_227, %c9_228] : memref<10x82xf32, #tpu.memory_space<vmem>>, vector<8x64xf32>
    %c0_229 = arith.constant 0 : index
    %c22 = arith.constant 22 : index
    %424 = memref.load %arg5[%c0_229, %c22] : memref<4x27xf32, #tpu.memory_space<smem>>
    %425 = vector.broadcast %424 : f32 to vector<8x64xf32>
    %426 = arith.mulf %425, %423 : vector<8x64xf32>
    %427 = arith.addf %410, %426 : vector<8x64xf32>
    %c1_230 = arith.constant 1 : index
    %c22_231 = arith.constant 22 : index
    %428 = memref.load %arg5[%c1_230, %c22_231] : memref<4x27xf32, #tpu.memory_space<smem>>
    %429 = vector.broadcast %428 : f32 to vector<8x64xf32>
    %430 = arith.mulf %429, %423 : vector<8x64xf32>
    %431 = arith.addf %414, %430 : vector<8x64xf32>
    %c2_232 = arith.constant 2 : index
    %c22_233 = arith.constant 22 : index
    %432 = memref.load %arg5[%c2_232, %c22_233] : memref<4x27xf32, #tpu.memory_space<smem>>
    %433 = vector.broadcast %432 : f32 to vector<8x64xf32>
    %434 = arith.mulf %433, %423 : vector<8x64xf32>
    %435 = arith.addf %418, %434 : vector<8x64xf32>
    %c3_234 = arith.constant 3 : index
    %c22_235 = arith.constant 22 : index
    %436 = memref.load %arg5[%c3_234, %c22_235] : memref<4x27xf32, #tpu.memory_space<smem>>
    %437 = vector.broadcast %436 : f32 to vector<8x64xf32>
    %438 = arith.mulf %437, %423 : vector<8x64xf32>
    %439 = arith.addf %422, %438 : vector<8x64xf32>
    %c2_236 = arith.constant 2 : index
    %c10_237 = arith.constant 10 : index
    %440 = vector.load %arg8[%c2_236, %c10_237] : memref<10x82xf32, #tpu.memory_space<vmem>>, vector<8x64xf32>
    %441 = vector.broadcast %14 : vector<1x64xf32> to vector<8x64xf32>
    %442 = arith.mulf %440, %441 : vector<8x64xf32>
    %c0_238 = arith.constant 0 : index
    %c23 = arith.constant 23 : index
    %443 = memref.load %arg5[%c0_238, %c23] : memref<4x27xf32, #tpu.memory_space<smem>>
    %444 = vector.broadcast %443 : f32 to vector<8x64xf32>
    %445 = arith.mulf %444, %442 : vector<8x64xf32>
    %446 = arith.addf %427, %445 : vector<8x64xf32>
    %c1_239 = arith.constant 1 : index
    %c23_240 = arith.constant 23 : index
    %447 = memref.load %arg5[%c1_239, %c23_240] : memref<4x27xf32, #tpu.memory_space<smem>>
    %448 = vector.broadcast %447 : f32 to vector<8x64xf32>
    %449 = arith.mulf %448, %442 : vector<8x64xf32>
    %450 = arith.addf %431, %449 : vector<8x64xf32>
    %c2_241 = arith.constant 2 : index
    %c23_242 = arith.constant 23 : index
    %451 = memref.load %arg5[%c2_241, %c23_242] : memref<4x27xf32, #tpu.memory_space<smem>>
    %452 = vector.broadcast %451 : f32 to vector<8x64xf32>
    %453 = arith.mulf %452, %442 : vector<8x64xf32>
    %454 = arith.addf %435, %453 : vector<8x64xf32>
    %c3_243 = arith.constant 3 : index
    %c23_244 = arith.constant 23 : index
    %455 = memref.load %arg5[%c3_243, %c23_244] : memref<4x27xf32, #tpu.memory_space<smem>>
    %456 = vector.broadcast %455 : f32 to vector<8x64xf32>
    %457 = arith.mulf %456, %442 : vector<8x64xf32>
    %458 = arith.addf %439, %457 : vector<8x64xf32>
    %c2_245 = arith.constant 2 : index
    %c16_246 = arith.constant 16 : index
    %459 = vector.load %arg8[%c2_245, %c16_246] : memref<10x82xf32, #tpu.memory_space<vmem>>, vector<8x64xf32>
    %460 = vector.broadcast %13 : vector<1x64xf32> to vector<8x64xf32>
    %461 = arith.mulf %459, %460 : vector<8x64xf32>
    %c0_247 = arith.constant 0 : index
    %c24 = arith.constant 24 : index
    %462 = memref.load %arg5[%c0_247, %c24] : memref<4x27xf32, #tpu.memory_space<smem>>
    %463 = vector.broadcast %462 : f32 to vector<8x64xf32>
    %464 = arith.mulf %463, %461 : vector<8x64xf32>
    %465 = arith.addf %446, %464 : vector<8x64xf32>
    %c1_248 = arith.constant 1 : index
    %c24_249 = arith.constant 24 : index
    %466 = memref.load %arg5[%c1_248, %c24_249] : memref<4x27xf32, #tpu.memory_space<smem>>
    %467 = vector.broadcast %466 : f32 to vector<8x64xf32>
    %468 = arith.mulf %467, %461 : vector<8x64xf32>
    %469 = arith.addf %450, %468 : vector<8x64xf32>
    %c2_250 = arith.constant 2 : index
    %c24_251 = arith.constant 24 : index
    %470 = memref.load %arg5[%c2_250, %c24_251] : memref<4x27xf32, #tpu.memory_space<smem>>
    %471 = vector.broadcast %470 : f32 to vector<8x64xf32>
    %472 = arith.mulf %471, %461 : vector<8x64xf32>
    %473 = arith.addf %454, %472 : vector<8x64xf32>
    %c3_252 = arith.constant 3 : index
    %c24_253 = arith.constant 24 : index
    %474 = memref.load %arg5[%c3_252, %c24_253] : memref<4x27xf32, #tpu.memory_space<smem>>
    %475 = vector.broadcast %474 : f32 to vector<8x64xf32>
    %476 = arith.mulf %475, %461 : vector<8x64xf32>
    %477 = arith.addf %458, %476 : vector<8x64xf32>
    %c2_254 = arith.constant 2 : index
    %c17_255 = arith.constant 17 : index
    %478 = vector.load %arg8[%c2_254, %c17_255] : memref<10x82xf32, #tpu.memory_space<vmem>>, vector<8x64xf32>
    %c0_256 = arith.constant 0 : index
    %c25 = arith.constant 25 : index
    %479 = memref.load %arg5[%c0_256, %c25] : memref<4x27xf32, #tpu.memory_space<smem>>
    %480 = vector.broadcast %479 : f32 to vector<8x64xf32>
    %481 = arith.mulf %480, %478 : vector<8x64xf32>
    %482 = arith.addf %465, %481 : vector<8x64xf32>
    %c1_257 = arith.constant 1 : index
    %c25_258 = arith.constant 25 : index
    %483 = memref.load %arg5[%c1_257, %c25_258] : memref<4x27xf32, #tpu.memory_space<smem>>
    %484 = vector.broadcast %483 : f32 to vector<8x64xf32>
    %485 = arith.mulf %484, %478 : vector<8x64xf32>
    %486 = arith.addf %469, %485 : vector<8x64xf32>
    %c2_259 = arith.constant 2 : index
    %c25_260 = arith.constant 25 : index
    %487 = memref.load %arg5[%c2_259, %c25_260] : memref<4x27xf32, #tpu.memory_space<smem>>
    %488 = vector.broadcast %487 : f32 to vector<8x64xf32>
    %489 = arith.mulf %488, %478 : vector<8x64xf32>
    %490 = arith.addf %473, %489 : vector<8x64xf32>
    %c3_261 = arith.constant 3 : index
    %c25_262 = arith.constant 25 : index
    %491 = memref.load %arg5[%c3_261, %c25_262] : memref<4x27xf32, #tpu.memory_space<smem>>
    %492 = vector.broadcast %491 : f32 to vector<8x64xf32>
    %493 = arith.mulf %492, %478 : vector<8x64xf32>
    %494 = arith.addf %477, %493 : vector<8x64xf32>
    %c2_263 = arith.constant 2 : index
    %c18_264 = arith.constant 18 : index
    %495 = vector.load %arg8[%c2_263, %c18_264] : memref<10x82xf32, #tpu.memory_space<vmem>>, vector<8x64xf32>
    %496 = vector.broadcast %14 : vector<1x64xf32> to vector<8x64xf32>
    %497 = arith.mulf %495, %496 : vector<8x64xf32>
    %c0_265 = arith.constant 0 : index
    %c26 = arith.constant 26 : index
    %498 = memref.load %arg5[%c0_265, %c26] : memref<4x27xf32, #tpu.memory_space<smem>>
    %499 = vector.broadcast %498 : f32 to vector<8x64xf32>
    %500 = arith.mulf %499, %497 : vector<8x64xf32>
    %501 = arith.addf %482, %500 : vector<8x64xf32>
    %c1_266 = arith.constant 1 : index
    %c26_267 = arith.constant 26 : index
    %502 = memref.load %arg5[%c1_266, %c26_267] : memref<4x27xf32, #tpu.memory_space<smem>>
    %503 = vector.broadcast %502 : f32 to vector<8x64xf32>
    %504 = arith.mulf %503, %497 : vector<8x64xf32>
    %505 = arith.addf %486, %504 : vector<8x64xf32>
    %c2_268 = arith.constant 2 : index
    %c26_269 = arith.constant 26 : index
    %506 = memref.load %arg5[%c2_268, %c26_269] : memref<4x27xf32, #tpu.memory_space<smem>>
    %507 = vector.broadcast %506 : f32 to vector<8x64xf32>
    %508 = arith.mulf %507, %497 : vector<8x64xf32>
    %509 = arith.addf %490, %508 : vector<8x64xf32>
    %c3_270 = arith.constant 3 : index
    %c26_271 = arith.constant 26 : index
    %510 = memref.load %arg5[%c3_270, %c26_271] : memref<4x27xf32, #tpu.memory_space<smem>>
    %511 = vector.broadcast %510 : f32 to vector<8x64xf32>
    %512 = arith.mulf %511, %497 : vector<8x64xf32>
    %513 = arith.addf %494, %512 : vector<8x64xf32>
    %c0_272 = arith.constant 0 : index
    %c0_273 = arith.constant 0 : index
    %c0_274 = arith.constant 0 : index
    %c0_275 = arith.constant 0 : index
    %514 = vector.load %arg6[%c0_272, %c0_273, %c0_274, %c0_275] : memref<1x4x8x64xf32, #tpu.memory_space<vmem>>, vector<1x1x8x64xf32>
    %515 = vector.shape_cast %514 : vector<1x1x8x64xf32> to vector<8x64xf32>
    %516 = vector.shape_cast %501 : vector<8x64xf32> to vector<1x1x8x64xf32>
    tpu.vector_store %arg6[%c0_272, %c0_273, %c0_274, %c0_275], %516 {strides = array<i32>} : memref<1x4x8x64xf32, #tpu.memory_space<vmem>>, vector<1x1x8x64xf32>,
    %517 = vector.shape_cast %501 : vector<8x64xf32> to vector<1x8x64xf32>
    %cst_276 = arith.constant dense<0.000000e+00> : vector<1xf32>
    %518 = vector.multi_reduction <add>, %517, %cst_276 [1, 2] : vector<1x8x64xf32> to vector<1xf32>
    %519 = vector.shape_cast %518 : vector<1xf32> to vector<1x1x1xf32>
    %520 = vector.extract %519[0, 0, 0] : f32 from vector<1x1x1xf32>
    %cst_277 = arith.constant 0.001953125 : f32
    %521 = arith.mulf %520, %cst_277 : f32
    %522 = vector.broadcast %521 : f32 to vector<8x64xf32>
    %523 = arith.subf %501, %522 : vector<8x64xf32>
    %524 = arith.mulf %523, %523 : vector<8x64xf32>
    %525 = vector.shape_cast %524 : vector<8x64xf32> to vector<1x8x64xf32>
    %cst_278 = arith.constant dense<0.000000e+00> : vector<1xf32>
    %526 = vector.multi_reduction <add>, %525, %cst_278 [1, 2] : vector<1x8x64xf32> to vector<1xf32>
    %527 = vector.shape_cast %526 : vector<1xf32> to vector<1x1x1xf32>
    %528 = vector.extract %527[0, 0, 0] : f32 from vector<1x1x1xf32>
    %c0_279 = arith.constant 0 : index
    %c1_280 = arith.constant 1 : index
    %c0_281 = arith.constant 0 : index
    %c0_282 = arith.constant 0 : index
    %529 = vector.load %arg6[%c0_279, %c1_280, %c0_281, %c0_282] : memref<1x4x8x64xf32, #tpu.memory_space<vmem>>, vector<1x1x8x64xf32>
    %530 = vector.shape_cast %529 : vector<1x1x8x64xf32> to vector<8x64xf32>
    %531 = vector.shape_cast %505 : vector<8x64xf32> to vector<1x1x8x64xf32>
    tpu.vector_store %arg6[%c0_279, %c1_280, %c0_281, %c0_282], %531 {strides = array<i32>} : memref<1x4x8x64xf32, #tpu.memory_space<vmem>>, vector<1x1x8x64xf32>,
    %532 = vector.shape_cast %505 : vector<8x64xf32> to vector<1x8x64xf32>
    %cst_283 = arith.constant dense<0.000000e+00> : vector<1xf32>
    %533 = vector.multi_reduction <add>, %532, %cst_283 [1, 2] : vector<1x8x64xf32> to vector<1xf32>
    %534 = vector.shape_cast %533 : vector<1xf32> to vector<1x1x1xf32>
    %535 = vector.extract %534[0, 0, 0] : f32 from vector<1x1x1xf32>
    %cst_284 = arith.constant 0.001953125 : f32
    %536 = arith.mulf %535, %cst_284 : f32
    %537 = vector.broadcast %536 : f32 to vector<8x64xf32>
    %538 = arith.subf %505, %537 : vector<8x64xf32>
    %539 = arith.mulf %538, %538 : vector<8x64xf32>
    %540 = vector.shape_cast %539 : vector<8x64xf32> to vector<1x8x64xf32>
    %cst_285 = arith.constant dense<0.000000e+00> : vector<1xf32>
    %541 = vector.multi_reduction <add>, %540, %cst_285 [1, 2] : vector<1x8x64xf32> to vector<1xf32>
    %542 = vector.shape_cast %541 : vector<1xf32> to vector<1x1x1xf32>
    %543 = vector.extract %542[0, 0, 0] : f32 from vector<1x1x1xf32>
    %c0_286 = arith.constant 0 : index
    %c2_287 = arith.constant 2 : index
    %c0_288 = arith.constant 0 : index
    %c0_289 = arith.constant 0 : index
    %544 = vector.load %arg6[%c0_286, %c2_287, %c0_288, %c0_289] : memref<1x4x8x64xf32, #tpu.memory_space<vmem>>, vector<1x1x8x64xf32>
    %545 = vector.shape_cast %544 : vector<1x1x8x64xf32> to vector<8x64xf32>
    %546 = vector.shape_cast %509 : vector<8x64xf32> to vector<1x1x8x64xf32>
    tpu.vector_store %arg6[%c0_286, %c2_287, %c0_288, %c0_289], %546 {strides = array<i32>} : memref<1x4x8x64xf32, #tpu.memory_space<vmem>>, vector<1x1x8x64xf32>,
    %547 = vector.shape_cast %509 : vector<8x64xf32> to vector<1x8x64xf32>
    %cst_290 = arith.constant dense<0.000000e+00> : vector<1xf32>
    %548 = vector.multi_reduction <add>, %547, %cst_290 [1, 2] : vector<1x8x64xf32> to vector<1xf32>
    %549 = vector.shape_cast %548 : vector<1xf32> to vector<1x1x1xf32>
    %550 = vector.extract %549[0, 0, 0] : f32 from vector<1x1x1xf32>
    %cst_291 = arith.constant 0.001953125 : f32
    %551 = arith.mulf %550, %cst_291 : f32
    %552 = vector.broadcast %551 : f32 to vector<8x64xf32>
    %553 = arith.subf %509, %552 : vector<8x64xf32>
    %554 = arith.mulf %553, %553 : vector<8x64xf32>
    %555 = vector.shape_cast %554 : vector<8x64xf32> to vector<1x8x64xf32>
    %cst_292 = arith.constant dense<0.000000e+00> : vector<1xf32>
    %556 = vector.multi_reduction <add>, %555, %cst_292 [1, 2] : vector<1x8x64xf32> to vector<1xf32>
    %557 = vector.shape_cast %556 : vector<1xf32> to vector<1x1x1xf32>
    %558 = vector.extract %557[0, 0, 0] : f32 from vector<1x1x1xf32>
    %c0_293 = arith.constant 0 : index
    %c3_294 = arith.constant 3 : index
    %c0_295 = arith.constant 0 : index
    %c0_296 = arith.constant 0 : index
    %559 = vector.load %arg6[%c0_293, %c3_294, %c0_295, %c0_296] : memref<1x4x8x64xf32, #tpu.memory_space<vmem>>, vector<1x1x8x64xf32>
    %560 = vector.shape_cast %559 : vector<1x1x8x64xf32> to vector<8x64xf32>
    %561 = vector.shape_cast %513 : vector<8x64xf32> to vector<1x1x8x64xf32>
    tpu.vector_store %arg6[%c0_293, %c3_294, %c0_295, %c0_296], %561 {strides = array<i32>} : memref<1x4x8x64xf32, #tpu.memory_space<vmem>>, vector<1x1x8x64xf32>,
    %562 = vector.shape_cast %513 : vector<8x64xf32> to vector<1x8x64xf32>
    %cst_297 = arith.constant dense<0.000000e+00> : vector<1xf32>
    %563 = vector.multi_reduction <add>, %562, %cst_297 [1, 2] : vector<1x8x64xf32> to vector<1xf32>
    %564 = vector.shape_cast %563 : vector<1xf32> to vector<1x1x1xf32>
    %565 = vector.extract %564[0, 0, 0] : f32 from vector<1x1x1xf32>
    %cst_298 = arith.constant 0.001953125 : f32
    %566 = arith.mulf %565, %cst_298 : f32
    %567 = vector.broadcast %566 : f32 to vector<8x64xf32>
    %568 = arith.subf %513, %567 : vector<8x64xf32>
    %569 = arith.mulf %568, %568 : vector<8x64xf32>
    %570 = vector.shape_cast %569 : vector<8x64xf32> to vector<1x8x64xf32>
    %cst_299 = arith.constant dense<0.000000e+00> : vector<1xf32>
    %571 = vector.multi_reduction <add>, %570, %cst_299 [1, 2] : vector<1x8x64xf32> to vector<1xf32>
    %572 = vector.shape_cast %571 : vector<1xf32> to vector<1x1x1xf32>
    %573 = vector.extract %572[0, 0, 0] : f32 from vector<1x1x1xf32>
    %574 = tpu.iota {dimensions = array<i32: 0>} : vector<8x128xi32>
    %575 = tpu.iota {dimensions = array<i32: 1>} : vector<8x128xi32>
    %cst_300 = arith.constant 0.000000e+00 : f32
    %576 = vector.broadcast %cst_300 : f32 to vector<8x128xf32>
    %c0_i32 = arith.constant 0 : i32
    %577 = vector.broadcast %c0_i32 : i32 to vector<8x128xi32>
    %578 = arith.cmpi eq, %574, %577 : vector<8x128xi32>
    %c0_i32_301 = arith.constant 0 : i32
    %579 = vector.broadcast %c0_i32_301 : i32 to vector<8x128xi32>
    %580 = arith.cmpi eq, %575, %579 : vector<8x128xi32>
    %581 = arith.andi %578, %580 : vector<8x128xi1>
    %582 = vector.broadcast %520 : f32 to vector<8x128xf32>
    %583 = arith.select %581, %582, %576 : vector<8x128xi1>, vector<8x128xf32>
    %c1_i32 = arith.constant 1 : i32
    %584 = vector.broadcast %c1_i32 : i32 to vector<8x128xi32>
    %585 = arith.cmpi eq, %574, %584 : vector<8x128xi32>
    %c0_i32_302 = arith.constant 0 : i32
    %586 = vector.broadcast %c0_i32_302 : i32 to vector<8x128xi32>
    %587 = arith.cmpi eq, %575, %586 : vector<8x128xi32>
    %588 = arith.andi %585, %587 : vector<8x128xi1>
    %589 = vector.broadcast %528 : f32 to vector<8x128xf32>
    %590 = arith.select %588, %589, %583 : vector<8x128xi1>, vector<8x128xf32>
    %c0_i32_303 = arith.constant 0 : i32
    %591 = vector.broadcast %c0_i32_303 : i32 to vector<8x128xi32>
    %592 = arith.cmpi eq, %574, %591 : vector<8x128xi32>
    %c1_i32_304 = arith.constant 1 : i32
    %593 = vector.broadcast %c1_i32_304 : i32 to vector<8x128xi32>
    %594 = arith.cmpi eq, %575, %593 : vector<8x128xi32>
    %595 = arith.andi %592, %594 : vector<8x128xi1>
    %596 = vector.broadcast %535 : f32 to vector<8x128xf32>
    %597 = arith.select %595, %596, %590 : vector<8x128xi1>, vector<8x128xf32>
    %c1_i32_305 = arith.constant 1 : i32
    %598 = vector.broadcast %c1_i32_305 : i32 to vector<8x128xi32>
    %599 = arith.cmpi eq, %574, %598 : vector<8x128xi32>
    %c1_i32_306 = arith.constant 1 : i32
    %600 = vector.broadcast %c1_i32_306 : i32 to vector<8x128xi32>
    %601 = arith.cmpi eq, %575, %600 : vector<8x128xi32>
    %602 = arith.andi %599, %601 : vector<8x128xi1>
    %603 = vector.broadcast %543 : f32 to vector<8x128xf32>
    %604 = arith.select %602, %603, %597 : vector<8x128xi1>, vector<8x128xf32>
    %c0_i32_307 = arith.constant 0 : i32
    %605 = vector.broadcast %c0_i32_307 : i32 to vector<8x128xi32>
    %606 = arith.cmpi eq, %574, %605 : vector<8x128xi32>
    %c2_i32 = arith.constant 2 : i32
    %607 = vector.broadcast %c2_i32 : i32 to vector<8x128xi32>
    %608 = arith.cmpi eq, %575, %607 : vector<8x128xi32>
    %609 = arith.andi %606, %608 : vector<8x128xi1>
    %610 = vector.broadcast %550 : f32 to vector<8x128xf32>
    %611 = arith.select %609, %610, %604 : vector<8x128xi1>, vector<8x128xf32>
    %c1_i32_308 = arith.constant 1 : i32
    %612 = vector.broadcast %c1_i32_308 : i32 to vector<8x128xi32>
    %613 = arith.cmpi eq, %574, %612 : vector<8x128xi32>
    %c2_i32_309 = arith.constant 2 : i32
    %614 = vector.broadcast %c2_i32_309 : i32 to vector<8x128xi32>
    %615 = arith.cmpi eq, %575, %614 : vector<8x128xi32>
    %616 = arith.andi %613, %615 : vector<8x128xi1>
    %617 = vector.broadcast %558 : f32 to vector<8x128xf32>
    %618 = arith.select %616, %617, %611 : vector<8x128xi1>, vector<8x128xf32>
    %c0_i32_310 = arith.constant 0 : i32
    %619 = vector.broadcast %c0_i32_310 : i32 to vector<8x128xi32>
    %620 = arith.cmpi eq, %574, %619 : vector<8x128xi32>
    %c3_i32 = arith.constant 3 : i32
    %621 = vector.broadcast %c3_i32 : i32 to vector<8x128xi32>
    %622 = arith.cmpi eq, %575, %621 : vector<8x128xi32>
    %623 = arith.andi %620, %622 : vector<8x128xi1>
    %624 = vector.broadcast %565 : f32 to vector<8x128xf32>
    %625 = arith.select %623, %624, %618 : vector<8x128xi1>, vector<8x128xf32>
    %c1_i32_311 = arith.constant 1 : i32
    %626 = vector.broadcast %c1_i32_311 : i32 to vector<8x128xi32>
    %627 = arith.cmpi eq, %574, %626 : vector<8x128xi32>
    %c3_i32_312 = arith.constant 3 : i32
    %628 = vector.broadcast %c3_i32_312 : i32 to vector<8x128xi32>
    %629 = arith.cmpi eq, %575, %628 : vector<8x128xi32>
    %630 = arith.andi %627, %629 : vector<8x128xi1>
    %631 = vector.broadcast %573 : f32 to vector<8x128xf32>
    %632 = arith.select %630, %631, %625 : vector<8x128xi1>, vector<8x128xf32>
    %c0_313 = arith.constant 0 : index
    %c0_314 = arith.constant 0 : index
    %c0_315 = arith.constant 0 : index
    %c0_316 = arith.constant 0 : index
    %633 = vector.load %arg7[%c0_313, %c0_314, %c0_315, %c0_316] : memref<1x1x8x128xf32, #tpu.memory_space<vmem>>, vector<1x1x8x128xf32>
    %634 = vector.shape_cast %633 : vector<1x1x8x128xf32> to vector<8x128xf32>
    %635 = vector.shape_cast %632 : vector<8x128xf32> to vector<1x1x8x128xf32>
    tpu.vector_store %arg7[%c0_313, %c0_314, %c0_315, %c0_316], %635 {strides = array<i32>} : memref<1x1x8x128xf32, #tpu.memory_space<vmem>>, vector<1x1x8x128xf32>,
    return
  }
  func.func @transform_0(%arg0: i32, %arg1: i32) -> (i32, i32, i32) {
    %c0_i32 = arith.constant 0 : i32
    %c0_i32_0 = arith.constant 0 : i32
    return %arg0, %arg1, %c0_i32 : i32, i32, i32
  }
  func.func @transform_1(%arg0: i32, %arg1: i32) -> (i32, i32, i32, i32) {
    %c0_i32 = arith.constant 0 : i32
    %c0_i32_0 = arith.constant 0 : i32
    %c0_i32_1 = arith.constant 0 : i32
    return %arg0, %arg1, %c0_i32, %c0_i32_0 : i32, i32, i32, i32
  }
  func.func @transform_2(%arg0: i32, %arg1: i32) -> (i32, i32) {
    %c0_i32 = arith.constant 0 : i32
    %c0_i32_0 = arith.constant 0 : i32
    %c0_i32_1 = arith.constant 0 : i32
    return %c0_i32, %c0_i32_0 : i32, i32
  }
  func.func @transform_3(%arg0: i32, %arg1: i32) -> (i32, i32) {
    %c0_i32 = arith.constant 0 : i32
    %c0_i32_0 = arith.constant 0 : i32
    %c0_i32_1 = arith.constant 0 : i32
    return %c0_i32, %c0_i32_0 : i32, i32
  }
  func.func @transform_4(%arg0: i32, %arg1: i32) -> (i32, i32, i32, i32) {
    %c0_i32 = arith.constant 0 : i32
    %c0_i32_0 = arith.constant 0 : i32
    %c0_i32_1 = arith.constant 0 : i32
    return %arg0, %c0_i32, %arg1, %c0_i32_0 : i32, i32, i32, i32
  }
  func.func @transform_5(%arg0: i32, %arg1: i32) -> (i32, i32, i32, i32) {
    %c0_i32 = arith.constant 0 : i32
    %c0_i32_0 = arith.constant 0 : i32
    %c0_i32_1 = arith.constant 0 : i32
    return %arg0, %arg1, %c0_i32, %c0_i32_0 : i32, i32, i32, i32
  }
}

</mosaic_0001>

<llo_original>
// kernel: squeeze.3
$region0: #{squeeze.3}
  %s0 = inlined_call_operand.vmem [shape: f32[2,1,8,8,8], index: 0, kind: input, shape index: {}]
  %s1 = inlined_call_operand.vmem [shape: f32[2,8,64], index: 1, kind: output, shape index: {}]
  %v2 = vld [vmem:[%s0] ss:$8 sm:$0xf]
  %v3 = vld [vmem:[%s0] ss:$8 sm:$0xf0]
  %vm4 = vcmask 1047556
  %v5 = vsel %vm4, %v3, %v2
  %vm6 = vcmask 64512
  %7 = vst.msk [vmem:[%s1] sm:$0xff] %vm6, %v5
  %s8 = scalar_lea.vmem %s0, 64
  %v9 = vld [vmem:[%s8] ss:$8 sm:$0xf]
  %s10 = scalar_lea.vmem %s0, 64
  %v11 = vld [vmem:[%s10] ss:$8 sm:$0xf0]
  %vm12 = vcmask 1047556
  %v13 = vsel %vm12, %v11, %v9
  %vm14 = vcmask 64512
  %s15 = scalar_lea.vmem %s1, 8
  %16 = vst.msk [vmem:[%s15] sm:$0xff] %vm14, %v13
  %s17 = scalar_lea.vmem %s0, 7
  %v18 = vld [vmem:[%s17] ss:$8 sm:$0xf]
  %s19 = scalar_lea.vmem %s0, 7
  %v20 = vld [vmem:[%s19] ss:$8 sm:$0xf0]
  %vm21 = vcmask 1047556
  %v22 = vsel %vm21, %v20, %v18
  %23 = vrot.lane.b32.xlu0 %v22, 56
  %v24 = vpop.permute.xlu0 %23
  %vm25 = vcmask 523712
  %26 = vst.msk [vmem:[%s1] sm:$0xff] %vm25, %v24
  %s27 = scalar_lea.vmem %s0, 71
  %v28 = vld [vmem:[%s27] ss:$8 sm:$0xf]
  %s29 = scalar_lea.vmem %s0, 71
  %v30 = vld [vmem:[%s29] ss:$8 sm:$0xf0]
  %vm31 = vcmask 1047556
  %v32 = vsel %vm31, %v30, %v28
  %33 = vrot.lane.b32.xlu0 %v32, 56
  %v34 = vpop.permute.xlu0 %33
  %vm35 = vcmask 523712
  %s36 = scalar_lea.vmem %s1, 8
  %37 = vst.msk [vmem:[%s36] sm:$0xff] %vm35, %v34
  %s38 = scalar_lea.vmem %s0, 6
  %v39 = vld [vmem:[%s38] ss:$8 sm:$0xf]
  %s40 = scalar_lea.vmem %s0, 6
  %v41 = vld [vmem:[%s40] ss:$8 sm:$0xf0]
  %vm42 = vcmask 1047556
  %v43 = vsel %vm42, %v41, %v39
  %44 = vrot.lane.b32.xlu0 %v43, 48
  %v45 = vpop.permute.xlu0 %44
  %vm46 = vcmask 458112
  %47 = vst.msk [vmem:[%s1] sm:$0xff] %vm46, %v45
  %s48 = scalar_lea.vmem %s0, 70
  %v49 = vld [vmem:[%s48] ss:$8 sm:$0xf]
  %s50 = scalar_lea.vmem %s0, 70
  %v51 = vld [vmem:[%s50] ss:$8 sm:$0xf0]
  %vm52 = vcmask 1047556
  %v53 = vsel %vm52, %v51, %v49
  %54 = vrot.lane.b32.xlu0 %v53, 48
  %v55 = vpop.permute.xlu0 %54
  %vm56 = vcmask 458112
  %s57 = scalar_lea.vmem %s1, 8
  %58 = vst.msk [vmem:[%s57] sm:$0xff] %vm56, %v55
  %s59 = scalar_lea.vmem %s0, 5
  %v60 = vld [vmem:[%s59] ss:$8 sm:$0xf]
  %s61 = scalar_lea.vmem %s0, 5
  %v62 = vld [vmem:[%s61] ss:$8 sm:$0xf0]
  %vm63 = vcmask 1047556
  %v64 = vsel %vm63, %v62, %v60
  %65 = vrot.lane.b32.xlu0 %v64, 40
  %v66 = vpop.permute.xlu0 %65
  %vm67 = vcmask 392512
  %68 = vst.msk [vmem:[%s1] sm:$0xff] %vm67, %v66
  %s69 = scalar_lea.vmem %s0, 69
  %v70 = vld [vmem:[%s69] ss:$8 sm:$0xf]
  %s71 = scalar_lea.vmem %s0, 69
  %v72 = vld [vmem:[%s71] ss:$8 sm:$0xf0]
  %vm73 = vcmask 1047556
  %v74 = vsel %vm73, %v72, %v70
  %75 = vrot.lane.b32.xlu0 %v74, 40
  %v76 = vpop.permute.xlu0 %75
  %vm77 = vcmask 392512
  %s78 = scalar_lea.vmem %s1, 8
  %79 = vst.msk [vmem:[%s78] sm:$0xff] %vm77, %v76
  %s80 = scalar_lea.vmem %s0, 4
  %v81 = vld [vmem:[%s80] ss:$8 sm:$0xf]
  %s82 = scalar_lea.vmem %s0, 4
  %v83 = vld [vmem:[%s82] ss:$8 sm:$0xf0]
  %vm84 = vcmask 1047556
  %v85 = vsel %vm84, %v83, %v81
  %86 = vrot.lane.b32.xlu0 %v85, 32
  %v87 = vpop.permute.xlu0 %86
  %vm88 = vcmask 326912
  %89 = vst.msk [vmem:[%s1] sm:$0xff] %vm88, %v87
  %s90 = scalar_lea.vmem %s0, 68
  %v91 = vld [vmem:[%s90] ss:$8 sm:$0xf]
  %s92 = scalar_lea.vmem %s0, 68
  %v93 = vld [vmem:[%s92] ss:$8 sm:$0xf0]
  %vm94 = vcmask 1047556
  %v95 = vsel %vm94, %v93, %v91
  %96 = vrot.lane.b32.xlu0 %v95, 32
  %v97 = vpop.permute.xlu0 %96
  %vm98 = vcmask 326912
  %s99 = scalar_lea.vmem %s1, 8
  %100 = vst.msk [vmem:[%s99] sm:$0xff] %vm98, %v97
  %s101 = scalar_lea.vmem %s0, 3
  %v102 = vld [vmem:[%s101] ss:$8 sm:$0xf]
  %s103 = scalar_lea.vmem %s0, 3
  %v104 = vld [vmem:[%s103] ss:$8 sm:$0xf0]
  %vm105 = vcmask 1047556
  %v106 = vsel %vm105, %v104, %v102
  %107 = vrot.lane.b32.xlu0 %v106, 24
  %v108 = vpop.permute.xlu0 %107
  %vm109 = vcmask 261312
  %110 = vst.msk [vmem:[%s1] sm:$0xff] %vm109, %v108
  %s111 = scalar_lea.vmem %s0, 67
  %v112 = vld [vmem:[%s111] ss:$8 sm:$0xf]
  %s113 = scalar_lea.vmem %s0, 67
  %v114 = vld [vmem:[%s113] ss:$8 sm:$0xf0]
  %vm115 = vcmask 1047556
  %v116 = vsel %vm115, %v114, %v112
  %117 = vrot.lane.b32.xlu0 %v116, 24
  %v118 = vpop.permute.xlu0 %117
  %vm119 = vcmask 261312
  %s120 = scalar_lea.vmem %s1, 8
  %121 = vst.msk [vmem:[%s120] sm:$0xff] %vm119, %v118
  %s122 = scalar_lea.vmem %s0, 2
  %v123 = vld [vmem:[%s122] ss:$8 sm:$0xf]
  %s124 = scalar_lea.vmem %s0, 2
  %v125 = vld [vmem:[%s124] ss:$8 sm:$0xf0]
  %vm126 = vcmask 1047556
  %v127 = vsel %vm126, %v125, %v123
  %128 = vrot.lane.b32.xlu0 %v127, 16
  %v129 = vpop.permute.xlu0 %128
  %vm130 = vcmask 195712
  %131 = vst.msk [vmem:[%s1] sm:$0xff] %vm130, %v129
  %s132 = scalar_lea.vmem %s0, 66
  %v133 = vld [vmem:[%s132] ss:$8 sm:$0xf]
  %s134 = scalar_lea.vmem %s0, 66
  %v135 = vld [vmem:[%s134] ss:$8 sm:$0xf0]
  %vm136 = vcmask 1047556
  %v137 = vsel %vm136, %v135, %v133
  %138 = vrot.lane.b32.xlu0 %v137, 16
  %v139 = vpop.permute.xlu0 %138
  %vm140 = vcmask 195712
  %s141 = scalar_lea.vmem %s1, 8
  %142 = vst.msk [vmem:[%s141] sm:$0xff] %vm140, %v139
  %s143 = scalar_lea.vmem %s0, 1
  %v144 = vld [vmem:[%s143] ss:$8 sm:$0xf]
  %s145 = scalar_lea.vmem %s0, 1
  %v146 = vld [vmem:[%s145] ss:$8 sm:$0xf0]
  %vm147 = vcmask 1047556
  %v148 = vsel %vm147, %v146, %v144
  %149 = vrot.lane.b32.xlu0 %v148, 8
  %v150 = vpop.permute.xlu0 %149
  %vm151 = vcmask 130112
  %152 = vst.msk [vmem:[%s1] sm:$0xff] %vm151, %v150
  %s153 = scalar_lea.vmem %s0, 65
  %v154 = vld [vmem:[%s153] ss:$8 sm:$0xf]
  %s155 = scalar_lea.vmem %s0, 65
  %v156 = vld [vmem:[%s155] ss:$8 sm:$0xf0]
  %vm157 = vcmask 1047556
  %v158 = vsel %vm157, %v156, %v154
  %159 = vrot.lane.b32.xlu0 %v158, 8
  %v160 = vpop.permute.xlu0 %159
  %vm161 = vcmask 130112
  %s162 = scalar_lea.vmem %s1, 8
  %163 = vst.msk [vmem:[%s162] sm:$0xff] %vm161, %v160

// kernel: attention_module.3
$region0: #{attention_module.3}
  #allocation0 [shape = 'u32[]', space=smem, size = 0x4, offset = 0x4, fixed_abs, tag = 'smem constant byte address 0x4 - core index']
  #allocation1 [shape = 'u32[144,128]{1,0:T(1,128)}', space=vmem, size = 0x12000, scoped, tag = 'internal scratch']
  %s0 = inlined_call_operand.vmem [shape: f32[2,4,8,64], index: 0, kind: input, shape index: {}]
  %s1 = inlined_call_operand.vmem [shape: f32[4], index: 1, kind: input, shape index: {}]
  %s2 = inlined_call_operand.vmem [shape: f32[4], index: 2, kind: input, shape index: {}]
  %s3 = inlined_call_operand.vmem [shape: f32[2,4,8,64], index: 3, kind: output, shape index: {}]
  %s4 = sld [smem:[#allocation0]]
  $region53: #{attention_module.3} parent=0
    _
  %s6 = ssub.s32 1, %s4
  %s7 = scalar_select 0, %s6, %s4
  $region1: #{attention_module.3} parent=0
    #allocation2 [shape = 'u8[512]{0}', space=smem, size = 0x200, scoped, tag = 'input window, operand 1, single buffered']
    #allocation3 [shape = 's32[2]{0}', space=sflag, size = 0x8, scoped, tag = 'scoped memory for attention_module.3']
    #allocation4 [shape = 'u8[512]{0}', space=smem, size = 0x200, scoped, tag = 'input window, operand 2, single buffered']
    #allocation5 [shape = 's32[1]{0}', space=sflag, size = 0x4, scoped, tag = 'scoped memory for attention_module.3']
    %8 = vsyncpa [#allocation3], 0
    %9 = vsyncpa [#allocation5], 0
    loop: start=0, step=1, limit=4
    $region2: #{attention_module.3} parent=1 // loop_pre_header
      _
    $region3: #{attention_module.3} parent=1 // loop_header
      %s11 = sphi 0, %s15
      %p12 = scmp.ge.s32.totalorder %s11, 4
      %s18 = sphi 0, %s30
      %s19 = sphi 0, %s26
      %s20 = sphi 0, %s18
      %s21 = sphi 0, %s19
      %s22 = sphi 0, %s20
      %s23 = sphi 0, %s21
      %s35 = sphi 0, %s37
      %s38 = sphi 0, %s35
      %s39 = sphi 0, %s38
      %s55 = sphi 0, %s39
      %s59 = sphi 0, %s59
      %s61 = sphi 0, %s59
      %s62 = sphi 0, %s61
      %s76 = sphi 0, %s62
      %s80 = sphi 0, %s80
      %s82 = sphi 0, %s80
      %s83 = sphi 0, %s82
      %s97 = sphi 0, %s83
      %s105 = sphi 0, %s107
      %s108 = sphi 0, %s105
      %s109 = sphi 0, %s108
      %s125 = sphi 0, %s109
    $region4: #{attention_module.3} parent=1 // loop_header_branch
      %14 = sbr.rel (%p12) target = $region8
    $region5: #{attention_module.3} parent=1 // loop_body
      %s16 = ssub.s32 %s11, 1
      %s17 = ssub.s32 %s11, 2
      %s24 = sadd.s32 1, %s19
      %p25 = scmp.ge.s32.totalorder %s24, 1
      %s26 = scalar_select %p25, 0, %s24
      %s27 = sadd.s32 1, %s18
      %s28 = scalar_select %p25, %s27, %s18
      %p29 = scmp.ge.s32.totalorder %s28, 2
      %s30 = scalar_select %p29, 0, %s28
      %s31 = ssub.s32 %s18, %s30
      %s32 = ssub.s32 %s19, %s26
      %s33 = sor.u32 %s31, %s32
      %p34 = scmp.eq.s32.totalorder %s33, 0
      %s36 = sadd.s32 %s35, 1
      %s37 = scalar_select %p34, %s35, %s36
      %p40 = pneg %p34
      %p41 = scmp.eq.s32.totalorder %s11, 1
      %p42 = por %p40, %p41
      %p43 = scmp.ne.s32.totalorder %s35, %s38
      %p44 = scmp.eq.s32.totalorder %s11, 0
      %p45 = por %p43, %p44
      %p46 = scmp.ne.s32.totalorder %s35, %s38
      %p47 = scmp.eq.s32.totalorder %s16, 1
      %p48 = por %p46, %p47
      %p49 = scmp.ne.s32.totalorder %s38, %s39
      %p50 = scmp.eq.s32.totalorder %s16, 0
      %p51 = por %p49, %p50
      %p52 = scmp.ne.s32.totalorder %s38, %s39
      %p53 = scmp.eq.s32.totalorder %s17, 1
      %p54 = por %p52, %p53
      %p56 = scmp.ne.s32.totalorder %s39, %s55
      %p57 = scmp.eq.s32.totalorder %s17, 0
      %p58 = por %p56, %p57
      %s60 = sadd.s32 %s59, 1
      %p63 = scmp.eq.s32.totalorder %s11, 1
      %p64 = scmp.ne.s32.totalorder %s59, %s61
      %p65 = scmp.eq.s32.totalorder %s11, 0
      %p66 = por %p64, %p65
      %p67 = scmp.ne.s32.totalorder %s59, %s61
      %p68 = scmp.eq.s32.totalorder %s16, 1
      %p69 = por %p67, %p68
      %p70 = scmp.ne.s32.totalorder %s61, %s62
      %p71 = scmp.eq.s32.totalorder %s16, 0
      %p72 = por %p70, %p71
      %p73 = scmp.ne.s32.totalorder %s61, %s62
      %p74 = scmp.eq.s32.totalorder %s17, 1
      %p75 = por %p73, %p74
      %p77 = scmp.ne.s32.totalorder %s62, %s76
      %p78 = scmp.eq.s32.totalorder %s17, 0
      %p79 = por %p77, %p78
      %s81 = sadd.s32 %s80, 1
      %p84 = scmp.eq.s32.totalorder %s11, 1
      %p85 = scmp.ne.s32.totalorder %s80, %s82
      %p86 = scmp.eq.s32.totalorder %s11, 0
      %p87 = por %p85, %p86
      %p88 = scmp.ne.s32.totalorder %s80, %s82
      %p89 = scmp.eq.s32.totalorder %s16, 1
      %p90 = por %p88, %p89
      %p91 = scmp.ne.s32.totalorder %s82, %s83
      %p92 = scmp.eq.s32.totalorder %s16, 0
      %p93 = por %p91, %p92
      %p94 = scmp.ne.s32.totalorder %s82, %s83
      %p95 = scmp.eq.s32.totalorder %s17, 1
      %p96 = por %p94, %p95
      %p98 = scmp.ne.s32.totalorder %s83, %s97
      %p99 = scmp.eq.s32.totalorder %s17, 0
      %p100 = por %p98, %p99
      %s101 = ssub.s32 %s18, %s30
      %s102 = ssub.s32 %s19, %s26
      %s103 = sor.u32 %s101, %s102
      %p104 = scmp.eq.s32.totalorder %s103, 0
      %s106 = sadd.s32 %s105, 1
      %s107 = scalar_select %p104, %s105, %s106
      %p110 = pneg %p104
      %p111 = scmp.eq.s32.totalorder %s11, 1
      %p112 = por %p110, %p111
      %p113 = scmp.ne.s32.totalorder %s105, %s108
      %p114 = scmp.eq.s32.totalorder %s11, 0
      %p115 = por %p113, %p114
      %p116 = scmp.ne.s32.totalorder %s105, %s108
      %p117 = scmp.eq.s32.totalorder %s16, 1
      %p118 = por %p116, %p117
      %p119 = scmp.ne.s32.totalorder %s108, %s109
      %p120 = scmp.eq.s32.totalorder %s16, 0
      %p121 = por %p119, %p120
      %p122 = scmp.ne.s32.totalorder %s108, %s109
      %p123 = scmp.eq.s32.totalorder %s17, 1
      %p124 = por %p122, %p123
      %p126 = scmp.ne.s32.totalorder %s109, %s125
      %p127 = scmp.eq.s32.totalorder %s17, 0
      %p128 = por %p126, %p127
      %p129 = scmp.le.s32.totalorder 1, %s11
      %p130 = scmp.lt.s32.totalorder %s11, 3
      %p131 = pnand %p129, %p130
      %p132 = pneg %p131
      // Predicated region
      $region9: #{attention_module.3} parent=5 // pred_check
        _
      $region10: #{attention_module.3} parent=5 // pred_check_branch
        %134 = sbr.rel (%p131) target = $region12
      $region11: #{attention_module.3} parent=5 // pred_region
        %s135 = ssub.s32 %s11, 1
        // Predicated region
        $region13: #{attention_module.3} parent=11 // pred_check
          %p136 = pneg %p72
        $region14: #{attention_module.3} parent=11 // pred_check_branch
          %138 = sbr.rel (%p136) target = $region16
        $region15: #{attention_module.3} parent=11 // pred_region
          %s140 = ssub.s32 16, 16
          %141 = vsyncadd [#allocation3], %s140
          %s143 = sshll.u32 %s1, 4
          %s144 = int_to_ptr.vmem [resolvable:$true] %s143
          %146 = dma.vmem_to_smem %s144, 16, [#allocation2], [#allocation3]
        $region16: #{attention_module.3} parent=11 // pred_fallthru
          _
        // Predicated region
        $region17: #{attention_module.3} parent=11 // pred_check
          %p147 = pneg %p93
        $region18: #{attention_module.3} parent=11 // pred_check_branch
          %149 = sbr.rel (%p147) target = $region20
        $region19: #{attention_module.3} parent=11 // pred_region
          %s151 = ssub.s32 16, 16
          %152 = vsyncadd [#allocation5], %s151
          %s154 = sshll.u32 %s2, 4
          %s155 = int_to_ptr.vmem [resolvable:$true] %s154
          %157 = dma.vmem_to_smem %s155, 16, [#allocation4], [#allocation5]
        $region20: #{attention_module.3} parent=11 // pred_fallthru
          _
      $region12: #{attention_module.3} parent=5 // pred_fallthru
        _
      %p158 = scmp.lt.s32.totalorder %s11, 2
      // Predicated region
      $region21: #{attention_module.3} parent=5 // pred_check
        %p159 = pneg %p158
      $region22: #{attention_module.3} parent=5 // pred_check_branch
        %161 = sbr.rel (%p159) target = $region24
      $region23: #{attention_module.3} parent=5 // pred_region
        // Predicated region
        $region25: #{attention_module.3} parent=23 // pred_check
          %p162 = pneg %p45
        $region26: #{attention_module.3} parent=23 // pred_check_branch
          %164 = sbr.rel (%p162) target = $region28
        $region27: #{attention_module.3} parent=23 // pred_region
          %p165 = scmp.lt.s32.totalorder %s18, 1
          %s166 = scalar_select %p165, %s18, 1
          %p167 = scmp.lt.s32.totalorder %s19, 0
          %s168 = scalar_select %p167, %s19, 0
          %s169 = smul.addr %s166, 4
          %s170 = sadd.s32 %s168, %s169
          %s171 = smul.addr %s170, 8
          %s172 = scalar_lea.vmem %s0, %s171
        $region28: #{attention_module.3} parent=23 // pred_fallthru
          _
      $region24: #{attention_module.3} parent=5 // pred_fallthru
        _
      %p173 = scmp.le.s32.totalorder 1, %s11
      %p174 = scmp.lt.s32.totalorder %s11, 3
      %p175 = pnand %p173, %p174
      %p176 = pneg %p175
      // Predicated region
      $region29: #{attention_module.3} parent=5 // pred_check
        _
      $region30: #{attention_module.3} parent=5 // pred_check_branch
        %178 = sbr.rel (%p175) target = $region32
      $region31: #{attention_module.3} parent=5 // pred_region
        %s179 = ssub.s32 %s11, 1
        // Predicated region
        $region33: #{attention_module.3} parent=31 // pred_check
          %p180 = pneg %p72
        $region34: #{attention_module.3} parent=31 // pred_check_branch
          %182 = sbr.rel (%p180) target = $region36
        $region35: #{attention_module.3} parent=31 // pred_region
          %183 = dma.done [#allocation3], 16
        $region36: #{attention_module.3} parent=31 // pred_fallthru
          _
        // Predicated region
        $region37: #{attention_module.3} parent=31 // pred_check
          %p184 = pneg %p93
        $region38: #{attention_module.3} parent=31 // pred_check_branch
          %186 = sbr.rel (%p184) target = $region40
        $region39: #{attention_module.3} parent=31 // pred_region
          %187 = dma.done [#allocation5], 16
        $region40: #{attention_module.3} parent=31 // pred_fallthru
          _
        %188 = sfence
        %p189 = scmp.lt.s32.totalorder %s20, 1
        %s190 = scalar_select %p189, %s20, 1
        %p191 = scmp.lt.s32.totalorder %s21, 0
        %s192 = scalar_select %p191, %s21, 0
        %s193 = smul.addr %s190, 4
        %s194 = sadd.s32 %s192, %s193
        %s195 = smul.addr %s194, 8
        %s196 = scalar_lea.vmem %s0, %s195
        %p197 = pneg %p51
        %p198 = pneg %p48
        %p199 = pneg %p72
        %p200 = pneg %p69
        %p201 = pneg %p93
        %p202 = pneg %p90
        %p203 = pneg %p121
        %p204 = pneg %p118
        %p205 = scmp.lt.s32.totalorder %s20, 1
        %s206 = scalar_select %p205, %s20, 1
        %p207 = scmp.lt.s32.totalorder %s21, 0
        %s208 = scalar_select %p207, %s21, 0
        %s209 = smul.addr %s206, 4
        %s210 = sadd.s32 %s208, %s209
        %s211 = smul.addr %s210, 8
        %s212 = scalar_lea.vmem %s3, %s211
        %p213 = scmp.lt.s32.totalorder %s20, 1
        %s214 = scalar_select %p213, %s20, 1
        %p215 = scmp.lt.s32.totalorder %s21, 0
        %s216 = scalar_select %p215, %s21, 0
        %s217 = smul.addr %s214, 4
        %s218 = sadd.s32 %s216, %s217
        %s219 = smul.addr %s218, 8
        %s220 = scalar_lea.vmem %s0, %s219
        %p221 = scmp.lt.s32.totalorder %s20, 1
        %s222 = scalar_select %p221, %s20, 1
        %p223 = scmp.lt.s32.totalorder %s21, 0
        %s224 = scalar_select %p223, %s21, 0
        %s225 = smul.addr %s222, 4
        %s226 = sadd.s32 %s224, %s225
        %s227 = smul.addr %s226, 8
        %s228 = scalar_lea.vmem %s3, %s227
        %v229 = vld [vmem:[%s220] sm:$0xff]
        %s230 = sld [smem:[#allocation2]]
        %v231 = vstv %s230
        %v232 = vmul.f32 %v229, %v231
        %s233 = sld [smem:[#allocation4]]
        %v234 = vstv %s233
        %v235 = vadd.f32 %v232, %v234
        %v236 = vmul.f32 %v235, 0.5
        %v237 = vtanh.pop %v236
        %v238 = vmul.f32 %v237, 0.5
        %v239 = vadd.f32 %v238, 0.5
        %vm240 = vcmask 523264
        %241 = vst.msk [vmem:[%s228] sm:$0xff] %vm240, %v239
        %s242 = scalar_lea.vmem %s220, 8
        %v243 = vld [vmem:[%s242] sm:$0xff]
        %s244 = sld [smem:[#allocation2 + $0x1]]
        %v245 = vstv %s244
        %v246 = vmul.f32 %v243, %v245
        %s247 = sld [smem:[#allocation4 + $0x1]]
        %v248 = vstv %s247
        %v249 = vadd.f32 %v246, %v248
        %v250 = vmul.f32 %v249, 0.5
        %v251 = vtanh.pop %v250
        %v252 = vmul.f32 %v251, 0.5
        %v253 = vadd.f32 %v252, 0.5
        %s254 = scalar_lea.vmem %s228, 8
        %255 = vst.msk [vmem:[%s254] sm:$0xff] %vm240, %v253
        %s256 = scalar_lea.vmem %s220, 16
        %v257 = vld [vmem:[%s256] sm:$0xff]
        %s258 = sld [smem:[#allocation2 + $0x2]]
        %v259 = vstv %s258
        %v260 = vmul.f32 %v257, %v259
        %s261 = sld [smem:[#allocation4 + $0x2]]
        %v262 = vstv %s261
        %v263 = vadd.f32 %v260, %v262
        %v264 = vmul.f32 %v263, 0.5
        %v265 = vtanh.pop %v264
        %v266 = vmul.f32 %v265, 0.5
        %v267 = vadd.f32 %v266, 0.5
        %s268 = scalar_lea.vmem %s228, 16
        %269 = vst.msk [vmem:[%s268] sm:$0xff] %vm240, %v267
        %s270 = scalar_lea.vmem %s220, 24
        %v271 = vld [vmem:[%s270] sm:$0xff]
        %s272 = sld [smem:[#allocation2 + $0x3]]
        %v273 = vstv %s272
        %v274 = vmul.f32 %v271, %v273
        %s275 = sld [smem:[#allocation4 + $0x3]]
        %v276 = vstv %s275
        %v277 = vadd.f32 %v274, %v276
        %v278 = vmul.f32 %v277, 0.5
        %v279 = vtanh.pop %v278
        %v280 = vmul.f32 %v279, 0.5
        %v281 = vadd.f32 %v280, 0.5
        %s282 = scalar_lea.vmem %s228, 24
        %283 = vst.msk [vmem:[%s282] sm:$0xff] %vm240, %v281
        %p284 = scmp.lt.s32.totalorder %s20, 1
        %s285 = scalar_select %p284, %s20, 1
        %p286 = scmp.lt.s32.totalorder %s21, 0
        %s287 = scalar_select %p286, %s21, 0
        %s288 = smul.addr %s285, 4
        %s289 = sadd.s32 %s287, %s288
        %s290 = smul.addr %s289, 8
        %s291 = scalar_lea.vmem %s3, %s290
        // Predicated region
        $region41: #{attention_module.3} parent=31 // pred_check
          %p292 = pneg %p118
        $region42: #{attention_module.3} parent=31 // pred_check_branch
          %294 = sbr.rel (%p292) target = $region44
        $region43: #{attention_module.3} parent=31 // pred_region
          _
        $region44: #{attention_module.3} parent=31 // pred_fallthru
          _
      $region32: #{attention_module.3} parent=5 // pred_fallthru
        _
      %p295 = scmp.le.s32.totalorder 2, %s11
      // Predicated region
      $region45: #{attention_module.3} parent=5 // pred_check
        %p296 = pneg %p295
      $region46: #{attention_module.3} parent=5 // pred_check_branch
        %298 = sbr.rel (%p296) target = $region48
      $region47: #{attention_module.3} parent=5 // pred_region
        %s299 = ssub.s32 %s11, 2
        // Predicated region
        $region49: #{attention_module.3} parent=47 // pred_check
          %p300 = pneg %p124
        $region50: #{attention_module.3} parent=47 // pred_check_branch
          %302 = sbr.rel (%p300) target = $region52
        $region51: #{attention_module.3} parent=47 // pred_region
          %p303 = scmp.lt.s32.totalorder %s22, 1
          %s304 = scalar_select %p303, %s22, 1
          %p305 = scmp.lt.s32.totalorder %s23, 0
          %s306 = scalar_select %p305, %s23, 0
          %s307 = smul.addr %s304, 4
          %s308 = sadd.s32 %s306, %s307
          %s309 = smul.addr %s308, 8
          %s310 = scalar_lea.vmem %s3, %s309
        $region52: #{attention_module.3} parent=47 // pred_fallthru
          _
      $region48: #{attention_module.3} parent=5 // pred_fallthru
        _
    $region6: #{attention_module.3} parent=1 // loop_footer
      %s15 = sadd.s32 1, %s11
    $region7: #{attention_module.3} parent=1 // loop_footer_branch
      %10 = sbr.rel target = $region3
    $region8: #{attention_module.3} parent=1 // loop_exit
      _
    %311 = vsyncpa [#allocation3], 1
    %s312 = scalar_lea.sflag [#allocation3], 1
    %313 = vsyncpa %s312, 1
    %314 = vsyncpa [#allocation5], 1

// kernel: attention_module.2
$region0: #{attention_module.2}
  #allocation0 [shape = 'u32[]', space=smem, size = 0x4, offset = 0x4, fixed_abs, tag = 'smem constant byte address 0x4 - core index']
  #allocation1 [shape = 'u32[144,128]{1,0:T(1,128)}', space=vmem, size = 0x12000, scoped, tag = 'internal scratch']
  #allocation2 [shape = 'f32[10,82]{1,0:T(8,128)}', space=vmem, size = 0x2000, scoped, tag = 'scratch operand']
  %s0 = inlined_call_operand.vmem [shape: f32[2,8,64], index: 0, kind: input, shape index: {}]
  %s1 = inlined_call_operand.vmem [shape: f32[2,1,2,64], index: 1, kind: input, shape index: {}]
  %s2 = inlined_call_operand.vmem [shape: f32[2,64], index: 2, kind: input, shape index: {}]
  %s3 = inlined_call_operand.vmem [shape: f32[4,27], index: 3, kind: input, shape index: {}]
  %s4 = inlined_call_operand.vmem [shape: f32[2,4,8,64], index: 4, kind: output, shape index: {0}]
  %s5 = inlined_call_operand.vmem [shape: f32[2,1,8,128], index: 5, kind: output, shape index: {1}]
  %6 = xla_tuple %s4, %s5
  %s7 = sld [smem:[#allocation0]]
  $region61: #{attention_module.2} parent=0
    _
  %s9 = ssub.s32 1, %s7
  %s10 = scalar_select 0, %s9, %s7
  $region1: #{attention_module.2} parent=0
    #allocation3 [shape = 'u8[2048]{0}', space=smem, size = 0x800, scoped, tag = 'input window, operand 3, single buffered']
    #allocation4 [shape = 's32[2]{0}', space=sflag, size = 0x8, scoped, tag = 'scoped memory for attention_module.2']
    %11 = vsyncpa [#allocation4], 0
    loop: start=0, step=1, limit=4
    $region2: #{attention_module.2} parent=1 // loop_pre_header
      _
    $region3: #{attention_module.2} parent=1 // loop_header
      %s13 = sphi 0, %s17
      %p14 = scmp.ge.s32.totalorder %s13, 4
      %s20 = sphi 0, %s32
      %s21 = sphi 0, %s28
      %s22 = sphi 0, %s20
      %s23 = sphi 0, %s21
      %s24 = sphi 0, %s22
      %s25 = sphi 0, %s23
      %s37 = sphi 0, %s39
      %s40 = sphi 0, %s37
      %s41 = sphi 0, %s40
      %s57 = sphi 0, %s41
      %s65 = sphi 0, %s67
      %s68 = sphi 0, %s65
      %s69 = sphi 0, %s68
      %s85 = sphi 0, %s69
      %s89 = sphi 0, %s89
      %s91 = sphi 0, %s89
      %s92 = sphi 0, %s91
      %s106 = sphi 0, %s92
      %s110 = sphi 0, %s110
      %s112 = sphi 0, %s110
      %s113 = sphi 0, %s112
      %s127 = sphi 0, %s113
      %s135 = sphi 0, %s137
      %s138 = sphi 0, %s135
      %s139 = sphi 0, %s138
      %s155 = sphi 0, %s139
      %s163 = sphi 0, %s165
      %s166 = sphi 0, %s163
      %s167 = sphi 0, %s166
      %s183 = sphi 0, %s167
    $region4: #{attention_module.2} parent=1 // loop_header_branch
      %16 = sbr.rel (%p14) target = $region8
    $region5: #{attention_module.2} parent=1 // loop_body
      %s18 = ssub.s32 %s13, 1
      %s19 = ssub.s32 %s13, 2
      %s26 = sadd.s32 1, %s21
      %p27 = scmp.ge.s32.totalorder %s26, 1
      %s28 = scalar_select %p27, 0, %s26
      %s29 = sadd.s32 1, %s20
      %s30 = scalar_select %p27, %s29, %s20
      %p31 = scmp.ge.s32.totalorder %s30, 2
      %s32 = scalar_select %p31, 0, %s30
      %s33 = ssub.s32 %s20, %s32
      %s34 = ssub.s32 %s21, %s28
      %s35 = sor.u32 %s33, %s34
      %p36 = scmp.eq.s32.totalorder %s35, 0
      %s38 = sadd.s32 %s37, 1
      %s39 = scalar_select %p36, %s37, %s38
      %p42 = pneg %p36
      %p43 = scmp.eq.s32.totalorder %s13, 1
      %p44 = por %p42, %p43
      %p45 = scmp.ne.s32.totalorder %s37, %s40
      %p46 = scmp.eq.s32.totalorder %s13, 0
      %p47 = por %p45, %p46
      %p48 = scmp.ne.s32.totalorder %s37, %s40
      %p49 = scmp.eq.s32.totalorder %s18, 1
      %p50 = por %p48, %p49
      %p51 = scmp.ne.s32.totalorder %s40, %s41
      %p52 = scmp.eq.s32.totalorder %s18, 0
      %p53 = por %p51, %p52
      %p54 = scmp.ne.s32.totalorder %s40, %s41
      %p55 = scmp.eq.s32.totalorder %s19, 1
      %p56 = por %p54, %p55
      %p58 = scmp.ne.s32.totalorder %s41, %s57
      %p59 = scmp.eq.s32.totalorder %s19, 0
      %p60 = por %p58, %p59
      %s61 = ssub.s32 %s20, %s32
      %s62 = ssub.s32 %s21, %s28
      %s63 = sor.u32 %s61, %s62
      %p64 = scmp.eq.s32.totalorder %s63, 0
      %s66 = sadd.s32 %s65, 1
      %s67 = scalar_select %p64, %s65, %s66
      %p70 = pneg %p64
      %p71 = scmp.eq.s32.totalorder %s13, 1
      %p72 = por %p70, %p71
      %p73 = scmp.ne.s32.totalorder %s65, %s68
      %p74 = scmp.eq.s32.totalorder %s13, 0
      %p75 = por %p73, %p74
      %p76 = scmp.ne.s32.totalorder %s65, %s68
      %p77 = scmp.eq.s32.totalorder %s18, 1
      %p78 = por %p76, %p77
      %p79 = scmp.ne.s32.totalorder %s68, %s69
      %p80 = scmp.eq.s32.totalorder %s18, 0
      %p81 = por %p79, %p80
      %p82 = scmp.ne.s32.totalorder %s68, %s69
      %p83 = scmp.eq.s32.totalorder %s19, 1
      %p84 = por %p82, %p83
      %p86 = scmp.ne.s32.totalorder %s69, %s85
      %p87 = scmp.eq.s32.totalorder %s19, 0
      %p88 = por %p86, %p87
      %s90 = sadd.s32 %s89, 1
      %p93 = scmp.eq.s32.totalorder %s13, 1
      %p94 = scmp.ne.s32.totalorder %s89, %s91
      %p95 = scmp.eq.s32.totalorder %s13, 0
      %p96 = por %p94, %p95
      %p97 = scmp.ne.s32.totalorder %s89, %s91
      %p98 = scmp.eq.s32.totalorder %s18, 1
      %p99 = por %p97, %p98
      %p100 = scmp.ne.s32.totalorder %s91, %s92
      %p101 = scmp.eq.s32.totalorder %s18, 0
      %p102 = por %p100, %p101
      %p103 = scmp.ne.s32.totalorder %s91, %s92
      %p104 = scmp.eq.s32.totalorder %s19, 1
      %p105 = por %p103, %p104
      %p107 = scmp.ne.s32.totalorder %s92, %s106
      %p108 = scmp.eq.s32.totalorder %s19, 0
      %p109 = por %p107, %p108
      %s111 = sadd.s32 %s110, 1
      %p114 = scmp.eq.s32.totalorder %s13, 1
      %p115 = scmp.ne.s32.totalorder %s110, %s112
      %p116 = scmp.eq.s32.totalorder %s13, 0
      %p117 = por %p115, %p116
      %p118 = scmp.ne.s32.totalorder %s110, %s112
      %p119 = scmp.eq.s32.totalorder %s18, 1
      %p120 = por %p118, %p119
      %p121 = scmp.ne.s32.totalorder %s112, %s113
      %p122 = scmp.eq.s32.totalorder %s18, 0
      %p123 = por %p121, %p122
      %p124 = scmp.ne.s32.totalorder %s112, %s113
      %p125 = scmp.eq.s32.totalorder %s19, 1
      %p126 = por %p124, %p125
      %p128 = scmp.ne.s32.totalorder %s113, %s127
      %p129 = scmp.eq.s32.totalorder %s19, 0
      %p130 = por %p128, %p129
      %s131 = ssub.s32 %s20, %s32
      %s132 = ssub.s32 %s21, %s28
      %s133 = sor.u32 %s131, %s132
      %p134 = scmp.eq.s32.totalorder %s133, 0
      %s136 = sadd.s32 %s135, 1
      %s137 = scalar_select %p134, %s135, %s136
      %p140 = pneg %p134
      %p141 = scmp.eq.s32.totalorder %s13, 1
      %p142 = por %p140, %p141
      %p143 = scmp.ne.s32.totalorder %s135, %s138
      %p144 = scmp.eq.s32.totalorder %s13, 0
      %p145 = por %p143, %p144
      %p146 = scmp.ne.s32.totalorder %s135, %s138
      %p147 = scmp.eq.s32.totalorder %s18, 1
      %p148 = por %p146, %p147
      %p149 = scmp.ne.s32.totalorder %s138, %s139
      %p150 = scmp.eq.s32.totalorder %s18, 0
      %p151 = por %p149, %p150
      %p152 = scmp.ne.s32.totalorder %s138, %s139
      %p153 = scmp.eq.s32.totalorder %s19, 1
      %p154 = por %p152, %p153
      %p156 = scmp.ne.s32.totalorder %s139, %s155
      %p157 = scmp.eq.s32.totalorder %s19, 0
      %p158 = por %p156, %p157
      %s159 = ssub.s32 %s20, %s32
      %s160 = ssub.s32 %s21, %s28
      %s161 = sor.u32 %s159, %s160
      %p162 = scmp.eq.s32.totalorder %s161, 0
      %s164 = sadd.s32 %s163, 1
      %s165 = scalar_select %p162, %s163, %s164
      %p168 = pneg %p162
      %p169 = scmp.eq.s32.totalorder %s13, 1
      %p170 = por %p168, %p169
      %p171 = scmp.ne.s32.totalorder %s163, %s166
      %p172 = scmp.eq.s32.totalorder %s13, 0
      %p173 = por %p171, %p172
      %p174 = scmp.ne.s32.totalorder %s163, %s166
      %p175 = scmp.eq.s32.totalorder %s18, 1
      %p176 = por %p174, %p175
      %p177 = scmp.ne.s32.totalorder %s166, %s167
      %p178 = scmp.eq.s32.totalorder %s18, 0
      %p179 = por %p177, %p178
      %p180 = scmp.ne.s32.totalorder %s166, %s167
      %p181 = scmp.eq.s32.totalorder %s19, 1
      %p182 = por %p180, %p181
      %p184 = scmp.ne.s32.totalorder %s167, %s183
      %p185 = scmp.eq.s32.totalorder %s19, 0
      %p186 = por %p184, %p185
      %p187 = scmp.le.s32.totalorder 1, %s13
      %p188 = scmp.lt.s32.totalorder %s13, 3
      %p189 = pnand %p187, %p188
      %p190 = pneg %p189
      // Predicated region
      $region9: #{attention_module.2} parent=5 // pred_check
        _
      $region10: #{attention_module.2} parent=5 // pred_check_branch
        %192 = sbr.rel (%p189) target = $region12
      $region11: #{attention_module.2} parent=5 // pred_region
        %s193 = ssub.s32 %s13, 1
        // Predicated region
        $region13: #{attention_module.2} parent=11 // pred_check
          %p194 = pneg %p102
        $region14: #{attention_module.2} parent=11 // pred_check_branch
          %196 = sbr.rel (%p194) target = $region16
        $region15: #{attention_module.2} parent=11 // pred_region
          _
        $region16: #{attention_module.2} parent=11 // pred_fallthru
          _
        // Predicated region
        $region17: #{attention_module.2} parent=11 // pred_check
          %p197 = pneg %p123
        $region18: #{attention_module.2} parent=11 // pred_check_branch
          %199 = sbr.rel (%p197) target = $region20
        $region19: #{attention_module.2} parent=11 // pred_region
          %s201 = ssub.s32 64, 64
          %202 = vsyncadd [#allocation4], %s201
          %s204 = sshll.u32 %s3, 4
          %s205 = int_to_ptr.vmem [resolvable:$true] %s204
          %207 = dma.vmem_to_smem %s205, 64, [#allocation3], [#allocation4]
        $region20: #{attention_module.2} parent=11 // pred_fallthru
          _
      $region12: #{attention_module.2} parent=5 // pred_fallthru
        _
      %p208 = scmp.lt.s32.totalorder %s13, 2
      // Predicated region
      $region21: #{attention_module.2} parent=5 // pred_check
        %p209 = pneg %p208
      $region22: #{attention_module.2} parent=5 // pred_check_branch
        %211 = sbr.rel (%p209) target = $region24
      $region23: #{attention_module.2} parent=5 // pred_region
        // Predicated region
        $region25: #{attention_module.2} parent=23 // pred_check
          %p212 = pneg %p47
        $region26: #{attention_module.2} parent=23 // pred_check_branch
          %214 = sbr.rel (%p212) target = $region28
        $region27: #{attention_module.2} parent=23 // pred_region
          %p215 = scmp.lt.s32.totalorder %s20, 1
          %s216 = scalar_select %p215, %s20, 1
          %p217 = scmp.lt.s32.totalorder %s21, 0
          %s218 = scalar_select %p217, %s21, 0
          %s219 = sadd.s32 %s218, %s216
          %s220 = smul.addr %s219, 8
          %s221 = scalar_lea.vmem %s0, %s220
        $region28: #{attention_module.2} parent=23 // pred_fallthru
          _
        // Predicated region
        $region29: #{attention_module.2} parent=23 // pred_check
          %p222 = pneg %p75
        $region30: #{attention_module.2} parent=23 // pred_check_branch
          %224 = sbr.rel (%p222) target = $region32
        $region31: #{attention_module.2} parent=23 // pred_region
          %p225 = scmp.lt.s32.totalorder %s20, 1
          %s226 = scalar_select %p225, %s20, 1
          %p227 = scmp.lt.s32.totalorder %s21, 0
          %s228 = scalar_select %p227, %s21, 0
          %s229 = sadd.s32 %s228, %s226
          %s230 = smul.addr %s229, 2
          %s231 = scalar_lea.vmem %s1, %s230
        $region32: #{attention_module.2} parent=23 // pred_fallthru
          _
      $region24: #{attention_module.2} parent=5 // pred_fallthru
        _
      %p232 = scmp.le.s32.totalorder 1, %s13
      %p233 = scmp.lt.s32.totalorder %s13, 3
      %p234 = pnand %p232, %p233
      %p235 = pneg %p234
      // Predicated region
      $region33: #{attention_module.2} parent=5 // pred_check
        _
      $region34: #{attention_module.2} parent=5 // pred_check_branch
        %237 = sbr.rel (%p234) target = $region36
      $region35: #{attention_module.2} parent=5 // pred_region
        %s238 = ssub.s32 %s13, 1
        // Predicated region
        $region37: #{attention_module.2} parent=35 // pred_check
          %p239 = pneg %p123
        $region38: #{attention_module.2} parent=35 // pred_check_branch
          %241 = sbr.rel (%p239) target = $region40
        $region39: #{attention_module.2} parent=35 // pred_region
          %242 = dma.done [#allocation4], 64
        $region40: #{attention_module.2} parent=35 // pred_fallthru
          _
        %243 = sfence
        %p244 = scmp.lt.s32.totalorder %s22, 1
        %s245 = scalar_select %p244, %s22, 1
        %p246 = scmp.lt.s32.totalorder %s23, 0
        %s247 = scalar_select %p246, %s23, 0
        %s248 = sadd.s32 %s247, %s245
        %s249 = smul.addr %s248, 8
        %s250 = scalar_lea.vmem %s0, %s249
        %p251 = pneg %p53
        %p252 = pneg %p50
        %p253 = scmp.lt.s32.totalorder %s22, 1
        %s254 = scalar_select %p253, %s22, 1
        %p255 = scmp.lt.s32.totalorder %s23, 0
        %s256 = scalar_select %p255, %s23, 0
        %s257 = sadd.s32 %s256, %s254
        %s258 = smul.addr %s257, 2
        %s259 = scalar_lea.vmem %s1, %s258
        %p260 = pneg %p81
        %p261 = pneg %p78
        %p262 = pneg %p102
        %p263 = pneg %p99
        %p264 = pneg %p123
        %p265 = pneg %p120
        %p266 = pneg %p151
        %p267 = pneg %p148
        %p268 = scmp.lt.s32.totalorder %s22, 1
        %s269 = scalar_select %p268, %s22, 1
        %p270 = scmp.lt.s32.totalorder %s23, 0
        %s271 = scalar_select %p270, %s23, 0
        %s272 = smul.addr %s269, 4
        %s273 = sadd.s32 %s271, %s272
        %s274 = smul.addr %s273, 8
        %s275 = scalar_lea.vmem %s4, %s274
        %p276 = pneg %p179
        %p277 = pneg %p176
        %p278 = scmp.lt.s32.totalorder %s22, 1
        %s279 = scalar_select %p278, %s22, 1
        %p280 = scmp.lt.s32.totalorder %s23, 0
        %s281 = scalar_select %p280, %s23, 0
        %s282 = sadd.s32 %s281, %s279
        %s283 = smul.addr %s282, 8
        %s284 = scalar_lea.vmem %s5, %s283
        %p285 = scmp.lt.s32.totalorder %s22, 1
        %s286 = scalar_select %p285, %s22, 1
        %p287 = scmp.lt.s32.totalorder %s23, 0
        %s288 = scalar_select %p287, %s23, 0
        %s289 = sadd.s32 %s288, %s286
        %s290 = smul.addr %s289, 8
        %s291 = scalar_lea.vmem %s0, %s290
        %p292 = scmp.lt.s32.totalorder %s22, 1
        %s293 = scalar_select %p292, %s22, 1
        %p294 = scmp.lt.s32.totalorder %s23, 0
        %s295 = scalar_select %p294, %s23, 0
        %s296 = sadd.s32 %s295, %s293
        %s297 = smul.addr %s296, 2
        %s298 = scalar_lea.vmem %s1, %s297
        %p299 = scmp.lt.s32.totalorder %s22, 1
        %s300 = scalar_select %p299, %s22, 1
        %p301 = scmp.lt.s32.totalorder %s23, 0
        %s302 = scalar_select %p301, %s23, 0
        %s303 = smul.addr %s300, 4
        %s304 = sadd.s32 %s302, %s303
        %s305 = smul.addr %s304, 8
        %s306 = scalar_lea.vmem %s4, %s305
        %p307 = scmp.lt.s32.totalorder %s22, 1
        %s308 = scalar_select %p307, %s22, 1
        %p309 = scmp.lt.s32.totalorder %s23, 0
        %s310 = scalar_select %p309, %s23, 0
        %s311 = sadd.s32 %s310, %s308
        %s312 = smul.addr %s311, 8
        %s313 = scalar_lea.vmem %s5, %s312
        %vm314 = vcmask 72704
        %315 = vst.msk [vmem:[#allocation2] sm:$0xff] %vm314, 0.0
        %vm316 = vcmask 66560
        %317 = vst.msk [vmem:[#allocation2 + $0x8] sm:$0x3] %vm316, 0.0
        %vm318 = vcmask 671304
        %319 = vst.msk [vmem:[#allocation2] sm:$0xff] %vm318, 0.0
        %vm320 = vcmask 665160
        %321 = vst.msk [vmem:[#allocation2 + $0x8] sm:$0x3] %vm320, 0.0
        %v322 = vld [vmem:[%s298] sm:$0x1]
        %324 = vrot.lane.b32.xlu0 %v322, 9
        %v325 = vpop.permute.xlu0 %324
        %vm327 = vcmask 589896
        %328 = vst.msk [vmem:[#allocation2] sm:$0x1] %vm327, %v325
        %v329 = vld [vmem:[%s291] sm:$0xff]
        %331 = vrot.lane.b32.xlu0 %v329, 9
        %v332 = vpop.permute.xlu0 %331
        %vm334 = vcmask 597064
        %335 = vst.msk [vmem:[#allocation2 + $0x1] sm:$0xff] %vm334, %v332
        %v336 = vld [vmem:[%s298 + $0x1] sm:$0x1]
        %338 = vrot.lane.b32.xlu0 %v336, 9
        %v339 = vpop.permute.xlu0 %338
        %341 = vst.msk [vmem:[#allocation2 + $0x9] sm:$0x1] %vm327, %v339
        %v342 = vld [vmem:[%s2] sm:$0x1]
        %v343 = vld [vmem:[%s2 + $0x1] sm:$0x1]
        %v344 = vld [vmem:[#allocation2] sm:$0xff]
        %v345 = vlaneseq
        %v346 = vshrl.u32 %v345, 7
        %v347 = vsub.s32 0, %v346
        %v348 = vrot.slane %v342, %v347
        %v349 = vmul.f32 %v344, %v348
        %s350 = sld [smem:[#allocation3]]
        %v351 = vstv %s350
        %v352 = vmul.f32 %v351, %v349
        %v353 = vadd.f32 %v352, 0.0
        %s354 = sld [smem:[#allocation3 + $0x80]]
        %v355 = vstv %s354
        %v356 = vmul.f32 %v355, %v349
        %v357 = vadd.f32 %v356, 0.0
        %s358 = sld [smem:[#allocation3 + $0x100]]
        %v359 = vstv %s358
        %v360 = vmul.f32 %v359, %v349
        %v361 = vadd.f32 %v360, 0.0
        %s362 = sld [smem:[#allocation3 + $0x180]]
        %v363 = vstv %s362
        %v364 = vmul.f32 %v363, %v349
        %v365 = vadd.f32 %v364, 0.0
        %s366 = sld [smem:[#allocation3 + $0x1]]
        %v367 = vstv %s366
        %v368 = vmul.f32 %v367, %v344
        %370 = vrot.lane.b32.xlu0 %v368, 127
        %v371 = vpop.permute.xlu0 %370
        %v373 = vadd.f32 %v353, %v371
        %s374 = sld [smem:[#allocation3 + $0x81]]
        %v375 = vstv %s374
        %v376 = vmul.f32 %v375, %v344
        %378 = vrot.lane.b32.xlu0 %v376, 127
        %v379 = vpop.permute.xlu0 %378
        %v381 = vadd.f32 %v357, %v379
        %s382 = sld [smem:[#allocation3 + $0x101]]
        %v383 = vstv %s382
        %v384 = vmul.f32 %v383, %v344
        %386 = vrot.lane.b32.xlu0 %v384, 127
        %v387 = vpop.permute.xlu0 %386
        %v389 = vadd.f32 %v361, %v387
        %s390 = sld [smem:[#allocation3 + $0x181]]
        %v391 = vstv %s390
        %v392 = vmul.f32 %v391, %v344
        %394 = vrot.lane.b32.xlu0 %v392, 127
        %v395 = vpop.permute.xlu0 %394
        %v397 = vadd.f32 %v365, %v395
        %v398 = vlaneseq
        %v399 = vshrl.u32 %v398, 7
        %v400 = vsub.s32 0, %v399
        %v401 = vrot.slane %v343, %v400
        %403 = vrot.lane.b32.xlu0 %v401, 2
        %v404 = vpop.permute.xlu0 %403
        %v406 = vmul.f32 %v344, %v404
        %s407 = sld [smem:[#allocation3 + $0x2]]
        %v408 = vstv %s407
        %v409 = vmul.f32 %v408, %v406
        %411 = vrot.lane.b32.xlu0 %v409, 126
        %v412 = vpop.permute.xlu0 %411
        %v414 = vadd.f32 %v373, %v412
        %s415 = sld [smem:[#allocation3 + $0x82]]
        %v416 = vstv %s415
        %v417 = vmul.f32 %v416, %v406
        %419 = vrot.lane.b32.xlu0 %v417, 126
        %v420 = vpop.permute.xlu0 %419
        %v422 = vadd.f32 %v381, %v420
        %s423 = sld [smem:[#allocation3 + $0x102]]
        %v424 = vstv %s423
        %v425 = vmul.f32 %v424, %v406
        %427 = vrot.lane.b32.xlu0 %v425, 126
        %v428 = vpop.permute.xlu0 %427
        %v430 = vadd.f32 %v389, %v428
        %s431 = sld [smem:[#allocation3 + $0x182]]
        %v432 = vstv %s431
        %v433 = vmul.f32 %v432, %v406
        %435 = vrot.lane.b32.xlu0 %v433, 126
        %v436 = vpop.permute.xlu0 %435
        %v438 = vadd.f32 %v397, %v436
        %440 = vrot.lane.b32.xlu0 %v348, 8
        %v441 = vpop.permute.xlu0 %440
        %v443 = vmul.f32 %v344, %v441
        %s444 = sld [smem:[#allocation3 + $0x3]]
        %v445 = vstv %s444
        %v446 = vmul.f32 %v445, %v443
        %448 = vrot.lane.b32.xlu0 %v446, 120
        %v449 = vpop.permute.xlu0 %448
        %v451 = vadd.f32 %v414, %v449
        %s452 = sld [smem:[#allocation3 + $0x83]]
        %v453 = vstv %s452
        %v454 = vmul.f32 %v453, %v443
        %456 = vrot.lane.b32.xlu0 %v454, 120
        %v457 = vpop.permute.xlu0 %456
        %v459 = vadd.f32 %v422, %v457
        %s460 = sld [smem:[#allocation3 + $0x103]]
        %v461 = vstv %s460
        %v462 = vmul.f32 %v461, %v443
        %464 = vrot.lane.b32.xlu0 %v462, 120
        %v465 = vpop.permute.xlu0 %464
        %v467 = vadd.f32 %v430, %v465
        %s468 = sld [smem:[#allocation3 + $0x183]]
        %v469 = vstv %s468
        %v470 = vmul.f32 %v469, %v443
        %472 = vrot.lane.b32.xlu0 %v470, 120
        %v473 = vpop.permute.xlu0 %472
        %v475 = vadd.f32 %v438, %v473
        %s476 = sld [smem:[#allocation3 + $0x4]]
        %v477 = vstv %s476
        %v478 = vmul.f32 %v477, %v344
        %480 = vrot.lane.b32.xlu0 %v478, 119
        %v481 = vpop.permute.xlu0 %480
        %v483 = vadd.f32 %v451, %v481
        %s484 = sld [smem:[#allocation3 + $0x84]]
        %v485 = vstv %s484
        %v486 = vmul.f32 %v485, %v344
        %488 = vrot.lane.b32.xlu0 %v486, 119
        %v489 = vpop.permute.xlu0 %488
        %v491 = vadd.f32 %v459, %v489
        %s492 = sld [smem:[#allocation3 + $0x104]]
        %v493 = vstv %s492
        %v494 = vmul.f32 %v493, %v344
        %496 = vrot.lane.b32.xlu0 %v494, 119
        %v497 = vpop.permute.xlu0 %496
        %v499 = vadd.f32 %v467, %v497
        %s500 = sld [smem:[#allocation3 + $0x184]]
        %v501 = vstv %s500
        %v502 = vmul.f32 %v501, %v344
        %504 = vrot.lane.b32.xlu0 %v502, 119
        %v505 = vpop.permute.xlu0 %504
        %v507 = vadd.f32 %v475, %v505
        %508 = vrot.lane.b32.xlu0 %v401, 10
        %v509 = vpop.permute.xlu0 %508
        %v511 = vmul.f32 %v344, %v509
        %s512 = sld [smem:[#allocation3 + $0x5]]
        %v513 = vstv %s512
        %v514 = vmul.f32 %v513, %v511
        %516 = vrot.lane.b32.xlu0 %v514, 118
        %v517 = vpop.permute.xlu0 %516
        %v519 = vadd.f32 %v483, %v517
        %s520 = sld [smem:[#allocation3 + $0x85]]
        %v521 = vstv %s520
        %v522 = vmul.f32 %v521, %v511
        %524 = vrot.lane.b32.xlu0 %v522, 118
        %v525 = vpop.permute.xlu0 %524
        %v527 = vadd.f32 %v491, %v525
        %s528 = sld [smem:[#allocation3 + $0x105]]
        %v529 = vstv %s528
        %v530 = vmul.f32 %v529, %v511
        %532 = vrot.lane.b32.xlu0 %v530, 118
        %v533 = vpop.permute.xlu0 %532
        %v535 = vadd.f32 %v499, %v533
        %s536 = sld [smem:[#allocation3 + $0x185]]
        %v537 = vstv %s536
        %v538 = vmul.f32 %v537, %v511
        %540 = vrot.lane.b32.xlu0 %v538, 118
        %v541 = vpop.permute.xlu0 %540
        %v543 = vadd.f32 %v507, %v541
        %544 = vrot.lane.b32.xlu0 %v348, 16
        %v545 = vpop.permute.xlu0 %544
        %v547 = vmul.f32 %v344, %v545
        %s548 = sld [smem:[#allocation3 + $0x6]]
        %v549 = vstv %s548
        %v550 = vmul.f32 %v549, %v547
        %552 = vrot.lane.b32.xlu0 %v550, 112
        %v553 = vpop.permute.xlu0 %552
        %v555 = vadd.f32 %v519, %v553
        %s556 = sld [smem:[#allocation3 + $0x86]]
        %v557 = vstv %s556
        %v558 = vmul.f32 %v557, %v547
        %560 = vrot.lane.b32.xlu0 %v558, 112
        %v561 = vpop.permute.xlu0 %560
        %v563 = vadd.f32 %v527, %v561
        %s564 = sld [smem:[#allocation3 + $0x106]]
        %v565 = vstv %s564
        %v566 = vmul.f32 %v565, %v547
        %568 = vrot.lane.b32.xlu0 %v566, 112
        %v569 = vpop.permute.xlu0 %568
        %v571 = vadd.f32 %v535, %v569
        %s572 = sld [smem:[#allocation3 + $0x186]]
        %v573 = vstv %s572
        %v574 = vmul.f32 %v573, %v547
        %576 = vrot.lane.b32.xlu0 %v574, 112
        %v577 = vpop.permute.xlu0 %576
        %v579 = vadd.f32 %v543, %v577
        %s580 = sld [smem:[#allocation3 + $0x7]]
        %v581 = vstv %s580
        %v582 = vmul.f32 %v581, %v344
        %584 = vrot.lane.b32.xlu0 %v582, 111
        %v585 = vpop.permute.xlu0 %584
        %v587 = vadd.f32 %v555, %v585
        %s588 = sld [smem:[#allocation3 + $0x87]]
        %v589 = vstv %s588
        %v590 = vmul.f32 %v589, %v344
        %592 = vrot.lane.b32.xlu0 %v590, 111
        %v593 = vpop.permute.xlu0 %592
        %v595 = vadd.f32 %v563, %v593
        %s596 = sld [smem:[#allocation3 + $0x107]]
        %v597 = vstv %s596
        %v598 = vmul.f32 %v597, %v344
        %600 = vrot.lane.b32.xlu0 %v598, 111
        %v601 = vpop.permute.xlu0 %600
        %v603 = vadd.f32 %v571, %v601
        %s604 = sld [smem:[#allocation3 + $0x187]]
        %v605 = vstv %s604
        %v606 = vmul.f32 %v605, %v344
        %608 = vrot.lane.b32.xlu0 %v606, 111
        %v609 = vpop.permute.xlu0 %608
        %v611 = vadd.f32 %v579, %v609
        %612 = vrot.lane.b32.xlu0 %v401, 18
        %v613 = vpop.permute.xlu0 %612
        %v615 = vmul.f32 %v344, %v613
        %s616 = sld [smem:[#allocation3 + $0x8]]
        %v617 = vstv %s616
        %v618 = vmul.f32 %v617, %v615
        %620 = vrot.lane.b32.xlu0 %v618, 110
        %v621 = vpop.permute.xlu0 %620
        %v623 = vadd.f32 %v587, %v621
        %s624 = sld [smem:[#allocation3 + $0x88]]
        %v625 = vstv %s624
        %v626 = vmul.f32 %v625, %v615
        %628 = vrot.lane.b32.xlu0 %v626, 110
        %v629 = vpop.permute.xlu0 %628
        %v631 = vadd.f32 %v595, %v629
        %s632 = sld [smem:[#allocation3 + $0x108]]
        %v633 = vstv %s632
        %v634 = vmul.f32 %v633, %v615
        %636 = vrot.lane.b32.xlu0 %v634, 110
        %v637 = vpop.permute.xlu0 %636
        %v639 = vadd.f32 %v603, %v637
        %s640 = sld [smem:[#allocation3 + $0x188]]
        %v641 = vstv %s640
        %v642 = vmul.f32 %v641, %v615
        %644 = vrot.lane.b32.xlu0 %v642, 110
        %v645 = vpop.permute.xlu0 %644
        %v647 = vadd.f32 %v611, %v645
        %v648 = vld [vmem:[#allocation2 + $0x1] sm:$0xff]
        %v649 = vmul.f32 %v648, %v348
        %s650 = sld [smem:[#allocation3 + $0x9]]
        %v651 = vstv %s650
        %v652 = vmul.f32 %v651, %v649
        %v653 = vadd.f32 %v623, %v652
        %s654 = sld [smem:[#allocation3 + $0x89]]
        %v655 = vstv %s654
        %v656 = vmul.f32 %v655, %v649
        %v657 = vadd.f32 %v631, %v656
        %s658 = sld [smem:[#allocation3 + $0x109]]
        %v659 = vstv %s658
        %v660 = vmul.f32 %v659, %v649
        %v661 = vadd.f32 %v639, %v660
        %s662 = sld [smem:[#allocation3 + $0x189]]
        %v663 = vstv %s662
        %v664 = vmul.f32 %v663, %v649
        %v665 = vadd.f32 %v647, %v664
        %s666 = sld [smem:[#allocation3 + $0xa]]
        %v667 = vstv %s666
        %v668 = vmul.f32 %v667, %v648
        %670 = vrot.lane.b32.xlu0 %v668, 127
        %v671 = vpop.permute.xlu0 %670
        %v673 = vadd.f32 %v653, %v671
        %s674 = sld [smem:[#allocation3 + $0x8a]]
        %v675 = vstv %s674
        %v676 = vmul.f32 %v675, %v648
        %678 = vrot.lane.b32.xlu0 %v676, 127
        %v679 = vpop.permute.xlu0 %678
        %v681 = vadd.f32 %v657, %v679
        %s682 = sld [smem:[#allocation3 + $0x10a]]
        %v683 = vstv %s682
        %v684 = vmul.f32 %v683, %v648
        %686 = vrot.lane.b32.xlu0 %v684, 127
        %v687 = vpop.permute.xlu0 %686
        %v689 = vadd.f32 %v661, %v687
        %s690 = sld [smem:[#allocation3 + $0x18a]]
        %v691 = vstv %s690
        %v692 = vmul.f32 %v691, %v648
        %694 = vrot.lane.b32.xlu0 %v692, 127
        %v695 = vpop.permute.xlu0 %694
        %v697 = vadd.f32 %v665, %v695
        %v698 = vmul.f32 %v648, %v404
        %s699 = sld [smem:[#allocation3 + $0xb]]
        %v700 = vstv %s699
        %v701 = vmul.f32 %v700, %v698
        %703 = vrot.lane.b32.xlu0 %v701, 126
        %v704 = vpop.permute.xlu0 %703
        %v706 = vadd.f32 %v673, %v704
        %s707 = sld [smem:[#allocation3 + $0x8b]]
        %v708 = vstv %s707
        %v709 = vmul.f32 %v708, %v698
        %711 = vrot.lane.b32.xlu0 %v709, 126
        %v712 = vpop.permute.xlu0 %711
        %v714 = vadd.f32 %v681, %v712
        %s715 = sld [smem:[#allocation3 + $0x10b]]
        %v716 = vstv %s715
        %v717 = vmul.f32 %v716, %v698
        %719 = vrot.lane.b32.xlu0 %v717, 126
        %v720 = vpop.permute.xlu0 %719
        %v722 = vadd.f32 %v689, %v720
        %s723 = sld [smem:[#allocation3 + $0x18b]]
        %v724 = vstv %s723
        %v725 = vmul.f32 %v724, %v698
        %727 = vrot.lane.b32.xlu0 %v725, 126
        %v728 = vpop.permute.xlu0 %727
        %v730 = vadd.f32 %v697, %v728
        %v731 = vmul.f32 %v648, %v441
        %s732 = sld [smem:[#allocation3 + $0xc]]
        %v733 = vstv %s732
        %v734 = vmul.f32 %v733, %v731
        %736 = vrot.lane.b32.xlu0 %v734, 120
        %v737 = vpop.permute.xlu0 %736
        %v739 = vadd.f32 %v706, %v737
        %s740 = sld [smem:[#allocation3 + $0x8c]]
        %v741 = vstv %s740
        %v742 = vmul.f32 %v741, %v731
        %744 = vrot.lane.b32.xlu0 %v742, 120
        %v745 = vpop.permute.xlu0 %744
        %v747 = vadd.f32 %v714, %v745
        %s748 = sld [smem:[#allocation3 + $0x10c]]
        %v749 = vstv %s748
        %v750 = vmul.f32 %v749, %v731
        %752 = vrot.lane.b32.xlu0 %v750, 120
        %v753 = vpop.permute.xlu0 %752
        %v755 = vadd.f32 %v722, %v753
        %s756 = sld [smem:[#allocation3 + $0x18c]]
        %v757 = vstv %s756
        %v758 = vmul.f32 %v757, %v731
        %760 = vrot.lane.b32.xlu0 %v758, 120
        %v761 = vpop.permute.xlu0 %760
        %v763 = vadd.f32 %v730, %v761
        %s764 = sld [smem:[#allocation3 + $0xd]]
        %v765 = vstv %s764
        %v766 = vmul.f32 %v765, %v648
        %768 = vrot.lane.b32.xlu0 %v766, 119
        %v769 = vpop.permute.xlu0 %768
        %v771 = vadd.f32 %v739, %v769
        %s772 = sld [smem:[#allocation3 + $0x8d]]
        %v773 = vstv %s772
        %v774 = vmul.f32 %v773, %v648
        %776 = vrot.lane.b32.xlu0 %v774, 119
        %v777 = vpop.permute.xlu0 %776
        %v779 = vadd.f32 %v747, %v777
        %s780 = sld [smem:[#allocation3 + $0x10d]]
        %v781 = vstv %s780
        %v782 = vmul.f32 %v781, %v648
        %784 = vrot.lane.b32.xlu0 %v782, 119
        %v785 = vpop.permute.xlu0 %784
        %v787 = vadd.f32 %v755, %v785
        %s788 = sld [smem:[#allocation3 + $0x18d]]
        %v789 = vstv %s788
        %v790 = vmul.f32 %v789, %v648
        %792 = vrot.lane.b32.xlu0 %v790, 119
        %v793 = vpop.permute.xlu0 %792
        %v795 = vadd.f32 %v763, %v793
        %v796 = vmul.f32 %v648, %v509
        %s797 = sld [smem:[#allocation3 + $0xe]]
        %v798 = vstv %s797
        %v799 = vmul.f32 %v798, %v796
        %801 = vrot.lane.b32.xlu0 %v799, 118
        %v802 = vpop.permute.xlu0 %801
        %v804 = vadd.f32 %v771, %v802
        %s805 = sld [smem:[#allocation3 + $0x8e]]
        %v806 = vstv %s805
        %v807 = vmul.f32 %v806, %v796
        %809 = vrot.lane.b32.xlu0 %v807, 118
        %v810 = vpop.permute.xlu0 %809
        %v812 = vadd.f32 %v779, %v810
        %s813 = sld [smem:[#allocation3 + $0x10e]]
        %v814 = vstv %s813
        %v815 = vmul.f32 %v814, %v796
        %817 = vrot.lane.b32.xlu0 %v815, 118
        %v818 = vpop.permute.xlu0 %817
        %v820 = vadd.f32 %v787, %v818
        %s821 = sld [smem:[#allocation3 + $0x18e]]
        %v822 = vstv %s821
        %v823 = vmul.f32 %v822, %v796
        %825 = vrot.lane.b32.xlu0 %v823, 118
        %v826 = vpop.permute.xlu0 %825
        %v828 = vadd.f32 %v795, %v826
        %v829 = vmul.f32 %v648, %v545
        %s830 = sld [smem:[#allocation3 + $0xf]]
        %v831 = vstv %s830
        %v832 = vmul.f32 %v831, %v829
        %834 = vrot.lane.b32.xlu0 %v832, 112
        %v835 = vpop.permute.xlu0 %834
        %v837 = vadd.f32 %v804, %v835
        %s838 = sld [smem:[#allocation3 + $0x8f]]
        %v839 = vstv %s838
        %v840 = vmul.f32 %v839, %v829
        %842 = vrot.lane.b32.xlu0 %v840, 112
        %v843 = vpop.permute.xlu0 %842
        %v845 = vadd.f32 %v812, %v843
        %s846 = sld [smem:[#allocation3 + $0x10f]]
        %v847 = vstv %s846
        %v848 = vmul.f32 %v847, %v829
        %850 = vrot.lane.b32.xlu0 %v848, 112
        %v851 = vpop.permute.xlu0 %850
        %v853 = vadd.f32 %v820, %v851
        %s854 = sld [smem:[#allocation3 + $0x18f]]
        %v855 = vstv %s854
        %v856 = vmul.f32 %v855, %v829
        %858 = vrot.lane.b32.xlu0 %v856, 112
        %v859 = vpop.permute.xlu0 %858
        %v861 = vadd.f32 %v828, %v859
        %s862 = sld [smem:[#allocation3 + $0x10]]
        %v863 = vstv %s862
        %v864 = vmul.f32 %v863, %v648
        %866 = vrot.lane.b32.xlu0 %v864, 111
        %v867 = vpop.permute.xlu0 %866
        %v869 = vadd.f32 %v837, %v867
        %s870 = sld [smem:[#allocation3 + $0x90]]
        %v871 = vstv %s870
        %v872 = vmul.f32 %v871, %v648
        %874 = vrot.lane.b32.xlu0 %v872, 111
        %v875 = vpop.permute.xlu0 %874
        %v877 = vadd.f32 %v845, %v875
        %s878 = sld [smem:[#allocation3 + $0x110]]
        %v879 = vstv %s878
        %v880 = vmul.f32 %v879, %v648
        %882 = vrot.lane.b32.xlu0 %v880, 111
        %v883 = vpop.permute.xlu0 %882
        %v885 = vadd.f32 %v853, %v883
        %s886 = sld [smem:[#allocation3 + $0x190]]
        %v887 = vstv %s886
        %v888 = vmul.f32 %v887, %v648
        %890 = vrot.lane.b32.xlu0 %v888, 111
        %v891 = vpop.permute.xlu0 %890
        %v893 = vadd.f32 %v861, %v891
        %v894 = vmul.f32 %v648, %v613
        %s895 = sld [smem:[#allocation3 + $0x11]]
        %v896 = vstv %s895
        %v897 = vmul.f32 %v896, %v894
        %899 = vrot.lane.b32.xlu0 %v897, 110
        %v900 = vpop.permute.xlu0 %899
        %v902 = vadd.f32 %v869, %v900
        %s903 = sld [smem:[#allocation3 + $0x91]]
        %v904 = vstv %s903
        %v905 = vmul.f32 %v904, %v894
        %907 = vrot.lane.b32.xlu0 %v905, 110
        %v908 = vpop.permute.xlu0 %907
        %v910 = vadd.f32 %v877, %v908
        %s911 = sld [smem:[#allocation3 + $0x111]]
        %v912 = vstv %s911
        %v913 = vmul.f32 %v912, %v894
        %915 = vrot.lane.b32.xlu0 %v913, 110
        %v916 = vpop.permute.xlu0 %915
        %v918 = vadd.f32 %v885, %v916
        %s919 = sld [smem:[#allocation3 + $0x191]]
        %v920 = vstv %s919
        %v921 = vmul.f32 %v920, %v894
        %923 = vrot.lane.b32.xlu0 %v921, 110
        %v924 = vpop.permute.xlu0 %923
        %v926 = vadd.f32 %v893, %v924
        %v927 = vld [vmem:[#allocation2 + $0x2] sm:$0xff]
        %v928 = vmul.f32 %v927, %v348
        %s929 = sld [smem:[#allocation3 + $0x12]]
        %v930 = vstv %s929
        %v931 = vmul.f32 %v930, %v928
        %v932 = vadd.f32 %v902, %v931
        %s933 = sld [smem:[#allocation3 + $0x92]]
        %v934 = vstv %s933
        %v935 = vmul.f32 %v934, %v928
        %v936 = vadd.f32 %v910, %v935
        %s937 = sld [smem:[#allocation3 + $0x112]]
        %v938 = vstv %s937
        %v939 = vmul.f32 %v938, %v928
        %v940 = vadd.f32 %v918, %v939
        %s941 = sld [smem:[#allocation3 + $0x192]]
        %v942 = vstv %s941
        %v943 = vmul.f32 %v942, %v928
        %v944 = vadd.f32 %v926, %v943
        %s945 = sld [smem:[#allocation3 + $0x13]]
        %v946 = vstv %s945
        %v947 = vmul.f32 %v946, %v927
        %949 = vrot.lane.b32.xlu0 %v947, 127
        %v950 = vpop.permute.xlu0 %949
        %v952 = vadd.f32 %v932, %v950
        %s953 = sld [smem:[#allocation3 + $0x93]]
        %v954 = vstv %s953
        %v955 = vmul.f32 %v954, %v927
        %957 = vrot.lane.b32.xlu0 %v955, 127
        %v958 = vpop.permute.xlu0 %957
        %v960 = vadd.f32 %v936, %v958
        %s961 = sld [smem:[#allocation3 + $0x113]]
        %v962 = vstv %s961
        %v963 = vmul.f32 %v962, %v927
        %965 = vrot.lane.b32.xlu0 %v963, 127
        %v966 = vpop.permute.xlu0 %965
        %v968 = vadd.f32 %v940, %v966
        %s969 = sld [smem:[#allocation3 + $0x193]]
        %v970 = vstv %s969
        %v971 = vmul.f32 %v970, %v927
        %973 = vrot.lane.b32.xlu0 %v971, 127
        %v974 = vpop.permute.xlu0 %973
        %v976 = vadd.f32 %v944, %v974
        %v977 = vmul.f32 %v927, %v404
        %s978 = sld [smem:[#allocation3 + $0x14]]
        %v979 = vstv %s978
        %v980 = vmul.f32 %v979, %v977
        %982 = vrot.lane.b32.xlu0 %v980, 126
        %v983 = vpop.permute.xlu0 %982
        %v985 = vadd.f32 %v952, %v983
        %s986 = sld [smem:[#allocation3 + $0x94]]
        %v987 = vstv %s986
        %v988 = vmul.f32 %v987, %v977
        %990 = vrot.lane.b32.xlu0 %v988, 126
        %v991 = vpop.permute.xlu0 %990
        %v993 = vadd.f32 %v960, %v991
        %s994 = sld [smem:[#allocation3 + $0x114]]
        %v995 = vstv %s994
        %v996 = vmul.f32 %v995, %v977
        %998 = vrot.lane.b32.xlu0 %v996, 126
        %v999 = vpop.permute.xlu0 %998
        %v1001 = vadd.f32 %v968, %v999
        %s1002 = sld [smem:[#allocation3 + $0x194]]
        %v1003 = vstv %s1002
        %v1004 = vmul.f32 %v1003, %v977
        %1006 = vrot.lane.b32.xlu0 %v1004, 126
        %v1007 = vpop.permute.xlu0 %1006
        %v1009 = vadd.f32 %v976, %v1007
        %v1010 = vmul.f32 %v927, %v441
        %s1011 = sld [smem:[#allocation3 + $0x15]]
        %v1012 = vstv %s1011
        %v1013 = vmul.f32 %v1012, %v1010
        %1015 = vrot.lane.b32.xlu0 %v1013, 120
        %v1016 = vpop.permute.xlu0 %1015
        %v1018 = vadd.f32 %v985, %v1016
        %s1019 = sld [smem:[#allocation3 + $0x95]]
        %v1020 = vstv %s1019
        %v1021 = vmul.f32 %v1020, %v1010
        %1023 = vrot.lane.b32.xlu0 %v1021, 120
        %v1024 = vpop.permute.xlu0 %1023
        %v1026 = vadd.f32 %v993, %v1024
        %s1027 = sld [smem:[#allocation3 + $0x115]]
        %v1028 = vstv %s1027
        %v1029 = vmul.f32 %v1028, %v1010
        %1031 = vrot.lane.b32.xlu0 %v1029, 120
        %v1032 = vpop.permute.xlu0 %1031
        %v1034 = vadd.f32 %v1001, %v1032
        %s1035 = sld [smem:[#allocation3 + $0x195]]
        %v1036 = vstv %s1035
        %v1037 = vmul.f32 %v1036, %v1010
        %1039 = vrot.lane.b32.xlu0 %v1037, 120
        %v1040 = vpop.permute.xlu0 %1039
        %v1042 = vadd.f32 %v1009, %v1040
        %s1043 = sld [smem:[#allocation3 + $0x16]]
        %v1044 = vstv %s1043
        %v1045 = vmul.f32 %v1044, %v927
        %1047 = vrot.lane.b32.xlu0 %v1045, 119
        %v1048 = vpop.permute.xlu0 %1047
        %v1050 = vadd.f32 %v1018, %v1048
        %s1051 = sld [smem:[#allocation3 + $0x96]]
        %v1052 = vstv %s1051
        %v1053 = vmul.f32 %v1052, %v927
        %1055 = vrot.lane.b32.xlu0 %v1053, 119
        %v1056 = vpop.permute.xlu0 %1055
        %v1058 = vadd.f32 %v1026, %v1056
        %s1059 = sld [smem:[#allocation3 + $0x116]]
        %v1060 = vstv %s1059
        %v1061 = vmul.f32 %v1060, %v927
        %1063 = vrot.lane.b32.xlu0 %v1061, 119
        %v1064 = vpop.permute.xlu0 %1063
        %v1066 = vadd.f32 %v1034, %v1064
        %s1067 = sld [smem:[#allocation3 + $0x196]]
        %v1068 = vstv %s1067
        %v1069 = vmul.f32 %v1068, %v927
        %1071 = vrot.lane.b32.xlu0 %v1069, 119
        %v1072 = vpop.permute.xlu0 %1071
        %v1074 = vadd.f32 %v1042, %v1072
        %v1075 = vmul.f32 %v927, %v509
        %s1076 = sld [smem:[#allocation3 + $0x17]]
        %v1077 = vstv %s1076
        %v1078 = vmul.f32 %v1077, %v1075
        %1080 = vrot.lane.b32.xlu0 %v1078, 118
        %v1081 = vpop.permute.xlu0 %1080
        %v1083 = vadd.f32 %v1050, %v1081
        %s1084 = sld [smem:[#allocation3 + $0x97]]
        %v1085 = vstv %s1084
        %v1086 = vmul.f32 %v1085, %v1075
        %1088 = vrot.lane.b32.xlu0 %v1086, 118
        %v1089 = vpop.permute.xlu0 %1088
        %v1091 = vadd.f32 %v1058, %v1089
        %s1092 = sld [smem:[#allocation3 + $0x117]]
        %v1093 = vstv %s1092
        %v1094 = vmul.f32 %v1093, %v1075
        %1096 = vrot.lane.b32.xlu0 %v1094, 118
        %v1097 = vpop.permute.xlu0 %1096
        %v1099 = vadd.f32 %v1066, %v1097
        %s1100 = sld [smem:[#allocation3 + $0x197]]
        %v1101 = vstv %s1100
        %v1102 = vmul.f32 %v1101, %v1075
        %1104 = vrot.lane.b32.xlu0 %v1102, 118
        %v1105 = vpop.permute.xlu0 %1104
        %v1107 = vadd.f32 %v1074, %v1105
        %v1108 = vmul.f32 %v927, %v545
        %s1109 = sld [smem:[#allocation3 + $0x18]]
        %v1110 = vstv %s1109
        %v1111 = vmul.f32 %v1110, %v1108
        %1113 = vrot.lane.b32.xlu0 %v1111, 112
        %v1114 = vpop.permute.xlu0 %1113
        %v1116 = vadd.f32 %v1083, %v1114
        %s1117 = sld [smem:[#allocation3 + $0x98]]
        %v1118 = vstv %s1117
        %v1119 = vmul.f32 %v1118, %v1108
        %1121 = vrot.lane.b32.xlu0 %v1119, 112
        %v1122 = vpop.permute.xlu0 %1121
        %v1124 = vadd.f32 %v1091, %v1122
        %s1125 = sld [smem:[#allocation3 + $0x118]]
        %v1126 = vstv %s1125
        %v1127 = vmul.f32 %v1126, %v1108
        %1129 = vrot.lane.b32.xlu0 %v1127, 112
        %v1130 = vpop.permute.xlu0 %1129
        %v1132 = vadd.f32 %v1099, %v1130
        %s1133 = sld [smem:[#allocation3 + $0x198]]
        %v1134 = vstv %s1133
        %v1135 = vmul.f32 %v1134, %v1108
        %1137 = vrot.lane.b32.xlu0 %v1135, 112
        %v1138 = vpop.permute.xlu0 %1137
        %v1140 = vadd.f32 %v1107, %v1138
        %s1141 = sld [smem:[#allocation3 + $0x19]]
        %v1142 = vstv %s1141
        %v1143 = vmul.f32 %v1142, %v927
        %1145 = vrot.lane.b32.xlu0 %v1143, 111
        %v1146 = vpop.permute.xlu0 %1145
        %v1148 = vadd.f32 %v1116, %v1146
        %s1149 = sld [smem:[#allocation3 + $0x99]]
        %v1150 = vstv %s1149
        %v1151 = vmul.f32 %v1150, %v927
        %1153 = vrot.lane.b32.xlu0 %v1151, 111
        %v1154 = vpop.permute.xlu0 %1153
        %v1156 = vadd.f32 %v1124, %v1154
        %s1157 = sld [smem:[#allocation3 + $0x119]]
        %v1158 = vstv %s1157
        %v1159 = vmul.f32 %v1158, %v927
        %1161 = vrot.lane.b32.xlu0 %v1159, 111
        %v1162 = vpop.permute.xlu0 %1161
        %v1164 = vadd.f32 %v1132, %v1162
        %s1165 = sld [smem:[#allocation3 + $0x199]]
        %v1166 = vstv %s1165
        %v1167 = vmul.f32 %v1166, %v927
        %1169 = vrot.lane.b32.xlu0 %v1167, 111
        %v1170 = vpop.permute.xlu0 %1169
        %v1172 = vadd.f32 %v1140, %v1170
        %v1173 = vmul.f32 %v927, %v613
        %s1174 = sld [smem:[#allocation3 + $0x1a]]
        %v1175 = vstv %s1174
        %v1176 = vmul.f32 %v1175, %v1173
        %1178 = vrot.lane.b32.xlu0 %v1176, 110
        %v1179 = vpop.permute.xlu0 %1178
        %v1181 = vadd.f32 %v1148, %v1179
        %s1182 = sld [smem:[#allocation3 + $0x9a]]
        %v1183 = vstv %s1182
        %v1184 = vmul.f32 %v1183, %v1173
        %1186 = vrot.lane.b32.xlu0 %v1184, 110
        %v1187 = vpop.permute.xlu0 %1186
        %v1189 = vadd.f32 %v1156, %v1187
        %s1190 = sld [smem:[#allocation3 + $0x11a]]
        %v1191 = vstv %s1190
        %v1192 = vmul.f32 %v1191, %v1173
        %1194 = vrot.lane.b32.xlu0 %v1192, 110
        %v1195 = vpop.permute.xlu0 %1194
        %v1197 = vadd.f32 %v1164, %v1195
        %s1198 = sld [smem:[#allocation3 + $0x19a]]
        %v1199 = vstv %s1198
        %v1200 = vmul.f32 %v1199, %v1173
        %1202 = vrot.lane.b32.xlu0 %v1200, 110
        %v1203 = vpop.permute.xlu0 %1202
        %v1205 = vadd.f32 %v1172, %v1203
        %vm1206 = vcmask 523264
        %1207 = vst.msk [vmem:[%s306] sm:$0xff] %vm1206, %v1181
        %v1208 = vsel %vm1206, %v1181, 0.0
        %1209 = vadd.xlane.f32.xlu0 %v1208
        %v1210 = vpop.xlane.xlu0 %1209
        %v1211 = vrot.slane %v1210, 4
        %v1212 = vadd.f32 %v1210, %v1211
        %v1213 = vrot.slane %v1212, 2
        %v1214 = vadd.f32 %v1212, %v1213
        %v1215 = vrot.slane %v1214, 1
        %v1216 = vadd.f32 %v1214, %v1215
        %s1217 = vtos %v1216
        %s1218 = smul.f32 %s1217, 0.001953125
        %v1219 = vstv %s1218
        %v1220 = vsub.f32 %v1181, %v1219
        %v1221 = vmul.f32 %v1220, %v1220
        %v1222 = vsel %vm1206, %v1221, 0.0
        %1223 = vadd.xlane.f32.xlu0 %v1222
        %v1224 = vpop.xlane.xlu0 %1223
        %v1225 = vrot.slane %v1224, 4
        %v1226 = vadd.f32 %v1224, %v1225
        %v1227 = vrot.slane %v1226, 2
        %v1228 = vadd.f32 %v1226, %v1227
        %v1229 = vrot.slane %v1228, 1
        %v1230 = vadd.f32 %v1228, %v1229
        %s1231 = vtos %v1230
        %s1232 = scalar_lea.vmem %s306, 8
        %1233 = vst.msk [vmem:[%s1232] sm:$0xff] %vm1206, %v1189
        %v1234 = vsel %vm1206, %v1189, 0.0
        %1235 = vadd.xlane.f32.xlu0 %v1234
        %v1236 = vpop.xlane.xlu0 %1235
        %v1237 = vrot.slane %v1236, 4
        %v1238 = vadd.f32 %v1236, %v1237
        %v1239 = vrot.slane %v1238, 2
        %v1240 = vadd.f32 %v1238, %v1239
        %v1241 = vrot.slane %v1240, 1
        %v1242 = vadd.f32 %v1240, %v1241
        %s1243 = vtos %v1242
        %s1244 = smul.f32 %s1243, 0.001953125
        %v1245 = vstv %s1244
        %v1246 = vsub.f32 %v1189, %v1245
        %v1247 = vmul.f32 %v1246, %v1246
        %v1248 = vsel %vm1206, %v1247, 0.0
        %1249 = vadd.xlane.f32.xlu0 %v1248
        %v1250 = vpop.xlane.xlu0 %1249
        %v1251 = vrot.slane %v1250, 4
        %v1252 = vadd.f32 %v1250, %v1251
        %v1253 = vrot.slane %v1252, 2
        %v1254 = vadd.f32 %v1252, %v1253
        %v1255 = vrot.slane %v1254, 1
        %v1256 = vadd.f32 %v1254, %v1255
        %s1257 = vtos %v1256
        %s1258 = scalar_lea.vmem %s306, 16
        %1259 = vst.msk [vmem:[%s1258] sm:$0xff] %vm1206, %v1197
        %v1260 = vsel %vm1206, %v1197, 0.0
        %1261 = vadd.xlane.f32.xlu0 %v1260
        %v1262 = vpop.xlane.xlu0 %1261
        %v1263 = vrot.slane %v1262, 4
        %v1264 = vadd.f32 %v1262, %v1263
        %v1265 = vrot.slane %v1264, 2
        %v1266 = vadd.f32 %v1264, %v1265
        %v1267 = vrot.slane %v1266, 1
        %v1268 = vadd.f32 %v1266, %v1267
        %s1269 = vtos %v1268
        %s1270 = smul.f32 %s1269, 0.001953125
        %v1271 = vstv %s1270
        %v1272 = vsub.f32 %v1197, %v1271
        %v1273 = vmul.f32 %v1272, %v1272
        %v1274 = vsel %vm1206, %v1273, 0.0
        %1275 = vadd.xlane.f32.xlu0 %v1274
        %v1276 = vpop.xlane.xlu0 %1275
        %v1277 = vrot.slane %v1276, 4
        %v1278 = vadd.f32 %v1276, %v1277
        %v1279 = vrot.slane %v1278, 2
        %v1280 = vadd.f32 %v1278, %v1279
        %v1281 = vrot.slane %v1280, 1
        %v1282 = vadd.f32 %v1280, %v1281
        %s1283 = vtos %v1282
        %s1284 = scalar_lea.vmem %s306, 24
        %1285 = vst.msk [vmem:[%s1284] sm:$0xff] %vm1206, %v1205
        %v1286 = vsel %vm1206, %v1205, 0.0
        %1287 = vadd.xlane.f32.xlu0 %v1286
        %v1288 = vpop.xlane.xlu0 %1287
        %v1289 = vrot.slane %v1288, 4
        %v1290 = vadd.f32 %v1288, %v1289
        %v1291 = vrot.slane %v1290, 2
        %v1292 = vadd.f32 %v1290, %v1291
        %v1293 = vrot.slane %v1292, 1
        %v1294 = vadd.f32 %v1292, %v1293
        %s1295 = vtos %v1294
        %s1296 = smul.f32 %s1295, 0.001953125
        %v1297 = vstv %s1296
        %v1298 = vsub.f32 %v1205, %v1297
        %v1299 = vmul.f32 %v1298, %v1298
        %v1300 = vsel %vm1206, %v1299, 0.0
        %1301 = vadd.xlane.f32.xlu0 %v1300
        %v1302 = vpop.xlane.xlu0 %1301
        %v1303 = vrot.slane %v1302, 4
        %v1304 = vadd.f32 %v1302, %v1303
        %v1305 = vrot.slane %v1304, 2
        %v1306 = vadd.f32 %v1304, %v1305
        %v1307 = vrot.slane %v1306, 1
        %v1308 = vadd.f32 %v1306, %v1307
        %s1309 = vtos %v1308
        %v1310 = vlaneseq
        %v1311 = vshrl.u32 %v1310, 7
        %v1312 = vlaneseq
        %v1313 = vand.u32 %v1312, 127
        %vm1314 = vcmp.eq.s32.totalorder %v1311, 0
        %vm1315 = vcmp.eq.s32.totalorder %v1313, 0
        %vm1316 = vmand %vm1314, %vm1315
        %v1317 = vstv %s1217
        %v1318 = vsel %vm1316, %v1317, 0.0
        %vm1319 = vcmp.eq.s32.totalorder %v1311, 1
        %vm1320 = vmand %vm1319, %vm1315
        %v1321 = vstv %s1231
        %v1322 = vsel %vm1320, %v1321, %v1318
        %vm1323 = vcmp.eq.s32.totalorder %v1313, 1
        %vm1324 = vmand %vm1314, %vm1323
        %v1325 = vstv %s1243
        %v1326 = vsel %vm1324, %v1325, %v1322
        %vm1327 = vmand %vm1319, %vm1323
        %v1328 = vstv %s1257
        %v1329 = vsel %vm1327, %v1328, %v1326
        %vm1330 = vcmp.eq.s32.totalorder %v1313, 2
        %vm1331 = vmand %vm1314, %vm1330
        %v1332 = vstv %s1269
        %v1333 = vsel %vm1331, %v1332, %v1329
        %vm1334 = vmand %vm1319, %vm1330
        %v1335 = vstv %s1283
        %v1336 = vsel %vm1334, %v1335, %v1333
        %vm1337 = vcmp.eq.s32.totalorder %v1313, 3
        %vm1338 = vmand %vm1314, %vm1337
        %v1339 = vstv %s1295
        %v1340 = vsel %vm1338, %v1339, %v1336
        %vm1341 = vmand %vm1319, %vm1337
        %v1342 = vstv %s1309
        %v1343 = vsel %vm1341, %v1342, %v1340
        %1344 = vst [vmem:[%s313] sm:$0xff] %v1343
        %p1345 = scmp.lt.s32.totalorder %s22, 1
        %s1346 = scalar_select %p1345, %s22, 1
        %p1347 = scmp.lt.s32.totalorder %s23, 0
        %s1348 = scalar_select %p1347, %s23, 0
        %s1349 = smul.addr %s1346, 4
        %s1350 = sadd.s32 %s1348, %s1349
        %s1351 = smul.addr %s1350, 8
        %s1352 = scalar_lea.vmem %s4, %s1351
        %p1353 = scmp.lt.s32.totalorder %s22, 1
        %s1354 = scalar_select %p1353, %s22, 1
        %p1355 = scmp.lt.s32.totalorder %s23, 0
        %s1356 = scalar_select %p1355, %s23, 0
        %s1357 = sadd.s32 %s1356, %s1354
        %s1358 = smul.addr %s1357, 8
        %s1359 = scalar_lea.vmem %s5, %s1358
        // Predicated region
        $region41: #{attention_module.2} parent=35 // pred_check
          %p1360 = pneg %p148
        $region42: #{attention_module.2} parent=35 // pred_check_branch
          %1362 = sbr.rel (%p1360) target = $region44
        $region43: #{attention_module.2} parent=35 // pred_region
          _
        $region44: #{attention_module.2} parent=35 // pred_fallthru
          _
        // Predicated region
        $region45: #{attention_module.2} parent=35 // pred_check
          %p1363 = pneg %p176
        $region46: #{attention_module.2} parent=35 // pred_check_branch
          %1365 = sbr.rel (%p1363) target = $region48
        $region47: #{attention_module.2} parent=35 // pred_region
          _
        $region48: #{attention_module.2} parent=35 // pred_fallthru
          _
      $region36: #{attention_module.2} parent=5 // pred_fallthru
        _
      %p1366 = scmp.le.s32.totalorder 2, %s13
      // Predicated region
      $region49: #{attention_module.2} parent=5 // pred_check
        %p1367 = pneg %p1366
      $region50: #{attention_module.2} parent=5 // pred_check_branch
        %1369 = sbr.rel (%p1367) target = $region52
      $region51: #{attention_module.2} parent=5 // pred_region
        %s1370 = ssub.s32 %s13, 2
        // Predicated region
        $region53: #{attention_module.2} parent=51 // pred_check
          %p1371 = pneg %p154
        $region54: #{attention_module.2} parent=51 // pred_check_branch
          %1373 = sbr.rel (%p1371) target = $region56
        $region55: #{attention_module.2} parent=51 // pred_region
          %p1374 = scmp.lt.s32.totalorder %s24, 1
          %s1375 = scalar_select %p1374, %s24, 1
          %p1376 = scmp.lt.s32.totalorder %s25, 0
          %s1377 = scalar_select %p1376, %s25, 0
          %s1378 = smul.addr %s1375, 4
          %s1379 = sadd.s32 %s1377, %s1378
          %s1380 = smul.addr %s1379, 8
          %s1381 = scalar_lea.vmem %s4, %s1380
        $region56: #{attention_module.2} parent=51 // pred_fallthru
          _
        // Predicated region
        $region57: #{attention_module.2} parent=51 // pred_check
          %p1382 = pneg %p182
        $region58: #{attention_module.2} parent=51 // pred_check_branch
          %1384 = sbr.rel (%p1382) target = $region60
        $region59: #{attention_module.2} parent=51 // pred_region
          %p1385 = scmp.lt.s32.totalorder %s24, 1
          %s1386 = scalar_select %p1385, %s24, 1
          %p1387 = scmp.lt.s32.totalorder %s25, 0
          %s1388 = scalar_select %p1387, %s25, 0
          %s1389 = sadd.s32 %s1388, %s1386
          %s1390 = smul.addr %s1389, 8
          %s1391 = scalar_lea.vmem %s5, %s1390
        $region60: #{attention_module.2} parent=51 // pred_fallthru
          _
      $region52: #{attention_module.2} parent=5 // pred_fallthru
        _
    $region6: #{attention_module.2} parent=1 // loop_footer
      %s17 = sadd.s32 1, %s13
    $region7: #{attention_module.2} parent=1 // loop_footer_branch
      %12 = sbr.rel target = $region3
    $region8: #{attention_module.2} parent=1 // loop_exit
      _
    %1392 = vsyncpa [#allocation4], 1
    %s1393 = scalar_lea.sflag [#allocation4], 1
    %1394 = vsyncpa %s1393, 1

</llo_original>
